<compile_context>
chip_gen: v5e
topology: v5e:2x2
jax: 0.10.0
libtpu: 0.0.40
codegen_flags: <defaults>
</compile_context>

<pallas_src>
import jax
import jax.numpy as jnp
from jax.experimental import pallas as pl
from jax.experimental.pallas import tpu as pltpu

# Logical and lane-padded layer widths.
D_IN = 32 * 32 * 3            # 3072 (already a multiple of 128)
H1, H1P = 500, 512
H2, H2P = 200, 256
D_OUT, D_OUTP = 10, 128

TB_MAX = 512                  # max batch-tile rows (f32 x tile: 6 MiB, 2x buffered)


def _round_up(x, m):
    return ((x + m - 1) // m) * m


def _pad_to(a, shape):
    return jnp.pad(a, [(0, t - s) for s, t in zip(a.shape, shape)])


# --------------------------------------------------------------------------- #
# Kernel body: fused fc1 -> relu -> fc2 -> relu -> fc3 on one batch tile.
# --------------------------------------------------------------------------- #
def fcnn_kernel(x_ref, w1_ref, b1_ref, w2_ref, b2_ref, w3_ref, b3_ref, o_ref):
    # In-kernel bf16 cast of the f32 x tile (halves x HBM traffic vs. a
    # separate host-side cast; the cast itself hides under the MXU).
    x = x_ref[...].astype(jnp.bfloat16)
    # fc1: (TB, 3072) bf16 @ (3072, 512) bf16 -> f32 accumulate on the MXU.
    h = jnp.dot(x, w1_ref[...], preferred_element_type=jnp.float32)
    h = h + b1_ref[...]                                   # (TB, 512) + (1, 512)
    # fc2(relu(h))
    h = jnp.maximum(h, 0.0).astype(jnp.bfloat16)
    h = jnp.dot(h, w2_ref[...], preferred_element_type=jnp.float32)
    h = h + b2_ref[...]                                   # (TB, 256) + (1, 256)
    # fc3(relu(h))
    h = jnp.maximum(h, 0.0).astype(jnp.bfloat16)
    h = jnp.dot(h, w3_ref[...], preferred_element_type=jnp.float32)
    h = h + b3_ref[...]                                   # (TB, 128) + (1, 128)
    o_ref[...] = h.astype(o_ref.dtype)                    # lane-dense f32 store


# --------------------------------------------------------------------------- #
# One-time parameter prep (call at init / checkpoint load, then reuse).
# --------------------------------------------------------------------------- #
def prepare_params(w1, b1, w2, b2, w3, b3):
    """Lane-pad and bf16-cast the weights once; biases stay f32 (padded)."""
    w1_p = _pad_to(w1, (D_IN, H1P)).astype(jnp.bfloat16)
    w2_p = _pad_to(w2, (H1P, H2P)).astype(jnp.bfloat16)
    w3_p = _pad_to(w3, (H2P, D_OUTP)).astype(jnp.bfloat16)
    b1_p = _pad_to(b1.reshape(1, -1), (1, H1P)).astype(jnp.float32)
    b2_p = _pad_to(b2.reshape(1, -1), (1, H2P)).astype(jnp.float32)
    b3_p = _pad_to(b3.reshape(1, -1), (1, D_OUTP)).astype(jnp.float32)
    return (w1_p, b1_p, w2_p, b2_p, w3_p, b3_p)


def _choose_tiling(B):
    """Pick (TB, B_pad): TB multiple of 16, <= TB_MAX, minimal tail padding,
    and >= 2 tiles when B >= 32 so both v7x TensorCores get work."""
    n_tiles = pl.cdiv(B, TB_MAX)
    if B >= 32:
        n_tiles = max(n_tiles, 2)
    TB = _round_up(pl.cdiv(B, n_tiles), 16)   # 16: bf16 sublane packing
    B_pad = _round_up(B, TB)
    return TB, B_pad


# --------------------------------------------------------------------------- #
# Forward pass. `prepared` comes from prepare_params() (computed once).
# --------------------------------------------------------------------------- #
@jax.jit
def fcnn_forward(x, prepared):
    w1_p, b1_p, w2_p, b2_p, w3_p, b3_p = prepared
    B = x.shape[0]
    x_flat = x.reshape(B, -1)                 # (B, 3072) f32, same order as torch .view

    TB, B_pad = _choose_tiling(B)
    x_p = _pad_to(x_flat, (B_pad, D_IN))      # stays f32; bf16 cast is in-kernel

    grid = (B_pad // TB,)

    def resident(shape):  # whole array stays in VMEM across all batch tiles
        return pl.BlockSpec(shape, lambda i: (0, 0))

    in_specs = [
        pl.BlockSpec((TB, D_IN), lambda i: (i, 0)),       # x: pipelined batch tiles
        resident(w1_p.shape), resident(b1_p.shape),
        resident(w2_p.shape), resident(b2_p.shape),
        resident(w3_p.shape), resident(b3_p.shape),
    ]
    out_spec = pl.BlockSpec((TB, D_OUTP), lambda i: (i, 0))

    out_padded = pl.pallas_call(
        fcnn_kernel,
        out_shape=jax.ShapeDtypeStruct((B_pad, D_OUTP), jnp.float32),
        grid=grid,
        in_specs=in_specs,
        out_specs=out_spec,
        compiler_params=pltpu.CompilerParams(
            dimension_semantics=("parallel",),   # megacore / v7x: split batch tiles
            vmem_limit_bytes=48 << 20,           # ~23 MiB actually used at TB=512
        ),
    )(x_p, w1_p, b1_p, w2_p, b2_p, w3_p, b3_p)

    return out_padded[:B, :D_OUT]              # slice fuses inside this jit


# --------------------------------------------------------------------------- #
# Deterministic init + references.
# --------------------------------------------------------------------------- #
def init_params(key):
    # nn.Linear-shaped params stored as (in, out) so the kernel does x @ W + b.
    dims = [(D_IN, H1), (H1, H2), (H2, D_OUT)]
    params = []
    for i, (d_in, d_out) in enumerate(dims):
        kw, kb, key = jax.random.split(jax.random.fold_in(key, i), 3)
        bound = 1.0 / jnp.sqrt(d_in)
        w = jax.random.uniform(kw, (d_in, d_out), jnp.float32, -bound, bound)
        b = jax.random.uniform(kb, (1, d_out), jnp.float32, -bound, bound)
        params += [w, b]
    return params


def fcnn_reference_f32(x, w1, b1, w2, b2, w3, b3):
    h = x.reshape(x.shape[0], -1) @ w1 + b1
    h = jnp.maximum(h, 0.0) @ w2 + b2
    h = jnp.maximum(h, 0.0) @ w3 + b3
    return h


def fcnn_reference_bf16(x, w1, b1, w2, b2, w3, b3):
    # Mirrors the kernel's bf16-operand / f32-accumulate numerics.
    dot = lambda a, b: jnp.dot(a.astype(jnp.bfloat16), b.astype(jnp.bfloat16),
                               preferred_element_type=jnp.float32)
    h = dot(x.reshape(x.shape[0], -1), w1) + b1
    h = dot(jnp.maximum(h, 0.0), w2) + b2
    h = dot(jnp.maximum(h, 0.0), w3) + b3
    return h


if __name__ == "__main__":
    key = jax.random.PRNGKey(0)
    kx, kp = jax.random.split(key)
    w1, b1, w2, b2, w3, b3 = init_params(kp)

    # Weight prep happens ONCE (init time), not per forward call.
    prepared = prepare_params(w1, b1, w2, b2, w3, b3)

    # Primary check: small batch, single tile (B=2 -> TB=16, grid=1).
    x = jax.random.normal(kx, (2, 3, 32, 32), jnp.float32)
    out = jax.block_until_ready(fcnn_forward(x, prepared))
    assert out.shape == (2, 10)

    ref_bf16 = fcnn_reference_bf16(x, w1, b1, w2, b2, w3, b3)
    assert jnp.allclose(out, ref_bf16, atol=2e-3, rtol=2e-3), \
        float(jnp.max(jnp.abs(out - ref_bf16)))
    ref_f32 = fcnn_reference_f32(x, w1, b1, w2, b2, w3, b3)
    assert jnp.allclose(out, ref_f32, atol=5e-2, rtol=5e-2), \
        float(jnp.max(jnp.abs(out - ref_f32)))

    # Secondary check: multi-tile grid + batch-tail padding (B=40 -> TB=32, grid=2).
    x2 = jax.random.normal(jax.random.fold_in(kx, 1), (40, 3, 32, 32), jnp.float32)
    out2 = jax.block_until_ready(fcnn_forward(x2, prepared))
    ref2 = fcnn_reference_bf16(x2, w1, b1, w2, b2, w3, b3)
    assert out2.shape == (40, 10)
    assert jnp.allclose(out2, ref2, atol=2e-3, rtol=2e-3), \
        float(jnp.max(jnp.abs(out2 - ref2)))

    print("KERNEL_OK")
</pallas_src>

<mosaic_0001>
module attributes {stable_mosaic.version = 11 : i64} {
  func.func @fcnn_kernel(%arg0: i32, %arg1: memref<16x3072xf32, #tpu.memory_space<vmem>>, %arg2: memref<3072x512xbf16, #tpu.memory_space<vmem>>, %arg3: memref<1x512xf32, #tpu.memory_space<vmem>>, %arg4: memref<512x256xbf16, #tpu.memory_space<vmem>>, %arg5: memref<1x256xf32, #tpu.memory_space<vmem>>, %arg6: memref<256x128xbf16, #tpu.memory_space<vmem>>, %arg7: memref<1x128xf32, #tpu.memory_space<vmem>>, %arg8: memref<16x128xf32, #tpu.memory_space<vmem>>) attributes {dimension_semantics = [#tpu.dimension_semantics<parallel>], iteration_bounds = array<i64: 1>, scalar_prefetch = 0 : i64, scratch_operands = 0 : i64, tpu.core_type = #tpu.core_type<tc>, window_params = [{transform_indices = @transform_0, window_bounds = array<i64: 16, 3072>}, {pipeline_mode = #tpu.pipeline_mode<synchronous>, transform_indices = @transform_1, window_bounds = array<i64: 3072, 512>}, {pipeline_mode = #tpu.pipeline_mode<synchronous>, transform_indices = @transform_2, window_bounds = array<i64: 1, 512>}, {pipeline_mode = #tpu.pipeline_mode<synchronous>, transform_indices = @transform_3, window_bounds = array<i64: 512, 256>}, {pipeline_mode = #tpu.pipeline_mode<synchronous>, transform_indices = @transform_4, window_bounds = array<i64: 1, 256>}, {pipeline_mode = #tpu.pipeline_mode<synchronous>, transform_indices = @transform_5, window_bounds = array<i64: 256, 128>}, {pipeline_mode = #tpu.pipeline_mode<synchronous>, transform_indices = @transform_6, window_bounds = array<i64: 1, 128>}, {transform_indices = @transform_7, window_bounds = array<i64: 16, 128>}]} {
    %c0 = arith.constant 0 : index
    %c0_0 = arith.constant 0 : index
    %0 = vector.load %arg1[%c0, %c0_0] : memref<16x3072xf32, #tpu.memory_space<vmem>>, vector<16x3072xf32>
    %1 = arith.truncf %0 : vector<16x3072xf32> to vector<16x3072xbf16>
    %c0_1 = arith.constant 0 : index
    %c0_2 = arith.constant 0 : index
    %2 = vector.load %arg2[%c0_1, %c0_2] : memref<3072x512xbf16, #tpu.memory_space<vmem>>, vector<3072x512xbf16>
    %cst = arith.constant dense<0.000000e+00> : vector<16x512xf32>
    %3 = tpu.matmul %1, %2, %cst {dimension_numbers = #tpu.dot_dimension_numbers<[1], [0], [0], [1], [0, 0, 1, 1], [], []>} : vector<16x3072xbf16>, vector<3072x512xbf16>, vector<16x512xf32> -> vector<16x512xf32>
    %c0_3 = arith.constant 0 : index
    %c0_4 = arith.constant 0 : index
    %4 = vector.load %arg3[%c0_3, %c0_4] : memref<1x512xf32, #tpu.memory_space<vmem>>, vector<1x512xf32>
    %5 = vector.broadcast %4 : vector<1x512xf32> to vector<16x512xf32>
    %6 = arith.addf %3, %5 : vector<16x512xf32>
    %cst_5 = arith.constant 0.000000e+00 : f32
    %7 = vector.broadcast %cst_5 : f32 to vector<16x512xf32>
    %8 = arith.maximumf %6, %7 : vector<16x512xf32>
    %9 = arith.truncf %8 : vector<16x512xf32> to vector<16x512xbf16>
    %c0_6 = arith.constant 0 : index
    %c0_7 = arith.constant 0 : index
    %10 = vector.load %arg4[%c0_6, %c0_7] : memref<512x256xbf16, #tpu.memory_space<vmem>>, vector<512x256xbf16>
    %cst_8 = arith.constant dense<0.000000e+00> : vector<16x256xf32>
    %11 = tpu.matmul %9, %10, %cst_8 {dimension_numbers = #tpu.dot_dimension_numbers<[1], [0], [0], [1], [0, 0, 1, 1], [], []>} : vector<16x512xbf16>, vector<512x256xbf16>, vector<16x256xf32> -> vector<16x256xf32>
    %c0_9 = arith.constant 0 : index
    %c0_10 = arith.constant 0 : index
    %12 = vector.load %arg5[%c0_9, %c0_10] : memref<1x256xf32, #tpu.memory_space<vmem>>, vector<1x256xf32>
    %13 = vector.broadcast %12 : vector<1x256xf32> to vector<16x256xf32>
    %14 = arith.addf %11, %13 : vector<16x256xf32>
    %cst_11 = arith.constant 0.000000e+00 : f32
    %15 = vector.broadcast %cst_11 : f32 to vector<16x256xf32>
    %16 = arith.maximumf %14, %15 : vector<16x256xf32>
    %17 = arith.truncf %16 : vector<16x256xf32> to vector<16x256xbf16>
    %c0_12 = arith.constant 0 : index
    %c0_13 = arith.constant 0 : index
    %18 = vector.load %arg6[%c0_12, %c0_13] : memref<256x128xbf16, #tpu.memory_space<vmem>>, vector<256x128xbf16>
    %cst_14 = arith.constant dense<0.000000e+00> : vector<16x128xf32>
    %19 = tpu.matmul %17, %18, %cst_14 {dimension_numbers = #tpu.dot_dimension_numbers<[1], [0], [0], [1], [0, 0, 1, 1], [], []>} : vector<16x256xbf16>, vector<256x128xbf16>, vector<16x128xf32> -> vector<16x128xf32>
    %c0_15 = arith.constant 0 : index
    %c0_16 = arith.constant 0 : index
    %20 = vector.load %arg7[%c0_15, %c0_16] : memref<1x128xf32, #tpu.memory_space<vmem>>, vector<1x128xf32>
    %21 = vector.broadcast %20 : vector<1x128xf32> to vector<16x128xf32>
    %22 = arith.addf %19, %21 : vector<16x128xf32>
    %c0_17 = arith.constant 0 : index
    %c0_18 = arith.constant 0 : index
    %23 = vector.load %arg8[%c0_17, %c0_18] : memref<16x128xf32, #tpu.memory_space<vmem>>, vector<16x128xf32>
    tpu.vector_store %arg8[%c0_17, %c0_18], %22 {strides = array<i32>} : memref<16x128xf32, #tpu.memory_space<vmem>>, vector<16x128xf32>,
    return
  }
  func.func @transform_0(%arg0: i32) -> (i32, i32) {
    %c0_i32 = arith.constant 0 : i32
    %c0_i32_0 = arith.constant 0 : i32
    return %arg0, %c0_i32 : i32, i32
  }
  func.func @transform_1(%arg0: i32) -> (i32, i32) {
    %c0_i32 = arith.constant 0 : i32
    %c0_i32_0 = arith.constant 0 : i32
    %c0_i32_1 = arith.constant 0 : i32
    return %c0_i32, %c0_i32_0 : i32, i32
  }
  func.func @transform_2(%arg0: i32) -> (i32, i32) {
    %c0_i32 = arith.constant 0 : i32
    %c0_i32_0 = arith.constant 0 : i32
    %c0_i32_1 = arith.constant 0 : i32
    return %c0_i32, %c0_i32_0 : i32, i32
  }
  func.func @transform_3(%arg0: i32) -> (i32, i32) {
    %c0_i32 = arith.constant 0 : i32
    %c0_i32_0 = arith.constant 0 : i32
    %c0_i32_1 = arith.constant 0 : i32
    return %c0_i32, %c0_i32_0 : i32, i32
  }
  func.func @transform_4(%arg0: i32) -> (i32, i32) {
    %c0_i32 = arith.constant 0 : i32
    %c0_i32_0 = arith.constant 0 : i32
    %c0_i32_1 = arith.constant 0 : i32
    return %c0_i32, %c0_i32_0 : i32, i32
  }
  func.func @transform_5(%arg0: i32) -> (i32, i32) {
    %c0_i32 = arith.constant 0 : i32
    %c0_i32_0 = arith.constant 0 : i32
    %c0_i32_1 = arith.constant 0 : i32
    return %c0_i32, %c0_i32_0 : i32, i32
  }
  func.func @transform_6(%arg0: i32) -> (i32, i32) {
    %c0_i32 = arith.constant 0 : i32
    %c0_i32_0 = arith.constant 0 : i32
    %c0_i32_1 = arith.constant 0 : i32
    return %c0_i32, %c0_i32_0 : i32, i32
  }
  func.func @transform_7(%arg0: i32) -> (i32, i32) {
    %c0_i32 = arith.constant 0 : i32
    %c0_i32_0 = arith.constant 0 : i32
    return %arg0, %c0_i32 : i32, i32
  }
}

</mosaic_0001>

<llo_original>
// kernel: fcnn_forward.1
$region0: #{fcnn_forward.1}
  #allocation0 [shape = 'u32[]', space=smem, size = 0x4, offset = 0x4, fixed_abs, tag = 'smem constant byte address 0x4 - core index']
  #allocation1 [shape = 'u32[72,128]{1,0:T(1,128)}', space=vmem, size = 0x9000, scoped, tag = 'internal scratch']
  %s0 = inlined_call_operand.vmem [shape: f32[16,3072], index: 0, kind: input, shape index: {}]
  %s1 = inlined_call_operand.hbm [shape: bf16[3072,512], index: 1, kind: input, shape index: {}]
  %s2 = inlined_call_operand.hbm [shape: f32[1,512], index: 2, kind: input, shape index: {}]
  %s3 = inlined_call_operand.hbm [shape: bf16[512,256], index: 3, kind: input, shape index: {}]
  %s4 = inlined_call_operand.hbm [shape: f32[1,256], index: 4, kind: input, shape index: {}]
  %s5 = inlined_call_operand.hbm [shape: bf16[256,128], index: 5, kind: input, shape index: {}]
  %s6 = inlined_call_operand.hbm [shape: f32[1,128], index: 6, kind: input, shape index: {}]
  %s7 = inlined_call_operand.vmem [shape: f32[16,128], index: 7, kind: output, shape index: {}]
  %s8 = sld [smem:[#allocation0]]
  $region62: #{fcnn_forward.1} parent=0
    _
  %s10 = ssub.s32 1, %s8
  %s11 = scalar_select 0, %s10, %s8
  $region1: #{fcnn_forward.1} parent=0
    #allocation2 [shape = 'u8[3145728]{0}', space=vmem, size = 0x300000, scoped, tag = 'input window, operand 1, single buffered']
    #allocation3 [shape = 's32[1]{0}', space=sflag, size = 0x4, scoped, tag = 'scoped memory for fcnn_forward.1']
    #allocation4 [shape = 'u8[2048]{0}', space=vmem, size = 0x800, scoped, tag = 'input window, operand 2, single buffered']
    #allocation5 [shape = 's32[1]{0}', space=sflag, size = 0x4, scoped, tag = 'scoped memory for fcnn_forward.1']
    #allocation6 [shape = 'u8[262144]{0}', space=vmem, size = 0x40000, scoped, tag = 'input window, operand 3, single buffered']
    #allocation7 [shape = 'u8[1024]{0}', space=vmem, size = 0x400, scoped, tag = 'input window, operand 4, single buffered']
    #allocation8 [shape = 's32[1]{0}', space=sflag, size = 0x4, scoped, tag = 'scoped memory for fcnn_forward.1']
    #allocation9 [shape = 'u8[65536]{0}', space=vmem, size = 0x10000, scoped, tag = 'input window, operand 5, single buffered']
    #allocation10 [shape = 'u8[512]{0}', space=vmem, size = 0x400, scoped, tag = 'input window, operand 6, single buffered']
    #allocation11 [shape = 's32[1]{0}', space=sflag, size = 0x4, scoped, tag = 'scoped memory for fcnn_forward.1']
    %12 = vsyncpa [#allocation3], 0
    %13 = vsyncpa [#allocation5], 0
    %14 = vsyncpa [#allocation8], 0
    %15 = vsyncpa [#allocation11], 0
    // Predicated region
    $region2: #{fcnn_forward.1} parent=1 // pred_check
      _
    $region3: #{fcnn_forward.1} parent=1 // pred_check_branch
      %17 = sbr.rel (0) target = $region5
    $region4: #{fcnn_forward.1} parent=1 // pred_region
      _
    $region5: #{fcnn_forward.1} parent=1 // pred_fallthru
      _
    // Predicated region
    $region6: #{fcnn_forward.1} parent=1 // pred_check
      _
    $region7: #{fcnn_forward.1} parent=1 // pred_check_branch
      %19 = sbr.rel (0) target = $region9
    $region8: #{fcnn_forward.1} parent=1 // pred_region
      %21 = vsyncadd [#allocation3], 0
      %s22 = sshll.u32 %s1, 4
      %s23 = int_to_ptr.hbm [resolvable:$true] %s22
      %s24 = sshll.u32 [#allocation2], 4
      %s25 = int_to_ptr.vmem [resolvable:$true] %s24
      %30 = dma.hbm_to_vmem [thread:$0]  %s23, 98304, %s25, [#allocation3], 256, 256, 16
    $region9: #{fcnn_forward.1} parent=1 // pred_fallthru
      _
    // Predicated region
    $region10: #{fcnn_forward.1} parent=1 // pred_check
      _
    $region11: #{fcnn_forward.1} parent=1 // pred_check_branch
      %32 = sbr.rel (0) target = $region13
    $region12: #{fcnn_forward.1} parent=1 // pred_region
      %34 = vsyncadd [#allocation5], 0
      %s36 = sshll.u32 %s2, 4
      %s37 = int_to_ptr.hbm [resolvable:$true] %s36
      %s38 = sshll.u32 [#allocation4], 4
      %s39 = int_to_ptr.vmem [resolvable:$true] %s38
      %41 = dma.hbm_to_vmem [thread:$0]  %s37, 64, %s39, [#allocation5]
    $region13: #{fcnn_forward.1} parent=1 // pred_fallthru
      _
    // Predicated region
    $region14: #{fcnn_forward.1} parent=1 // pred_check
      _
    $region15: #{fcnn_forward.1} parent=1 // pred_check_branch
      %43 = sbr.rel (0) target = $region17
    $region16: #{fcnn_forward.1} parent=1 // pred_region
      %45 = vsyncadd [#allocation5], 0
      %s46 = sshll.u32 %s3, 4
      %s47 = int_to_ptr.hbm [resolvable:$true] %s46
      %s48 = sshll.u32 [#allocation6], 4
      %s49 = int_to_ptr.vmem [resolvable:$true] %s48
      %54 = dma.hbm_to_vmem [thread:$0]  %s47, 8192, %s49, [#allocation5], 128, 128, 8
    $region17: #{fcnn_forward.1} parent=1 // pred_fallthru
      _
    // Predicated region
    $region18: #{fcnn_forward.1} parent=1 // pred_check
      _
    $region19: #{fcnn_forward.1} parent=1 // pred_check_branch
      %56 = sbr.rel (0) target = $region21
    $region20: #{fcnn_forward.1} parent=1 // pred_region
      %58 = vsyncadd [#allocation8], 0
      %s60 = sshll.u32 %s4, 4
      %s61 = int_to_ptr.hbm [resolvable:$true] %s60
      %s62 = sshll.u32 [#allocation7], 4
      %s63 = int_to_ptr.vmem [resolvable:$true] %s62
      %65 = dma.hbm_to_vmem [thread:$0]  %s61, 32, %s63, [#allocation8]
    $region21: #{fcnn_forward.1} parent=1 // pred_fallthru
      _
    // Predicated region
    $region22: #{fcnn_forward.1} parent=1 // pred_check
      _
    $region23: #{fcnn_forward.1} parent=1 // pred_check_branch
      %67 = sbr.rel (0) target = $region25
    $region24: #{fcnn_forward.1} parent=1 // pred_region
      %69 = vsyncadd [#allocation8], 0
      %s70 = sshll.u32 %s5, 4
      %s71 = int_to_ptr.hbm [resolvable:$true] %s70
      %s72 = sshll.u32 [#allocation9], 4
      %s73 = int_to_ptr.vmem [resolvable:$true] %s72
      %78 = dma.hbm_to_vmem [thread:$0]  %s71, 2048, %s73, [#allocation8], 64, 64, 4
    $region25: #{fcnn_forward.1} parent=1 // pred_fallthru
      _
    // Predicated region
    $region26: #{fcnn_forward.1} parent=1 // pred_check
      _
    $region27: #{fcnn_forward.1} parent=1 // pred_check_branch
      %80 = sbr.rel (0) target = $region29
    $region28: #{fcnn_forward.1} parent=1 // pred_region
      %82 = vsyncadd [#allocation11], 0
      %s84 = sshll.u32 %s6, 4
      %s85 = int_to_ptr.hbm [resolvable:$true] %s84
      %s86 = sshll.u32 [#allocation10], 4
      %s87 = int_to_ptr.vmem [resolvable:$true] %s86
      %89 = dma.hbm_to_vmem [thread:$0]  %s85, 16, %s87, [#allocation11]
    $region29: #{fcnn_forward.1} parent=1 // pred_fallthru
      _
    // Predicated region
    $region30: #{fcnn_forward.1} parent=1 // pred_check
      _
    $region31: #{fcnn_forward.1} parent=1 // pred_check_branch
      %91 = sbr.rel (0) target = $region33
    $region32: #{fcnn_forward.1} parent=1 // pred_region
      %93 = dma.done [#allocation3], 98304
    $region33: #{fcnn_forward.1} parent=1 // pred_fallthru
      _
    // Predicated region
    $region34: #{fcnn_forward.1} parent=1 // pred_check
      _
    $region35: #{fcnn_forward.1} parent=1 // pred_check_branch
      %95 = sbr.rel (0) target = $region37
    $region36: #{fcnn_forward.1} parent=1 // pred_region
      %97 = dma.done [#allocation5], 64
    $region37: #{fcnn_forward.1} parent=1 // pred_fallthru
      _
    // Predicated region
    $region38: #{fcnn_forward.1} parent=1 // pred_check
      _
    $region39: #{fcnn_forward.1} parent=1 // pred_check_branch
      %99 = sbr.rel (0) target = $region41
    $region40: #{fcnn_forward.1} parent=1 // pred_region
      %101 = dma.done [#allocation5], 8192
    $region41: #{fcnn_forward.1} parent=1 // pred_fallthru
      _
    // Predicated region
    $region42: #{fcnn_forward.1} parent=1 // pred_check
      _
    $region43: #{fcnn_forward.1} parent=1 // pred_check_branch
      %103 = sbr.rel (0) target = $region45
    $region44: #{fcnn_forward.1} parent=1 // pred_region
      %105 = dma.done [#allocation8], 32
    $region45: #{fcnn_forward.1} parent=1 // pred_fallthru
      _
    // Predicated region
    $region46: #{fcnn_forward.1} parent=1 // pred_check
      _
    $region47: #{fcnn_forward.1} parent=1 // pred_check_branch
      %107 = sbr.rel (0) target = $region49
    $region48: #{fcnn_forward.1} parent=1 // pred_region
      %109 = dma.done [#allocation8], 2048
    $region49: #{fcnn_forward.1} parent=1 // pred_fallthru
      _
    // Predicated region
    $region50: #{fcnn_forward.1} parent=1 // pred_check
      _
    $region51: #{fcnn_forward.1} parent=1 // pred_check_branch
      %111 = sbr.rel (0) target = $region53
    $region52: #{fcnn_forward.1} parent=1 // pred_region
      %113 = dma.done [#allocation11], 16
    $region53: #{fcnn_forward.1} parent=1 // pred_fallthru
      _
    %v114 = vld [vmem:[%s0] sm:$0xff]
    %v115 = vld [vmem:[%s0 + $0x8] sm:$0xff]
    %v116 = vld [vmem:[%s0 + $0x10] sm:$0xff]
    %v117 = vld [vmem:[%s0 + $0x18] sm:$0xff]
    %v118 = vld [vmem:[%s0 + $0x20] sm:$0xff]
    %v119 = vld [vmem:[%s0 + $0x28] sm:$0xff]
    %v120 = vld [vmem:[%s0 + $0x30] sm:$0xff]
    %v121 = vld [vmem:[%s0 + $0x38] sm:$0xff]
    %v122 = vld [vmem:[%s0 + $0x40] sm:$0xff]
    %v123 = vld [vmem:[%s0 + $0x48] sm:$0xff]
    %v124 = vld [vmem:[%s0 + $0x50] sm:$0xff]
    %v125 = vld [vmem:[%s0 + $0x58] sm:$0xff]
    %v126 = vld [vmem:[%s0 + $0x60] sm:$0xff]
    %v127 = vld [vmem:[%s0 + $0x68] sm:$0xff]
    %v128 = vld [vmem:[%s0 + $0x70] sm:$0xff]
    %v129 = vld [vmem:[%s0 + $0x78] sm:$0xff]
    %v130 = vld [vmem:[%s0 + $0x80] sm:$0xff]
    %v131 = vld [vmem:[%s0 + $0x88] sm:$0xff]
    %v132 = vld [vmem:[%s0 + $0x90] sm:$0xff]
    %v133 = vld [vmem:[%s0 + $0x98] sm:$0xff]
    %v134 = vld [vmem:[%s0 + $0xa0] sm:$0xff]
    %v135 = vld [vmem:[%s0 + $0xa8] sm:$0xff]
    %v136 = vld [vmem:[%s0 + $0xb0] sm:$0xff]
    %v137 = vld [vmem:[%s0 + $0xb8] sm:$0xff]
    %v138 = vld [vmem:[%s0 + $0xc0] sm:$0xff]
    %v139 = vld [vmem:[%s0 + $0xc8] sm:$0xff]
    %v140 = vld [vmem:[%s0 + $0xd0] sm:$0xff]
    %v141 = vld [vmem:[%s0 + $0xd8] sm:$0xff]
    %v142 = vld [vmem:[%s0 + $0xe0] sm:$0xff]
    %v143 = vld [vmem:[%s0 + $0xe8] sm:$0xff]
    %v144 = vld [vmem:[%s0 + $0xf0] sm:$0xff]
    %v145 = vld [vmem:[%s0 + $0xf8] sm:$0xff]
    %v146 = vld [vmem:[%s0 + $0x100] sm:$0xff]
    %v147 = vld [vmem:[%s0 + $0x108] sm:$0xff]
    %v148 = vld [vmem:[%s0 + $0x110] sm:$0xff]
    %v149 = vld [vmem:[%s0 + $0x118] sm:$0xff]
    %v150 = vld [vmem:[%s0 + $0x120] sm:$0xff]
    %v151 = vld [vmem:[%s0 + $0x128] sm:$0xff]
    %v152 = vld [vmem:[%s0 + $0x130] sm:$0xff]
    %v153 = vld [vmem:[%s0 + $0x138] sm:$0xff]
    %v154 = vld [vmem:[%s0 + $0x140] sm:$0xff]
    %v155 = vld [vmem:[%s0 + $0x148] sm:$0xff]
    %v156 = vld [vmem:[%s0 + $0x150] sm:$0xff]
    %v157 = vld [vmem:[%s0 + $0x158] sm:$0xff]
    %v158 = vld [vmem:[%s0 + $0x160] sm:$0xff]
    %v159 = vld [vmem:[%s0 + $0x168] sm:$0xff]
    %v160 = vld [vmem:[%s0 + $0x170] sm:$0xff]
    %v161 = vld [vmem:[%s0 + $0x178] sm:$0xff]
    %v162 = vpack.c.bf16 %v138, %v114
    %v163 = vpack.c.bf16 %v139, %v115
    %v164 = vpack.c.bf16 %v140, %v116
    %v165 = vpack.c.bf16 %v141, %v117
    %v166 = vpack.c.bf16 %v142, %v118
    %v167 = vpack.c.bf16 %v143, %v119
    %v168 = vpack.c.bf16 %v144, %v120
    %v169 = vpack.c.bf16 %v145, %v121
    %v170 = vpack.c.bf16 %v146, %v122
    %v171 = vpack.c.bf16 %v147, %v123
    %v172 = vpack.c.bf16 %v148, %v124
    %v173 = vpack.c.bf16 %v149, %v125
    %v174 = vpack.c.bf16 %v150, %v126
    %v175 = vpack.c.bf16 %v151, %v127
    %v176 = vpack.c.bf16 %v152, %v128
    %v177 = vpack.c.bf16 %v153, %v129
    %v178 = vpack.c.bf16 %v154, %v130
    %v179 = vpack.c.bf16 %v155, %v131
    %v180 = vpack.c.bf16 %v156, %v132
    %v181 = vpack.c.bf16 %v157, %v133
    %v182 = vpack.c.bf16 %v158, %v134
    %v183 = vpack.c.bf16 %v159, %v135
    %v184 = vpack.c.bf16 %v160, %v136
    %v185 = vpack.c.bf16 %v161, %v137
    %v186 = vld [vmem:[#allocation2] sm:$0xff]
    %v187 = vld [vmem:[#allocation2 + $0x8] sm:$0xff]
    %v188 = vld [vmem:[#allocation2 + $0x10] sm:$0xff]
    %v189 = vld [vmem:[#allocation2 + $0x18] sm:$0xff]
    %v190 = vld [vmem:[#allocation2 + $0x20] sm:$0xff]
    %v191 = vld [vmem:[#allocation2 + $0x28] sm:$0xff]
    %v192 = vld [vmem:[#allocation2 + $0x30] sm:$0xff]
    %v193 = vld [vmem:[#allocation2 + $0x38] sm:$0xff]
    %v194 = vld [vmem:[#allocation2 + $0x40] sm:$0xff]
    %v195 = vld [vmem:[#allocation2 + $0x48] sm:$0xff]
    %v196 = vld [vmem:[#allocation2 + $0x50] sm:$0xff]
    %v197 = vld [vmem:[#allocation2 + $0x58] sm:$0xff]
    %v198 = vld [vmem:[#allocation2 + $0x60] sm:$0xff]
    %v199 = vld [vmem:[#allocation2 + $0x68] sm:$0xff]
    %v200 = vld [vmem:[#allocation2 + $0x70] sm:$0xff]
    %v201 = vld [vmem:[#allocation2 + $0x78] sm:$0xff]
    %v202 = vld [vmem:[#allocation2 + $0x80] sm:$0xff]
    %v203 = vld [vmem:[#allocation2 + $0x88] sm:$0xff]
    %v204 = vld [vmem:[#allocation2 + $0x90] sm:$0xff]
    %v205 = vld [vmem:[#allocation2 + $0x98] sm:$0xff]
    %v206 = vld [vmem:[#allocation2 + $0xa0] sm:$0xff]
    %v207 = vld [vmem:[#allocation2 + $0xa8] sm:$0xff]
    %v208 = vld [vmem:[#allocation2 + $0xb0] sm:$0xff]
    %v209 = vld [vmem:[#allocation2 + $0xb8] sm:$0xff]
    %v210 = vld [vmem:[#allocation2 + $0xc0] sm:$0xff]
    %v211 = vld [vmem:[#allocation2 + $0xc8] sm:$0xff]
    %v212 = vld [vmem:[#allocation2 + $0xd0] sm:$0xff]
    %v213 = vld [vmem:[#allocation2 + $0xd8] sm:$0xff]
    %v214 = vld [vmem:[#allocation2 + $0xe0] sm:$0xff]
    %v215 = vld [vmem:[#allocation2 + $0xe8] sm:$0xff]
    %v216 = vld [vmem:[#allocation2 + $0xf0] sm:$0xff]
    %v217 = vld [vmem:[#allocation2 + $0xf8] sm:$0xff]
    %v218 = vld [vmem:[#allocation2 + $0x100] sm:$0xff]
    %v219 = vld [vmem:[#allocation2 + $0x108] sm:$0xff]
    %v220 = vld [vmem:[#allocation2 + $0x110] sm:$0xff]
    %v221 = vld [vmem:[#allocation2 + $0x118] sm:$0xff]
    %v222 = vld [vmem:[#allocation2 + $0x120] sm:$0xff]
    %v223 = vld [vmem:[#allocation2 + $0x128] sm:$0xff]
    %v224 = vld [vmem:[#allocation2 + $0x130] sm:$0xff]
    %v225 = vld [vmem:[#allocation2 + $0x138] sm:$0xff]
    %v226 = vld [vmem:[#allocation2 + $0x140] sm:$0xff]
    %v227 = vld [vmem:[#allocation2 + $0x148] sm:$0xff]
    %v228 = vld [vmem:[#allocation2 + $0x150] sm:$0xff]
    %v229 = vld [vmem:[#allocation2 + $0x158] sm:$0xff]
    %v230 = vld [vmem:[#allocation2 + $0x160] sm:$0xff]
    %v231 = vld [vmem:[#allocation2 + $0x168] sm:$0xff]
    %v232 = vld [vmem:[#allocation2 + $0x170] sm:$0xff]
    %v233 = vld [vmem:[#allocation2 + $0x178] sm:$0xff]
    %v234 = vld [vmem:[#allocation2 + $0x180] sm:$0xff]
    %v235 = vld [vmem:[#allocation2 + $0x188] sm:$0xff]
    %v236 = vld [vmem:[#allocation2 + $0x190] sm:$0xff]
    %v237 = vld [vmem:[#allocation2 + $0x198] sm:$0xff]
    %v238 = vld [vmem:[#allocation2 + $0x1a0] sm:$0xff]
    %v239 = vld [vmem:[#allocation2 + $0x1a8] sm:$0xff]
    %v240 = vld [vmem:[#allocation2 + $0x1b0] sm:$0xff]
    %v241 = vld [vmem:[#allocation2 + $0x1b8] sm:$0xff]
    %v242 = vld [vmem:[#allocation2 + $0x1c0] sm:$0xff]
    %v243 = vld [vmem:[#allocation2 + $0x1c8] sm:$0xff]
    %v244 = vld [vmem:[#allocation2 + $0x1d0] sm:$0xff]
    %v245 = vld [vmem:[#allocation2 + $0x1d8] sm:$0xff]
    %v246 = vld [vmem:[#allocation2 + $0x1e0] sm:$0xff]
    %v247 = vld [vmem:[#allocation2 + $0x1e8] sm:$0xff]
    %v248 = vld [vmem:[#allocation2 + $0x1f0] sm:$0xff]
    %v249 = vld [vmem:[#allocation2 + $0x1f8] sm:$0xff]
    %v250 = vld [vmem:[#allocation2 + $0x200] sm:$0xff]
    %v251 = vld [vmem:[#allocation2 + $0x208] sm:$0xff]
    %v252 = vld [vmem:[#allocation2 + $0x210] sm:$0xff]
    %v253 = vld [vmem:[#allocation2 + $0x218] sm:$0xff]
    %v254 = vld [vmem:[#allocation2 + $0x220] sm:$0xff]
    %v255 = vld [vmem:[#allocation2 + $0x228] sm:$0xff]
    %v256 = vld [vmem:[#allocation2 + $0x230] sm:$0xff]
    %v257 = vld [vmem:[#allocation2 + $0x238] sm:$0xff]
    %v258 = vld [vmem:[#allocation2 + $0x240] sm:$0xff]
    %v259 = vld [vmem:[#allocation2 + $0x248] sm:$0xff]
    %v260 = vld [vmem:[#allocation2 + $0x250] sm:$0xff]
    %v261 = vld [vmem:[#allocation2 + $0x258] sm:$0xff]
    %v262 = vld [vmem:[#allocation2 + $0x260] sm:$0xff]
    %v263 = vld [vmem:[#allocation2 + $0x268] sm:$0xff]
    %v264 = vld [vmem:[#allocation2 + $0x270] sm:$0xff]
    %v265 = vld [vmem:[#allocation2 + $0x278] sm:$0xff]
    %v266 = vld [vmem:[#allocation2 + $0x280] sm:$0xff]
    %v267 = vld [vmem:[#allocation2 + $0x288] sm:$0xff]
    %v268 = vld [vmem:[#allocation2 + $0x290] sm:$0xff]
    %v269 = vld [vmem:[#allocation2 + $0x298] sm:$0xff]
    %v270 = vld [vmem:[#allocation2 + $0x2a0] sm:$0xff]
    %v271 = vld [vmem:[#allocation2 + $0x2a8] sm:$0xff]
    %v272 = vld [vmem:[#allocation2 + $0x2b0] sm:$0xff]
    %v273 = vld [vmem:[#allocation2 + $0x2b8] sm:$0xff]
    %v274 = vld [vmem:[#allocation2 + $0x2c0] sm:$0xff]
    %v275 = vld [vmem:[#allocation2 + $0x2c8] sm:$0xff]
    %v276 = vld [vmem:[#allocation2 + $0x2d0] sm:$0xff]
    %v277 = vld [vmem:[#allocation2 + $0x2d8] sm:$0xff]
    %v278 = vld [vmem:[#allocation2 + $0x2e0] sm:$0xff]
    %v279 = vld [vmem:[#allocation2 + $0x2e8] sm:$0xff]
    %v280 = vld [vmem:[#allocation2 + $0x2f0] sm:$0xff]
    %v281 = vld [vmem:[#allocation2 + $0x2f8] sm:$0xff]
    %v282 = vld [vmem:[#allocation2 + $0x300] sm:$0xff]
    %v283 = vld [vmem:[#allocation2 + $0x308] sm:$0xff]
    %v284 = vld [vmem:[#allocation2 + $0x310] sm:$0xff]
    %v285 = vld [vmem:[#allocation2 + $0x318] sm:$0xff]
    %v286 = vld [vmem:[#allocation2 + $0x320] sm:$0xff]
    %v287 = vld [vmem:[#allocation2 + $0x328] sm:$0xff]
    %v288 = vld [vmem:[#allocation2 + $0x330] sm:$0xff]
    %v289 = vld [vmem:[#allocation2 + $0x338] sm:$0xff]
    %v290 = vld [vmem:[#allocation2 + $0x340] sm:$0xff]
    %v291 = vld [vmem:[#allocation2 + $0x348] sm:$0xff]
    %v292 = vld [vmem:[#allocation2 + $0x350] sm:$0xff]
    %v293 = vld [vmem:[#allocation2 + $0x358] sm:$0xff]
    %v294 = vld [vmem:[#allocation2 + $0x360] sm:$0xff]
    %v295 = vld [vmem:[#allocation2 + $0x368] sm:$0xff]
    %v296 = vld [vmem:[#allocation2 + $0x370] sm:$0xff]
    %v297 = vld [vmem:[#allocation2 + $0x378] sm:$0xff]
    %v298 = vld [vmem:[#allocation2 + $0x380] sm:$0xff]
    %v299 = vld [vmem:[#allocation2 + $0x388] sm:$0xff]
    %v300 = vld [vmem:[#allocation2 + $0x390] sm:$0xff]
    %v301 = vld [vmem:[#allocation2 + $0x398] sm:$0xff]
    %v302 = vld [vmem:[#allocation2 + $0x3a0] sm:$0xff]
    %v303 = vld [vmem:[#allocation2 + $0x3a8] sm:$0xff]
    %v304 = vld [vmem:[#allocation2 + $0x3b0] sm:$0xff]
    %v305 = vld [vmem:[#allocation2 + $0x3b8] sm:$0xff]
    %v306 = vld [vmem:[#allocation2 + $0x3c0] sm:$0xff]
    %v307 = vld [vmem:[#allocation2 + $0x3c8] sm:$0xff]
    %v308 = vld [vmem:[#allocation2 + $0x3d0] sm:$0xff]
    %v309 = vld [vmem:[#allocation2 + $0x3d8] sm:$0xff]
    %v310 = vld [vmem:[#allocation2 + $0x3e0] sm:$0xff]
    %v311 = vld [vmem:[#allocation2 + $0x3e8] sm:$0xff]
    %v312 = vld [vmem:[#allocation2 + $0x3f0] sm:$0xff]
    %v313 = vld [vmem:[#allocation2 + $0x3f8] sm:$0xff]
    %v314 = vld [vmem:[#allocation2 + $0x400] sm:$0xff]
    %v315 = vld [vmem:[#allocation2 + $0x408] sm:$0xff]
    %v316 = vld [vmem:[#allocation2 + $0x410] sm:$0xff]
    %v317 = vld [vmem:[#allocation2 + $0x418] sm:$0xff]
    %v318 = vld [vmem:[#allocation2 + $0x420] sm:$0xff]
    %v319 = vld [vmem:[#allocation2 + $0x428] sm:$0xff]
    %v320 = vld [vmem:[#allocation2 + $0x430] sm:$0xff]
    %v321 = vld [vmem:[#allocation2 + $0x438] sm:$0xff]
    %v322 = vld [vmem:[#allocation2 + $0x440] sm:$0xff]
    %v323 = vld [vmem:[#allocation2 + $0x448] sm:$0xff]
    %v324 = vld [vmem:[#allocation2 + $0x450] sm:$0xff]
    %v325 = vld [vmem:[#allocation2 + $0x458] sm:$0xff]
    %v326 = vld [vmem:[#allocation2 + $0x460] sm:$0xff]
    %v327 = vld [vmem:[#allocation2 + $0x468] sm:$0xff]
    %v328 = vld [vmem:[#allocation2 + $0x470] sm:$0xff]
    %v329 = vld [vmem:[#allocation2 + $0x478] sm:$0xff]
    %v330 = vld [vmem:[#allocation2 + $0x480] sm:$0xff]
    %v331 = vld [vmem:[#allocation2 + $0x488] sm:$0xff]
    %v332 = vld [vmem:[#allocation2 + $0x490] sm:$0xff]
    %v333 = vld [vmem:[#allocation2 + $0x498] sm:$0xff]
    %v334 = vld [vmem:[#allocation2 + $0x4a0] sm:$0xff]
    %v335 = vld [vmem:[#allocation2 + $0x4a8] sm:$0xff]
    %v336 = vld [vmem:[#allocation2 + $0x4b0] sm:$0xff]
    %v337 = vld [vmem:[#allocation2 + $0x4b8] sm:$0xff]
    %v338 = vld [vmem:[#allocation2 + $0x4c0] sm:$0xff]
    %v339 = vld [vmem:[#allocation2 + $0x4c8] sm:$0xff]
    %v340 = vld [vmem:[#allocation2 + $0x4d0] sm:$0xff]
    %v341 = vld [vmem:[#allocation2 + $0x4d8] sm:$0xff]
    %v342 = vld [vmem:[#allocation2 + $0x4e0] sm:$0xff]
    %v343 = vld [vmem:[#allocation2 + $0x4e8] sm:$0xff]
    %v344 = vld [vmem:[#allocation2 + $0x4f0] sm:$0xff]
    %v345 = vld [vmem:[#allocation2 + $0x4f8] sm:$0xff]
    %v346 = vld [vmem:[#allocation2 + $0x500] sm:$0xff]
    %v347 = vld [vmem:[#allocation2 + $0x508] sm:$0xff]
    %v348 = vld [vmem:[#allocation2 + $0x510] sm:$0xff]
    %v349 = vld [vmem:[#allocation2 + $0x518] sm:$0xff]
    %v350 = vld [vmem:[#allocation2 + $0x520] sm:$0xff]
    %v351 = vld [vmem:[#allocation2 + $0x528] sm:$0xff]
    %v352 = vld [vmem:[#allocation2 + $0x530] sm:$0xff]
    %v353 = vld [vmem:[#allocation2 + $0x538] sm:$0xff]
    %v354 = vld [vmem:[#allocation2 + $0x540] sm:$0xff]
    %v355 = vld [vmem:[#allocation2 + $0x548] sm:$0xff]
    %v356 = vld [vmem:[#allocation2 + $0x550] sm:$0xff]
    %v357 = vld [vmem:[#allocation2 + $0x558] sm:$0xff]
    %v358 = vld [vmem:[#allocation2 + $0x560] sm:$0xff]
    %v359 = vld [vmem:[#allocation2 + $0x568] sm:$0xff]
    %v360 = vld [vmem:[#allocation2 + $0x570] sm:$0xff]
    %v361 = vld [vmem:[#allocation2 + $0x578] sm:$0xff]
    %v362 = vld [vmem:[#allocation2 + $0x580] sm:$0xff]
    %v363 = vld [vmem:[#allocation2 + $0x588] sm:$0xff]
    %v364 = vld [vmem:[#allocation2 + $0x590] sm:$0xff]
    %v365 = vld [vmem:[#allocation2 + $0x598] sm:$0xff]
    %v366 = vld [vmem:[#allocation2 + $0x5a0] sm:$0xff]
    %v367 = vld [vmem:[#allocation2 + $0x5a8] sm:$0xff]
    %v368 = vld [vmem:[#allocation2 + $0x5b0] sm:$0xff]
    %v369 = vld [vmem:[#allocation2 + $0x5b8] sm:$0xff]
    %v370 = vld [vmem:[#allocation2 + $0x5c0] sm:$0xff]
    %v371 = vld [vmem:[#allocation2 + $0x5c8] sm:$0xff]
    %v372 = vld [vmem:[#allocation2 + $0x5d0] sm:$0xff]
    %v373 = vld [vmem:[#allocation2 + $0x5d8] sm:$0xff]
    %v374 = vld [vmem:[#allocation2 + $0x5e0] sm:$0xff]
    %v375 = vld [vmem:[#allocation2 + $0x5e8] sm:$0xff]
    %v376 = vld [vmem:[#allocation2 + $0x5f0] sm:$0xff]
    %v377 = vld [vmem:[#allocation2 + $0x5f8] sm:$0xff]
    %v378 = vld [vmem:[#allocation2 + $0x600] sm:$0xff]
    %v379 = vld [vmem:[#allocation2 + $0x608] sm:$0xff]
    %v380 = vld [vmem:[#allocation2 + $0x610] sm:$0xff]
    %v381 = vld [vmem:[#allocation2 + $0x618] sm:$0xff]
    %v382 = vld [vmem:[#allocation2 + $0x620] sm:$0xff]
    %v383 = vld [vmem:[#allocation2 + $0x628] sm:$0xff]
    %v384 = vld [vmem:[#allocation2 + $0x630] sm:$0xff]
    %v385 = vld [vmem:[#allocation2 + $0x638] sm:$0xff]
    %v386 = vld [vmem:[#allocation2 + $0x640] sm:$0xff]
    %v387 = vld [vmem:[#allocation2 + $0x648] sm:$0xff]
    %v388 = vld [vmem:[#allocation2 + $0x650] sm:$0xff]
    %v389 = vld [vmem:[#allocation2 + $0x658] sm:$0xff]
    %v390 = vld [vmem:[#allocation2 + $0x660] sm:$0xff]
    %v391 = vld [vmem:[#allocation2 + $0x668] sm:$0xff]
    %v392 = vld [vmem:[#allocation2 + $0x670] sm:$0xff]
    %v393 = vld [vmem:[#allocation2 + $0x678] sm:$0xff]
    %v394 = vld [vmem:[#allocation2 + $0x680] sm:$0xff]
    %v395 = vld [vmem:[#allocation2 + $0x688] sm:$0xff]
    %v396 = vld [vmem:[#allocation2 + $0x690] sm:$0xff]
    %v397 = vld [vmem:[#allocation2 + $0x698] sm:$0xff]
    %v398 = vld [vmem:[#allocation2 + $0x6a0] sm:$0xff]
    %v399 = vld [vmem:[#allocation2 + $0x6a8] sm:$0xff]
    %v400 = vld [vmem:[#allocation2 + $0x6b0] sm:$0xff]
    %v401 = vld [vmem:[#allocation2 + $0x6b8] sm:$0xff]
    %v402 = vld [vmem:[#allocation2 + $0x6c0] sm:$0xff]
    %v403 = vld [vmem:[#allocation2 + $0x6c8] sm:$0xff]
    %v404 = vld [vmem:[#allocation2 + $0x6d0] sm:$0xff]
    %v405 = vld [vmem:[#allocation2 + $0x6d8] sm:$0xff]
    %v406 = vld [vmem:[#allocation2 + $0x6e0] sm:$0xff]
    %v407 = vld [vmem:[#allocation2 + $0x6e8] sm:$0xff]
    %v408 = vld [vmem:[#allocation2 + $0x6f0] sm:$0xff]
    %v409 = vld [vmem:[#allocation2 + $0x6f8] sm:$0xff]
    %v410 = vld [vmem:[#allocation2 + $0x700] sm:$0xff]
    %v411 = vld [vmem:[#allocation2 + $0x708] sm:$0xff]
    %v412 = vld [vmem:[#allocation2 + $0x710] sm:$0xff]
    %v413 = vld [vmem:[#allocation2 + $0x718] sm:$0xff]
    %v414 = vld [vmem:[#allocation2 + $0x720] sm:$0xff]
    %v415 = vld [vmem:[#allocation2 + $0x728] sm:$0xff]
    %v416 = vld [vmem:[#allocation2 + $0x730] sm:$0xff]
    %v417 = vld [vmem:[#allocation2 + $0x738] sm:$0xff]
    %v418 = vld [vmem:[#allocation2 + $0x740] sm:$0xff]
    %v419 = vld [vmem:[#allocation2 + $0x748] sm:$0xff]
    %v420 = vld [vmem:[#allocation2 + $0x750] sm:$0xff]
    %v421 = vld [vmem:[#allocation2 + $0x758] sm:$0xff]
    %v422 = vld [vmem:[#allocation2 + $0x760] sm:$0xff]
    %v423 = vld [vmem:[#allocation2 + $0x768] sm:$0xff]
    %v424 = vld [vmem:[#allocation2 + $0x770] sm:$0xff]
    %v425 = vld [vmem:[#allocation2 + $0x778] sm:$0xff]
    %v426 = vld [vmem:[#allocation2 + $0x780] sm:$0xff]
    %v427 = vld [vmem:[#allocation2 + $0x788] sm:$0xff]
    %v428 = vld [vmem:[#allocation2 + $0x790] sm:$0xff]
    %v429 = vld [vmem:[#allocation2 + $0x798] sm:$0xff]
    %v430 = vld [vmem:[#allocation2 + $0x7a0] sm:$0xff]
    %v431 = vld [vmem:[#allocation2 + $0x7a8] sm:$0xff]
    %v432 = vld [vmem:[#allocation2 + $0x7b0] sm:$0xff]
    %v433 = vld [vmem:[#allocation2 + $0x7b8] sm:$0xff]
    %v434 = vld [vmem:[#allocation2 + $0x7c0] sm:$0xff]
    %v435 = vld [vmem:[#allocation2 + $0x7c8] sm:$0xff]
    %v436 = vld [vmem:[#allocation2 + $0x7d0] sm:$0xff]
    %v437 = vld [vmem:[#allocation2 + $0x7d8] sm:$0xff]
    %v438 = vld [vmem:[#allocation2 + $0x7e0] sm:$0xff]
    %v439 = vld [vmem:[#allocation2 + $0x7e8] sm:$0xff]
    %v440 = vld [vmem:[#allocation2 + $0x7f0] sm:$0xff]
    %v441 = vld [vmem:[#allocation2 + $0x7f8] sm:$0xff]
    %v442 = vld [vmem:[#allocation2 + $0x800] sm:$0xff]
    %v443 = vld [vmem:[#allocation2 + $0x808] sm:$0xff]
    %v444 = vld [vmem:[#allocation2 + $0x810] sm:$0xff]
    %v445 = vld [vmem:[#allocation2 + $0x818] sm:$0xff]
    %v446 = vld [vmem:[#allocation2 + $0x820] sm:$0xff]
    %v447 = vld [vmem:[#allocation2 + $0x828] sm:$0xff]
    %v448 = vld [vmem:[#allocation2 + $0x830] sm:$0xff]
    %v449 = vld [vmem:[#allocation2 + $0x838] sm:$0xff]
    %v450 = vld [vmem:[#allocation2 + $0x840] sm:$0xff]
    %v451 = vld [vmem:[#allocation2 + $0x848] sm:$0xff]
    %v452 = vld [vmem:[#allocation2 + $0x850] sm:$0xff]
    %v453 = vld [vmem:[#allocation2 + $0x858] sm:$0xff]
    %v454 = vld [vmem:[#allocation2 + $0x860] sm:$0xff]
    %v455 = vld [vmem:[#allocation2 + $0x868] sm:$0xff]
    %v456 = vld [vmem:[#allocation2 + $0x870] sm:$0xff]
    %v457 = vld [vmem:[#allocation2 + $0x878] sm:$0xff]
    %v458 = vld [vmem:[#allocation2 + $0x880] sm:$0xff]
    %v459 = vld [vmem:[#allocation2 + $0x888] sm:$0xff]
    %v460 = vld [vmem:[#allocation2 + $0x890] sm:$0xff]
    %v461 = vld [vmem:[#allocation2 + $0x898] sm:$0xff]
    %v462 = vld [vmem:[#allocation2 + $0x8a0] sm:$0xff]
    %v463 = vld [vmem:[#allocation2 + $0x8a8] sm:$0xff]
    %v464 = vld [vmem:[#allocation2 + $0x8b0] sm:$0xff]
    %v465 = vld [vmem:[#allocation2 + $0x8b8] sm:$0xff]
    %v466 = vld [vmem:[#allocation2 + $0x8c0] sm:$0xff]
    %v467 = vld [vmem:[#allocation2 + $0x8c8] sm:$0xff]
    %v468 = vld [vmem:[#allocation2 + $0x8d0] sm:$0xff]
    %v469 = vld [vmem:[#allocation2 + $0x8d8] sm:$0xff]
    %v470 = vld [vmem:[#allocation2 + $0x8e0] sm:$0xff]
    %v471 = vld [vmem:[#allocation2 + $0x8e8] sm:$0xff]
    %v472 = vld [vmem:[#allocation2 + $0x8f0] sm:$0xff]
    %v473 = vld [vmem:[#allocation2 + $0x8f8] sm:$0xff]
    %v474 = vld [vmem:[#allocation2 + $0x900] sm:$0xff]
    %v475 = vld [vmem:[#allocation2 + $0x908] sm:$0xff]
    %v476 = vld [vmem:[#allocation2 + $0x910] sm:$0xff]
    %v477 = vld [vmem:[#allocation2 + $0x918] sm:$0xff]
    %v478 = vld [vmem:[#allocation2 + $0x920] sm:$0xff]
    %v479 = vld [vmem:[#allocation2 + $0x928] sm:$0xff]
    %v480 = vld [vmem:[#allocation2 + $0x930] sm:$0xff]
    %v481 = vld [vmem:[#allocation2 + $0x938] sm:$0xff]
    %v482 = vld [vmem:[#allocation2 + $0x940] sm:$0xff]
    %v483 = vld [vmem:[#allocation2 + $0x948] sm:$0xff]
    %v484 = vld [vmem:[#allocation2 + $0x950] sm:$0xff]
    %v485 = vld [vmem:[#allocation2 + $0x958] sm:$0xff]
    %v486 = vld [vmem:[#allocation2 + $0x960] sm:$0xff]
    %v487 = vld [vmem:[#allocation2 + $0x968] sm:$0xff]
    %v488 = vld [vmem:[#allocation2 + $0x970] sm:$0xff]
    %v489 = vld [vmem:[#allocation2 + $0x978] sm:$0xff]
    %v490 = vld [vmem:[#allocation2 + $0x980] sm:$0xff]
    %v491 = vld [vmem:[#allocation2 + $0x988] sm:$0xff]
    %v492 = vld [vmem:[#allocation2 + $0x990] sm:$0xff]
    %v493 = vld [vmem:[#allocation2 + $0x998] sm:$0xff]
    %v494 = vld [vmem:[#allocation2 + $0x9a0] sm:$0xff]
    %v495 = vld [vmem:[#allocation2 + $0x9a8] sm:$0xff]
    %v496 = vld [vmem:[#allocation2 + $0x9b0] sm:$0xff]
    %v497 = vld [vmem:[#allocation2 + $0x9b8] sm:$0xff]
    %v498 = vld [vmem:[#allocation2 + $0x9c0] sm:$0xff]
    %v499 = vld [vmem:[#allocation2 + $0x9c8] sm:$0xff]
    %v500 = vld [vmem:[#allocation2 + $0x9d0] sm:$0xff]
    %v501 = vld [vmem:[#allocation2 + $0x9d8] sm:$0xff]
    %v502 = vld [vmem:[#allocation2 + $0x9e0] sm:$0xff]
    %v503 = vld [vmem:[#allocation2 + $0x9e8] sm:$0xff]
    %v504 = vld [vmem:[#allocation2 + $0x9f0] sm:$0xff]
    %v505 = vld [vmem:[#allocation2 + $0x9f8] sm:$0xff]
    %v506 = vld [vmem:[#allocation2 + $0xa00] sm:$0xff]
    %v507 = vld [vmem:[#allocation2 + $0xa08] sm:$0xff]
    %v508 = vld [vmem:[#allocation2 + $0xa10] sm:$0xff]
    %v509 = vld [vmem:[#allocation2 + $0xa18] sm:$0xff]
    %v510 = vld [vmem:[#allocation2 + $0xa20] sm:$0xff]
    %v511 = vld [vmem:[#allocation2 + $0xa28] sm:$0xff]
    %v512 = vld [vmem:[#allocation2 + $0xa30] sm:$0xff]
    %v513 = vld [vmem:[#allocation2 + $0xa38] sm:$0xff]
    %v514 = vld [vmem:[#allocation2 + $0xa40] sm:$0xff]
    %v515 = vld [vmem:[#allocation2 + $0xa48] sm:$0xff]
    %v516 = vld [vmem:[#allocation2 + $0xa50] sm:$0xff]
    %v517 = vld [vmem:[#allocation2 + $0xa58] sm:$0xff]
    %v518 = vld [vmem:[#allocation2 + $0xa60] sm:$0xff]
    %v519 = vld [vmem:[#allocation2 + $0xa68] sm:$0xff]
    %v520 = vld [vmem:[#allocation2 + $0xa70] sm:$0xff]
    %v521 = vld [vmem:[#allocation2 + $0xa78] sm:$0xff]
    %v522 = vld [vmem:[#allocation2 + $0xa80] sm:$0xff]
    %v523 = vld [vmem:[#allocation2 + $0xa88] sm:$0xff]
    %v524 = vld [vmem:[#allocation2 + $0xa90] sm:$0xff]
    %v525 = vld [vmem:[#allocation2 + $0xa98] sm:$0xff]
    %v526 = vld [vmem:[#allocation2 + $0xaa0] sm:$0xff]
    %v527 = vld [vmem:[#allocation2 + $0xaa8] sm:$0xff]
    %v528 = vld [vmem:[#allocation2 + $0xab0] sm:$0xff]
    %v529 = vld [vmem:[#allocation2 + $0xab8] sm:$0xff]
    %v530 = vld [vmem:[#allocation2 + $0xac0] sm:$0xff]
    %v531 = vld [vmem:[#allocation2 + $0xac8] sm:$0xff]
    %v532 = vld [vmem:[#allocation2 + $0xad0] sm:$0xff]
    %v533 = vld [vmem:[#allocation2 + $0xad8] sm:$0xff]
    %v534 = vld [vmem:[#allocation2 + $0xae0] sm:$0xff]
    %v535 = vld [vmem:[#allocation2 + $0xae8] sm:$0xff]
    %v536 = vld [vmem:[#allocation2 + $0xaf0] sm:$0xff]
    %v537 = vld [vmem:[#allocation2 + $0xaf8] sm:$0xff]
    %v538 = vld [vmem:[#allocation2 + $0xb00] sm:$0xff]
    %v539 = vld [vmem:[#allocation2 + $0xb08] sm:$0xff]
    %v540 = vld [vmem:[#allocation2 + $0xb10] sm:$0xff]
    %v541 = vld [vmem:[#allocation2 + $0xb18] sm:$0xff]
    %v542 = vld [vmem:[#allocation2 + $0xb20] sm:$0xff]
    %v543 = vld [vmem:[#allocation2 + $0xb28] sm:$0xff]
    %v544 = vld [vmem:[#allocation2 + $0xb30] sm:$0xff]
    %v545 = vld [vmem:[#allocation2 + $0xb38] sm:$0xff]
    %v546 = vld [vmem:[#allocation2 + $0xb40] sm:$0xff]
    %v547 = vld [vmem:[#allocation2 + $0xb48] sm:$0xff]
    %v548 = vld [vmem:[#allocation2 + $0xb50] sm:$0xff]
    %v549 = vld [vmem:[#allocation2 + $0xb58] sm:$0xff]
    %v550 = vld [vmem:[#allocation2 + $0xb60] sm:$0xff]
    %v551 = vld [vmem:[#allocation2 + $0xb68] sm:$0xff]
    %v552 = vld [vmem:[#allocation2 + $0xb70] sm:$0xff]
    %v553 = vld [vmem:[#allocation2 + $0xb78] sm:$0xff]
    %v554 = vld [vmem:[#allocation2 + $0xb80] sm:$0xff]
    %v555 = vld [vmem:[#allocation2 + $0xb88] sm:$0xff]
    %v556 = vld [vmem:[#allocation2 + $0xb90] sm:$0xff]
    %v557 = vld [vmem:[#allocation2 + $0xb98] sm:$0xff]
    %v558 = vld [vmem:[#allocation2 + $0xba0] sm:$0xff]
    %v559 = vld [vmem:[#allocation2 + $0xba8] sm:$0xff]
    %v560 = vld [vmem:[#allocation2 + $0xbb0] sm:$0xff]
    %v561 = vld [vmem:[#allocation2 + $0xbb8] sm:$0xff]
    %v562 = vld [vmem:[#allocation2 + $0xbc0] sm:$0xff]
    %v563 = vld [vmem:[#allocation2 + $0xbc8] sm:$0xff]
    %v564 = vld [vmem:[#allocation2 + $0xbd0] sm:$0xff]
    %v565 = vld [vmem:[#allocation2 + $0xbd8] sm:$0xff]
    %v566 = vld [vmem:[#allocation2 + $0xbe0] sm:$0xff]
    %v567 = vld [vmem:[#allocation2 + $0xbe8] sm:$0xff]
    %v568 = vld [vmem:[#allocation2 + $0xbf0] sm:$0xff]
    %v569 = vld [vmem:[#allocation2 + $0xbf8] sm:$0xff]
    %v570 = vld [vmem:[#allocation2 + $0xc00] sm:$0xff]
    %v571 = vld [vmem:[#allocation2 + $0xc08] sm:$0xff]
    %v572 = vld [vmem:[#allocation2 + $0xc10] sm:$0xff]
    %v573 = vld [vmem:[#allocation2 + $0xc18] sm:$0xff]
    %v574 = vld [vmem:[#allocation2 + $0xc20] sm:$0xff]
    %v575 = vld [vmem:[#allocation2 + $0xc28] sm:$0xff]
    %v576 = vld [vmem:[#allocation2 + $0xc30] sm:$0xff]
    %v577 = vld [vmem:[#allocation2 + $0xc38] sm:$0xff]
    %v578 = vld [vmem:[#allocation2 + $0xc40] sm:$0xff]
    %v579 = vld [vmem:[#allocation2 + $0xc48] sm:$0xff]
    %v580 = vld [vmem:[#allocation2 + $0xc50] sm:$0xff]
    %v581 = vld [vmem:[#allocation2 + $0xc58] sm:$0xff]
    %v582 = vld [vmem:[#allocation2 + $0xc60] sm:$0xff]
    %v583 = vld [vmem:[#allocation2 + $0xc68] sm:$0xff]
    %v584 = vld [vmem:[#allocation2 + $0xc70] sm:$0xff]
    %v585 = vld [vmem:[#allocation2 + $0xc78] sm:$0xff]
    %v586 = vld [vmem:[#allocation2 + $0xc80] sm:$0xff]
    %v587 = vld [vmem:[#allocation2 + $0xc88] sm:$0xff]
    %v588 = vld [vmem:[#allocation2 + $0xc90] sm:$0xff]
    %v589 = vld [vmem:[#allocation2 + $0xc98] sm:$0xff]
    %v590 = vld [vmem:[#allocation2 + $0xca0] sm:$0xff]
    %v591 = vld [vmem:[#allocation2 + $0xca8] sm:$0xff]
    %v592 = vld [vmem:[#allocation2 + $0xcb0] sm:$0xff]
    %v593 = vld [vmem:[#allocation2 + $0xcb8] sm:$0xff]
    %v594 = vld [vmem:[#allocation2 + $0xcc0] sm:$0xff]
    %v595 = vld [vmem:[#allocation2 + $0xcc8] sm:$0xff]
    %v596 = vld [vmem:[#allocation2 + $0xcd0] sm:$0xff]
    %v597 = vld [vmem:[#allocation2 + $0xcd8] sm:$0xff]
    %v598 = vld [vmem:[#allocation2 + $0xce0] sm:$0xff]
    %v599 = vld [vmem:[#allocation2 + $0xce8] sm:$0xff]
    %v600 = vld [vmem:[#allocation2 + $0xcf0] sm:$0xff]
    %v601 = vld [vmem:[#allocation2 + $0xcf8] sm:$0xff]
    %v602 = vld [vmem:[#allocation2 + $0xd00] sm:$0xff]
    %v603 = vld [vmem:[#allocation2 + $0xd08] sm:$0xff]
    %v604 = vld [vmem:[#allocation2 + $0xd10] sm:$0xff]
    %v605 = vld [vmem:[#allocation2 + $0xd18] sm:$0xff]
    %v606 = vld [vmem:[#allocation2 + $0xd20] sm:$0xff]
    %v607 = vld [vmem:[#allocation2 + $0xd28] sm:$0xff]
    %v608 = vld [vmem:[#allocation2 + $0xd30] sm:$0xff]
    %v609 = vld [vmem:[#allocation2 + $0xd38] sm:$0xff]
    %v610 = vld [vmem:[#allocation2 + $0xd40] sm:$0xff]
    %v611 = vld [vmem:[#allocation2 + $0xd48] sm:$0xff]
    %v612 = vld [vmem:[#allocation2 + $0xd50] sm:$0xff]
    %v613 = vld [vmem:[#allocation2 + $0xd58] sm:$0xff]
    %v614 = vld [vmem:[#allocation2 + $0xd60] sm:$0xff]
    %v615 = vld [vmem:[#allocation2 + $0xd68] sm:$0xff]
    %v616 = vld [vmem:[#allocation2 + $0xd70] sm:$0xff]
    %v617 = vld [vmem:[#allocation2 + $0xd78] sm:$0xff]
    %v618 = vld [vmem:[#allocation2 + $0xd80] sm:$0xff]
    %v619 = vld [vmem:[#allocation2 + $0xd88] sm:$0xff]
    %v620 = vld [vmem:[#allocation2 + $0xd90] sm:$0xff]
    %v621 = vld [vmem:[#allocation2 + $0xd98] sm:$0xff]
    %v622 = vld [vmem:[#allocation2 + $0xda0] sm:$0xff]
    %v623 = vld [vmem:[#allocation2 + $0xda8] sm:$0xff]
    %v624 = vld [vmem:[#allocation2 + $0xdb0] sm:$0xff]
    %v625 = vld [vmem:[#allocation2 + $0xdb8] sm:$0xff]
    %v626 = vld [vmem:[#allocation2 + $0xdc0] sm:$0xff]
    %v627 = vld [vmem:[#allocation2 + $0xdc8] sm:$0xff]
    %v628 = vld [vmem:[#allocation2 + $0xdd0] sm:$0xff]
    %v629 = vld [vmem:[#allocation2 + $0xdd8] sm:$0xff]
    %v630 = vld [vmem:[#allocation2 + $0xde0] sm:$0xff]
    %v631 = vld [vmem:[#allocation2 + $0xde8] sm:$0xff]
    %v632 = vld [vmem:[#allocation2 + $0xdf0] sm:$0xff]
    %v633 = vld [vmem:[#allocation2 + $0xdf8] sm:$0xff]
    %v634 = vld [vmem:[#allocation2 + $0xe00] sm:$0xff]
    %v635 = vld [vmem:[#allocation2 + $0xe08] sm:$0xff]
    %v636 = vld [vmem:[#allocation2 + $0xe10] sm:$0xff]
    %v637 = vld [vmem:[#allocation2 + $0xe18] sm:$0xff]
    %v638 = vld [vmem:[#allocation2 + $0xe20] sm:$0xff]
    %v639 = vld [vmem:[#allocation2 + $0xe28] sm:$0xff]
    %v640 = vld [vmem:[#allocation2 + $0xe30] sm:$0xff]
    %v641 = vld [vmem:[#allocation2 + $0xe38] sm:$0xff]
    %v642 = vld [vmem:[#allocation2 + $0xe40] sm:$0xff]
    %v643 = vld [vmem:[#allocation2 + $0xe48] sm:$0xff]
    %v644 = vld [vmem:[#allocation2 + $0xe50] sm:$0xff]
    %v645 = vld [vmem:[#allocation2 + $0xe58] sm:$0xff]
    %v646 = vld [vmem:[#allocation2 + $0xe60] sm:$0xff]
    %v647 = vld [vmem:[#allocation2 + $0xe68] sm:$0xff]
    %v648 = vld [vmem:[#allocation2 + $0xe70] sm:$0xff]
    %v649 = vld [vmem:[#allocation2 + $0xe78] sm:$0xff]
    %v650 = vld [vmem:[#allocation2 + $0xe80] sm:$0xff]
    %v651 = vld [vmem:[#allocation2 + $0xe88] sm:$0xff]
    %v652 = vld [vmem:[#allocation2 + $0xe90] sm:$0xff]
    %v653 = vld [vmem:[#allocation2 + $0xe98] sm:$0xff]
    %v654 = vld [vmem:[#allocation2 + $0xea0] sm:$0xff]
    %v655 = vld [vmem:[#allocation2 + $0xea8] sm:$0xff]
    %v656 = vld [vmem:[#allocation2 + $0xeb0] sm:$0xff]
    %v657 = vld [vmem:[#allocation2 + $0xeb8] sm:$0xff]
    %v658 = vld [vmem:[#allocation2 + $0xec0] sm:$0xff]
    %v659 = vld [vmem:[#allocation2 + $0xec8] sm:$0xff]
    %v660 = vld [vmem:[#allocation2 + $0xed0] sm:$0xff]
    %v661 = vld [vmem:[#allocation2 + $0xed8] sm:$0xff]
    %v662 = vld [vmem:[#allocation2 + $0xee0] sm:$0xff]
    %v663 = vld [vmem:[#allocation2 + $0xee8] sm:$0xff]
    %v664 = vld [vmem:[#allocation2 + $0xef0] sm:$0xff]
    %v665 = vld [vmem:[#allocation2 + $0xef8] sm:$0xff]
    %v666 = vld [vmem:[#allocation2 + $0xf00] sm:$0xff]
    %v667 = vld [vmem:[#allocation2 + $0xf08] sm:$0xff]
    %v668 = vld [vmem:[#allocation2 + $0xf10] sm:$0xff]
    %v669 = vld [vmem:[#allocation2 + $0xf18] sm:$0xff]
    %v670 = vld [vmem:[#allocation2 + $0xf20] sm:$0xff]
    %v671 = vld [vmem:[#allocation2 + $0xf28] sm:$0xff]
    %v672 = vld [vmem:[#allocation2 + $0xf30] sm:$0xff]
    %v673 = vld [vmem:[#allocation2 + $0xf38] sm:$0xff]
    %v674 = vld [vmem:[#allocation2 + $0xf40] sm:$0xff]
    %v675 = vld [vmem:[#allocation2 + $0xf48] sm:$0xff]
    %v676 = vld [vmem:[#allocation2 + $0xf50] sm:$0xff]
    %v677 = vld [vmem:[#allocation2 + $0xf58] sm:$0xff]
    %v678 = vld [vmem:[#allocation2 + $0xf60] sm:$0xff]
    %v679 = vld [vmem:[#allocation2 + $0xf68] sm:$0xff]
    %v680 = vld [vmem:[#allocation2 + $0xf70] sm:$0xff]
    %v681 = vld [vmem:[#allocation2 + $0xf78] sm:$0xff]
    %v682 = vld [vmem:[#allocation2 + $0xf80] sm:$0xff]
    %v683 = vld [vmem:[#allocation2 + $0xf88] sm:$0xff]
    %v684 = vld [vmem:[#allocation2 + $0xf90] sm:$0xff]
    %v685 = vld [vmem:[#allocation2 + $0xf98] sm:$0xff]
    %v686 = vld [vmem:[#allocation2 + $0xfa0] sm:$0xff]
    %v687 = vld [vmem:[#allocation2 + $0xfa8] sm:$0xff]
    %v688 = vld [vmem:[#allocation2 + $0xfb0] sm:$0xff]
    %v689 = vld [vmem:[#allocation2 + $0xfb8] sm:$0xff]
    %v690 = vld [vmem:[#allocation2 + $0xfc0] sm:$0xff]
    %v691 = vld [vmem:[#allocation2 + $0xfc8] sm:$0xff]
    %v692 = vld [vmem:[#allocation2 + $0xfd0] sm:$0xff]
    %v693 = vld [vmem:[#allocation2 + $0xfd8] sm:$0xff]
    %v694 = vld [vmem:[#allocation2 + $0xfe0] sm:$0xff]
    %v695 = vld [vmem:[#allocation2 + $0xfe8] sm:$0xff]
    %v696 = vld [vmem:[#allocation2 + $0xff0] sm:$0xff]
    %v697 = vld [vmem:[#allocation2 + $0xff8] sm:$0xff]
    %v698 = vld [vmem:[#allocation2 + $0x1000] sm:$0xff]
    %v699 = vld [vmem:[#allocation2 + $0x1008] sm:$0xff]
    %v700 = vld [vmem:[#allocation2 + $0x1010] sm:$0xff]
    %v701 = vld [vmem:[#allocation2 + $0x1018] sm:$0xff]
    %v702 = vld [vmem:[#allocation2 + $0x1020] sm:$0xff]
    %v703 = vld [vmem:[#allocation2 + $0x1028] sm:$0xff]
    %v704 = vld [vmem:[#allocation2 + $0x1030] sm:$0xff]
    %v705 = vld [vmem:[#allocation2 + $0x1038] sm:$0xff]
    %v706 = vld [vmem:[#allocation2 + $0x1040] sm:$0xff]
    %v707 = vld [vmem:[#allocation2 + $0x1048] sm:$0xff]
    %v708 = vld [vmem:[#allocation2 + $0x1050] sm:$0xff]
    %v709 = vld [vmem:[#allocation2 + $0x1058] sm:$0xff]
    %v710 = vld [vmem:[#allocation2 + $0x1060] sm:$0xff]
    %v711 = vld [vmem:[#allocation2 + $0x1068] sm:$0xff]
    %v712 = vld [vmem:[#allocation2 + $0x1070] sm:$0xff]
    %v713 = vld [vmem:[#allocation2 + $0x1078] sm:$0xff]
    %v714 = vld [vmem:[#allocation2 + $0x1080] sm:$0xff]
    %v715 = vld [vmem:[#allocation2 + $0x1088] sm:$0xff]
    %v716 = vld [vmem:[#allocation2 + $0x1090] sm:$0xff]
    %v717 = vld [vmem:[#allocation2 + $0x1098] sm:$0xff]
    %v718 = vld [vmem:[#allocation2 + $0x10a0] sm:$0xff]
    %v719 = vld [vmem:[#allocation2 + $0x10a8] sm:$0xff]
    %v720 = vld [vmem:[#allocation2 + $0x10b0] sm:$0xff]
    %v721 = vld [vmem:[#allocation2 + $0x10b8] sm:$0xff]
    %v722 = vld [vmem:[#allocation2 + $0x10c0] sm:$0xff]
    %v723 = vld [vmem:[#allocation2 + $0x10c8] sm:$0xff]
    %v724 = vld [vmem:[#allocation2 + $0x10d0] sm:$0xff]
    %v725 = vld [vmem:[#allocation2 + $0x10d8] sm:$0xff]
    %v726 = vld [vmem:[#allocation2 + $0x10e0] sm:$0xff]
    %v727 = vld [vmem:[#allocation2 + $0x10e8] sm:$0xff]
    %v728 = vld [vmem:[#allocation2 + $0x10f0] sm:$0xff]
    %v729 = vld [vmem:[#allocation2 + $0x10f8] sm:$0xff]
    %v730 = vld [vmem:[#allocation2 + $0x1100] sm:$0xff]
    %v731 = vld [vmem:[#allocation2 + $0x1108] sm:$0xff]
    %v732 = vld [vmem:[#allocation2 + $0x1110] sm:$0xff]
    %v733 = vld [vmem:[#allocation2 + $0x1118] sm:$0xff]
    %v734 = vld [vmem:[#allocation2 + $0x1120] sm:$0xff]
    %v735 = vld [vmem:[#allocation2 + $0x1128] sm:$0xff]
    %v736 = vld [vmem:[#allocation2 + $0x1130] sm:$0xff]
    %v737 = vld [vmem:[#allocation2 + $0x1138] sm:$0xff]
    %v738 = vld [vmem:[#allocation2 + $0x1140] sm:$0xff]
    %v739 = vld [vmem:[#allocation2 + $0x1148] sm:$0xff]
    %v740 = vld [vmem:[#allocation2 + $0x1150] sm:$0xff]
    %v741 = vld [vmem:[#allocation2 + $0x1158] sm:$0xff]
    %v742 = vld [vmem:[#allocation2 + $0x1160] sm:$0xff]
    %v743 = vld [vmem:[#allocation2 + $0x1168] sm:$0xff]
    %v744 = vld [vmem:[#allocation2 + $0x1170] sm:$0xff]
    %v745 = vld [vmem:[#allocation2 + $0x1178] sm:$0xff]
    %v746 = vld [vmem:[#allocation2 + $0x1180] sm:$0xff]
    %v747 = vld [vmem:[#allocation2 + $0x1188] sm:$0xff]
    %v748 = vld [vmem:[#allocation2 + $0x1190] sm:$0xff]
    %v749 = vld [vmem:[#allocation2 + $0x1198] sm:$0xff]
    %v750 = vld [vmem:[#allocation2 + $0x11a0] sm:$0xff]
    %v751 = vld [vmem:[#allocation2 + $0x11a8] sm:$0xff]
    %v752 = vld [vmem:[#allocation2 + $0x11b0] sm:$0xff]
    %v753 = vld [vmem:[#allocation2 + $0x11b8] sm:$0xff]
    %v754 = vld [vmem:[#allocation2 + $0x11c0] sm:$0xff]
    %v755 = vld [vmem:[#allocation2 + $0x11c8] sm:$0xff]
    %v756 = vld [vmem:[#allocation2 + $0x11d0] sm:$0xff]
    %v757 = vld [vmem:[#allocation2 + $0x11d8] sm:$0xff]
    %v758 = vld [vmem:[#allocation2 + $0x11e0] sm:$0xff]
    %v759 = vld [vmem:[#allocation2 + $0x11e8] sm:$0xff]
    %v760 = vld [vmem:[#allocation2 + $0x11f0] sm:$0xff]
    %v761 = vld [vmem:[#allocation2 + $0x11f8] sm:$0xff]
    %v762 = vld [vmem:[#allocation2 + $0x1200] sm:$0xff]
    %v763 = vld [vmem:[#allocation2 + $0x1208] sm:$0xff]
    %v764 = vld [vmem:[#allocation2 + $0x1210] sm:$0xff]
    %v765 = vld [vmem:[#allocation2 + $0x1218] sm:$0xff]
    %v766 = vld [vmem:[#allocation2 + $0x1220] sm:$0xff]
    %v767 = vld [vmem:[#allocation2 + $0x1228] sm:$0xff]
    %v768 = vld [vmem:[#allocation2 + $0x1230] sm:$0xff]
    %v769 = vld [vmem:[#allocation2 + $0x1238] sm:$0xff]
    %v770 = vld [vmem:[#allocation2 + $0x1240] sm:$0xff]
    %v771 = vld [vmem:[#allocation2 + $0x1248] sm:$0xff]
    %v772 = vld [vmem:[#allocation2 + $0x1250] sm:$0xff]
    %v773 = vld [vmem:[#allocation2 + $0x1258] sm:$0xff]
    %v774 = vld [vmem:[#allocation2 + $0x1260] sm:$0xff]
    %v775 = vld [vmem:[#allocation2 + $0x1268] sm:$0xff]
    %v776 = vld [vmem:[#allocation2 + $0x1270] sm:$0xff]
    %v777 = vld [vmem:[#allocation2 + $0x1278] sm:$0xff]
    %v778 = vld [vmem:[#allocation2 + $0x1280] sm:$0xff]
    %v779 = vld [vmem:[#allocation2 + $0x1288] sm:$0xff]
    %v780 = vld [vmem:[#allocation2 + $0x1290] sm:$0xff]
    %v781 = vld [vmem:[#allocation2 + $0x1298] sm:$0xff]
    %v782 = vld [vmem:[#allocation2 + $0x12a0] sm:$0xff]
    %v783 = vld [vmem:[#allocation2 + $0x12a8] sm:$0xff]
    %v784 = vld [vmem:[#allocation2 + $0x12b0] sm:$0xff]
    %v785 = vld [vmem:[#allocation2 + $0x12b8] sm:$0xff]
    %v786 = vld [vmem:[#allocation2 + $0x12c0] sm:$0xff]
    %v787 = vld [vmem:[#allocation2 + $0x12c8] sm:$0xff]
    %v788 = vld [vmem:[#allocation2 + $0x12d0] sm:$0xff]
    %v789 = vld [vmem:[#allocation2 + $0x12d8] sm:$0xff]
    %v790 = vld [vmem:[#allocation2 + $0x12e0] sm:$0xff]
    %v791 = vld [vmem:[#allocation2 + $0x12e8] sm:$0xff]
    %v792 = vld [vmem:[#allocation2 + $0x12f0] sm:$0xff]
    %v793 = vld [vmem:[#allocation2 + $0x12f8] sm:$0xff]
    %v794 = vld [vmem:[#allocation2 + $0x1300] sm:$0xff]
    %v795 = vld [vmem:[#allocation2 + $0x1308] sm:$0xff]
    %v796 = vld [vmem:[#allocation2 + $0x1310] sm:$0xff]
    %v797 = vld [vmem:[#allocation2 + $0x1318] sm:$0xff]
    %v798 = vld [vmem:[#allocation2 + $0x1320] sm:$0xff]
    %v799 = vld [vmem:[#allocation2 + $0x1328] sm:$0xff]
    %v800 = vld [vmem:[#allocation2 + $0x1330] sm:$0xff]
    %v801 = vld [vmem:[#allocation2 + $0x1338] sm:$0xff]
    %v802 = vld [vmem:[#allocation2 + $0x1340] sm:$0xff]
    %v803 = vld [vmem:[#allocation2 + $0x1348] sm:$0xff]
    %v804 = vld [vmem:[#allocation2 + $0x1350] sm:$0xff]
    %v805 = vld [vmem:[#allocation2 + $0x1358] sm:$0xff]
    %v806 = vld [vmem:[#allocation2 + $0x1360] sm:$0xff]
    %v807 = vld [vmem:[#allocation2 + $0x1368] sm:$0xff]
    %v808 = vld [vmem:[#allocation2 + $0x1370] sm:$0xff]
    %v809 = vld [vmem:[#allocation2 + $0x1378] sm:$0xff]
    %v810 = vld [vmem:[#allocation2 + $0x1380] sm:$0xff]
    %v811 = vld [vmem:[#allocation2 + $0x1388] sm:$0xff]
    %v812 = vld [vmem:[#allocation2 + $0x1390] sm:$0xff]
    %v813 = vld [vmem:[#allocation2 + $0x1398] sm:$0xff]
    %v814 = vld [vmem:[#allocation2 + $0x13a0] sm:$0xff]
    %v815 = vld [vmem:[#allocation2 + $0x13a8] sm:$0xff]
    %v816 = vld [vmem:[#allocation2 + $0x13b0] sm:$0xff]
    %v817 = vld [vmem:[#allocation2 + $0x13b8] sm:$0xff]
    %v818 = vld [vmem:[#allocation2 + $0x13c0] sm:$0xff]
    %v819 = vld [vmem:[#allocation2 + $0x13c8] sm:$0xff]
    %v820 = vld [vmem:[#allocation2 + $0x13d0] sm:$0xff]
    %v821 = vld [vmem:[#allocation2 + $0x13d8] sm:$0xff]
    %v822 = vld [vmem:[#allocation2 + $0x13e0] sm:$0xff]
    %v823 = vld [vmem:[#allocation2 + $0x13e8] sm:$0xff]
    %v824 = vld [vmem:[#allocation2 + $0x13f0] sm:$0xff]
    %v825 = vld [vmem:[#allocation2 + $0x13f8] sm:$0xff]
    %v826 = vld [vmem:[#allocation2 + $0x1400] sm:$0xff]
    %v827 = vld [vmem:[#allocation2 + $0x1408] sm:$0xff]
    %v828 = vld [vmem:[#allocation2 + $0x1410] sm:$0xff]
    %v829 = vld [vmem:[#allocation2 + $0x1418] sm:$0xff]
    %v830 = vld [vmem:[#allocation2 + $0x1420] sm:$0xff]
    %v831 = vld [vmem:[#allocation2 + $0x1428] sm:$0xff]
    %v832 = vld [vmem:[#allocation2 + $0x1430] sm:$0xff]
    %v833 = vld [vmem:[#allocation2 + $0x1438] sm:$0xff]
    %v834 = vld [vmem:[#allocation2 + $0x1440] sm:$0xff]
    %v835 = vld [vmem:[#allocation2 + $0x1448] sm:$0xff]
    %v836 = vld [vmem:[#allocation2 + $0x1450] sm:$0xff]
    %v837 = vld [vmem:[#allocation2 + $0x1458] sm:$0xff]
    %v838 = vld [vmem:[#allocation2 + $0x1460] sm:$0xff]
    %v839 = vld [vmem:[#allocation2 + $0x1468] sm:$0xff]
    %v840 = vld [vmem:[#allocation2 + $0x1470] sm:$0xff]
    %v841 = vld [vmem:[#allocation2 + $0x1478] sm:$0xff]
    %v842 = vld [vmem:[#allocation2 + $0x1480] sm:$0xff]
    %v843 = vld [vmem:[#allocation2 + $0x1488] sm:$0xff]
    %v844 = vld [vmem:[#allocation2 + $0x1490] sm:$0xff]
    %v845 = vld [vmem:[#allocation2 + $0x1498] sm:$0xff]
    %v846 = vld [vmem:[#allocation2 + $0x14a0] sm:$0xff]
    %v847 = vld [vmem:[#allocation2 + $0x14a8] sm:$0xff]
    %v848 = vld [vmem:[#allocation2 + $0x14b0] sm:$0xff]
    %v849 = vld [vmem:[#allocation2 + $0x14b8] sm:$0xff]
    %v850 = vld [vmem:[#allocation2 + $0x14c0] sm:$0xff]
    %v851 = vld [vmem:[#allocation2 + $0x14c8] sm:$0xff]
    %v852 = vld [vmem:[#allocation2 + $0x14d0] sm:$0xff]
    %v853 = vld [vmem:[#allocation2 + $0x14d8] sm:$0xff]
    %v854 = vld [vmem:[#allocation2 + $0x14e0] sm:$0xff]
    %v855 = vld [vmem:[#allocation2 + $0x14e8] sm:$0xff]
    %v856 = vld [vmem:[#allocation2 + $0x14f0] sm:$0xff]
    %v857 = vld [vmem:[#allocation2 + $0x14f8] sm:$0xff]
    %v858 = vld [vmem:[#allocation2 + $0x1500] sm:$0xff]
    %v859 = vld [vmem:[#allocation2 + $0x1508] sm:$0xff]
    %v860 = vld [vmem:[#allocation2 + $0x1510] sm:$0xff]
    %v861 = vld [vmem:[#allocation2 + $0x1518] sm:$0xff]
    %v862 = vld [vmem:[#allocation2 + $0x1520] sm:$0xff]
    %v863 = vld [vmem:[#allocation2 + $0x1528] sm:$0xff]
    %v864 = vld [vmem:[#allocation2 + $0x1530] sm:$0xff]
    %v865 = vld [vmem:[#allocation2 + $0x1538] sm:$0xff]
    %v866 = vld [vmem:[#allocation2 + $0x1540] sm:$0xff]
    %v867 = vld [vmem:[#allocation2 + $0x1548] sm:$0xff]
    %v868 = vld [vmem:[#allocation2 + $0x1550] sm:$0xff]
    %v869 = vld [vmem:[#allocation2 + $0x1558] sm:$0xff]
    %v870 = vld [vmem:[#allocation2 + $0x1560] sm:$0xff]
    %v871 = vld [vmem:[#allocation2 + $0x1568] sm:$0xff]
    %v872 = vld [vmem:[#allocation2 + $0x1570] sm:$0xff]
    %v873 = vld [vmem:[#allocation2 + $0x1578] sm:$0xff]
    %v874 = vld [vmem:[#allocation2 + $0x1580] sm:$0xff]
    %v875 = vld [vmem:[#allocation2 + $0x1588] sm:$0xff]
    %v876 = vld [vmem:[#allocation2 + $0x1590] sm:$0xff]
    %v877 = vld [vmem:[#allocation2 + $0x1598] sm:$0xff]
    %v878 = vld [vmem:[#allocation2 + $0x15a0] sm:$0xff]
    %v879 = vld [vmem:[#allocation2 + $0x15a8] sm:$0xff]
    %v880 = vld [vmem:[#allocation2 + $0x15b0] sm:$0xff]
    %v881 = vld [vmem:[#allocation2 + $0x15b8] sm:$0xff]
    %v882 = vld [vmem:[#allocation2 + $0x15c0] sm:$0xff]
    %v883 = vld [vmem:[#allocation2 + $0x15c8] sm:$0xff]
    %v884 = vld [vmem:[#allocation2 + $0x15d0] sm:$0xff]
    %v885 = vld [vmem:[#allocation2 + $0x15d8] sm:$0xff]
    %v886 = vld [vmem:[#allocation2 + $0x15e0] sm:$0xff]
    %v887 = vld [vmem:[#allocation2 + $0x15e8] sm:$0xff]
    %v888 = vld [vmem:[#allocation2 + $0x15f0] sm:$0xff]
    %v889 = vld [vmem:[#allocation2 + $0x15f8] sm:$0xff]
    %v890 = vld [vmem:[#allocation2 + $0x1600] sm:$0xff]
    %v891 = vld [vmem:[#allocation2 + $0x1608] sm:$0xff]
    %v892 = vld [vmem:[#allocation2 + $0x1610] sm:$0xff]
    %v893 = vld [vmem:[#allocation2 + $0x1618] sm:$0xff]
    %v894 = vld [vmem:[#allocation2 + $0x1620] sm:$0xff]
    %v895 = vld [vmem:[#allocation2 + $0x1628] sm:$0xff]
    %v896 = vld [vmem:[#allocation2 + $0x1630] sm:$0xff]
    %v897 = vld [vmem:[#allocation2 + $0x1638] sm:$0xff]
    %v898 = vld [vmem:[#allocation2 + $0x1640] sm:$0xff]
    %v899 = vld [vmem:[#allocation2 + $0x1648] sm:$0xff]
    %v900 = vld [vmem:[#allocation2 + $0x1650] sm:$0xff]
    %v901 = vld [vmem:[#allocation2 + $0x1658] sm:$0xff]
    %v902 = vld [vmem:[#allocation2 + $0x1660] sm:$0xff]
    %v903 = vld [vmem:[#allocation2 + $0x1668] sm:$0xff]
    %v904 = vld [vmem:[#allocation2 + $0x1670] sm:$0xff]
    %v905 = vld [vmem:[#allocation2 + $0x1678] sm:$0xff]
    %v906 = vld [vmem:[#allocation2 + $0x1680] sm:$0xff]
    %v907 = vld [vmem:[#allocation2 + $0x1688] sm:$0xff]
    %v908 = vld [vmem:[#allocation2 + $0x1690] sm:$0xff]
    %v909 = vld [vmem:[#allocation2 + $0x1698] sm:$0xff]
    %v910 = vld [vmem:[#allocation2 + $0x16a0] sm:$0xff]
    %v911 = vld [vmem:[#allocation2 + $0x16a8] sm:$0xff]
    %v912 = vld [vmem:[#allocation2 + $0x16b0] sm:$0xff]
    %v913 = vld [vmem:[#allocation2 + $0x16b8] sm:$0xff]
    %v914 = vld [vmem:[#allocation2 + $0x16c0] sm:$0xff]
    %v915 = vld [vmem:[#allocation2 + $0x16c8] sm:$0xff]
    %v916 = vld [vmem:[#allocation2 + $0x16d0] sm:$0xff]
    %v917 = vld [vmem:[#allocation2 + $0x16d8] sm:$0xff]
    %v918 = vld [vmem:[#allocation2 + $0x16e0] sm:$0xff]
    %v919 = vld [vmem:[#allocation2 + $0x16e8] sm:$0xff]
    %v920 = vld [vmem:[#allocation2 + $0x16f0] sm:$0xff]
    %v921 = vld [vmem:[#allocation2 + $0x16f8] sm:$0xff]
    %v922 = vld [vmem:[#allocation2 + $0x1700] sm:$0xff]
    %v923 = vld [vmem:[#allocation2 + $0x1708] sm:$0xff]
    %v924 = vld [vmem:[#allocation2 + $0x1710] sm:$0xff]
    %v925 = vld [vmem:[#allocation2 + $0x1718] sm:$0xff]
    %v926 = vld [vmem:[#allocation2 + $0x1720] sm:$0xff]
    %v927 = vld [vmem:[#allocation2 + $0x1728] sm:$0xff]
    %v928 = vld [vmem:[#allocation2 + $0x1730] sm:$0xff]
    %v929 = vld [vmem:[#allocation2 + $0x1738] sm:$0xff]
    %v930 = vld [vmem:[#allocation2 + $0x1740] sm:$0xff]
    %v931 = vld [vmem:[#allocation2 + $0x1748] sm:$0xff]
    %v932 = vld [vmem:[#allocation2 + $0x1750] sm:$0xff]
    %v933 = vld [vmem:[#allocation2 + $0x1758] sm:$0xff]
    %v934 = vld [vmem:[#allocation2 + $0x1760] sm:$0xff]
    %v935 = vld [vmem:[#allocation2 + $0x1768] sm:$0xff]
    %v936 = vld [vmem:[#allocation2 + $0x1770] sm:$0xff]
    %v937 = vld [vmem:[#allocation2 + $0x1778] sm:$0xff]
    %v938 = vld [vmem:[#allocation2 + $0x1780] sm:$0xff]
    %v939 = vld [vmem:[#allocation2 + $0x1788] sm:$0xff]
    %v940 = vld [vmem:[#allocation2 + $0x1790] sm:$0xff]
    %v941 = vld [vmem:[#allocation2 + $0x1798] sm:$0xff]
    %v942 = vld [vmem:[#allocation2 + $0x17a0] sm:$0xff]
    %v943 = vld [vmem:[#allocation2 + $0x17a8] sm:$0xff]
    %v944 = vld [vmem:[#allocation2 + $0x17b0] sm:$0xff]
    %v945 = vld [vmem:[#allocation2 + $0x17b8] sm:$0xff]
    %v946 = vld [vmem:[#allocation2 + $0x17c0] sm:$0xff]
    %v947 = vld [vmem:[#allocation2 + $0x17c8] sm:$0xff]
    %v948 = vld [vmem:[#allocation2 + $0x17d0] sm:$0xff]
    %v949 = vld [vmem:[#allocation2 + $0x17d8] sm:$0xff]
    %v950 = vld [vmem:[#allocation2 + $0x17e0] sm:$0xff]
    %v951 = vld [vmem:[#allocation2 + $0x17e8] sm:$0xff]
    %v952 = vld [vmem:[#allocation2 + $0x17f0] sm:$0xff]
    %v953 = vld [vmem:[#allocation2 + $0x17f8] sm:$0xff]
    %v954 = vld [vmem:[#allocation4] sm:$0xf]
    %v956 = vperm.slane %v954, 0
    %v957 = vperm.slane %v954, 1
    %v958 = vperm.slane %v954, 2
    %v959 = vperm.slane %v954, 3
    %v1732 = vunpack.c.l.b16 %v186
    %v1733 = vunpack.c.h.b16 %v186
    %v1734 = vunpack.c.l.b16 %v187
    %v1735 = vunpack.c.h.b16 %v187
    %v1736 = vunpack.c.l.b16 %v188
    %v1737 = vunpack.c.h.b16 %v188
    %v1738 = vunpack.c.l.b16 %v189
    %v1739 = vunpack.c.h.b16 %v189
    %v1740 = vunpack.c.l.b16 %v190
    %v1741 = vunpack.c.h.b16 %v190
    %v1742 = vunpack.c.l.b16 %v191
    %v1743 = vunpack.c.h.b16 %v191
    %v1744 = vunpack.c.l.b16 %v192
    %v1745 = vunpack.c.h.b16 %v192
    %v1746 = vunpack.c.l.b16 %v193
    %v1747 = vunpack.c.h.b16 %v193
    %v1748 = vunpack.c.l.b16 %v194
    %v1749 = vunpack.c.h.b16 %v194
    %v1750 = vunpack.c.l.b16 %v195
    %v1751 = vunpack.c.h.b16 %v195
    %v1752 = vunpack.c.l.b16 %v196
    %v1753 = vunpack.c.h.b16 %v196
    %v1754 = vunpack.c.l.b16 %v197
    %v1755 = vunpack.c.h.b16 %v197
    %v1756 = vunpack.c.l.b16 %v198
    %v1757 = vunpack.c.h.b16 %v198
    %v1758 = vunpack.c.l.b16 %v199
    %v1759 = vunpack.c.h.b16 %v199
    %v1760 = vunpack.c.l.b16 %v200
    %v1761 = vunpack.c.h.b16 %v200
    %v1762 = vunpack.c.l.b16 %v201
    %v1763 = vunpack.c.h.b16 %v201
    %v1764 = vunpack.c.l.b16 %v202
    %v1765 = vunpack.c.h.b16 %v202
    %v1766 = vunpack.c.l.b16 %v203
    %v1767 = vunpack.c.h.b16 %v203
    %v1768 = vunpack.c.l.b16 %v204
    %v1769 = vunpack.c.h.b16 %v204
    %v1770 = vunpack.c.l.b16 %v205
    %v1771 = vunpack.c.h.b16 %v205
    %v1772 = vunpack.c.l.b16 %v206
    %v1773 = vunpack.c.h.b16 %v206
    %v1774 = vunpack.c.l.b16 %v207
    %v1775 = vunpack.c.h.b16 %v207
    %v1776 = vunpack.c.l.b16 %v208
    %v1777 = vunpack.c.h.b16 %v208
    %v1778 = vunpack.c.l.b16 %v209
    %v1779 = vunpack.c.h.b16 %v209
    %v1780 = vunpack.c.l.b16 %v210
    %v1781 = vunpack.c.h.b16 %v210
    %v1782 = vunpack.c.l.b16 %v211
    %v1783 = vunpack.c.h.b16 %v211
    %v1784 = vunpack.c.l.b16 %v212
    %v1785 = vunpack.c.h.b16 %v212
    %v1786 = vunpack.c.l.b16 %v213
    %v1787 = vunpack.c.h.b16 %v213
    %v1788 = vunpack.c.l.b16 %v214
    %v1789 = vunpack.c.h.b16 %v214
    %v1790 = vunpack.c.l.b16 %v215
    %v1791 = vunpack.c.h.b16 %v215
    %v1792 = vunpack.c.l.b16 %v216
    %v1793 = vunpack.c.h.b16 %v216
    %v1794 = vunpack.c.l.b16 %v217
    %v1795 = vunpack.c.h.b16 %v217
    %v1796 = vunpack.c.l.b16 %v218
    %v1797 = vunpack.c.h.b16 %v218
    %v1798 = vunpack.c.l.b16 %v219
    %v1799 = vunpack.c.h.b16 %v219
    %v1800 = vunpack.c.l.b16 %v220
    %v1801 = vunpack.c.h.b16 %v220
    %v1802 = vunpack.c.l.b16 %v221
    %v1803 = vunpack.c.h.b16 %v221
    %v1804 = vunpack.c.l.b16 %v222
    %v1805 = vunpack.c.h.b16 %v222
    %v1806 = vunpack.c.l.b16 %v223
    %v1807 = vunpack.c.h.b16 %v223
    %v1808 = vunpack.c.l.b16 %v224
    %v1809 = vunpack.c.h.b16 %v224
    %v1810 = vunpack.c.l.b16 %v225
    %v1811 = vunpack.c.h.b16 %v225
    %v1812 = vunpack.c.l.b16 %v226
    %v1813 = vunpack.c.h.b16 %v226
    %v1814 = vunpack.c.l.b16 %v227
    %v1815 = vunpack.c.h.b16 %v227
    %v1816 = vunpack.c.l.b16 %v228
    %v1817 = vunpack.c.h.b16 %v228
    %v1818 = vunpack.c.l.b16 %v229
    %v1819 = vunpack.c.h.b16 %v229
    %v1820 = vunpack.c.l.b16 %v230
    %v1821 = vunpack.c.h.b16 %v230
    %v1822 = vunpack.c.l.b16 %v231
    %v1823 = vunpack.c.h.b16 %v231
    %v1824 = vunpack.c.l.b16 %v232
    %v1825 = vunpack.c.h.b16 %v232
    %v1826 = vunpack.c.l.b16 %v233
    %v1827 = vunpack.c.h.b16 %v233
    %v1828 = vunpack.c.l.b16 %v234
    %v1829 = vunpack.c.h.b16 %v234
    %v1830 = vunpack.c.l.b16 %v235
    %v1831 = vunpack.c.h.b16 %v235
    %v1832 = vunpack.c.l.b16 %v236
    %v1833 = vunpack.c.h.b16 %v236
    %v1834 = vunpack.c.l.b16 %v237
    %v1835 = vunpack.c.h.b16 %v237
    %v1836 = vunpack.c.l.b16 %v238
    %v1837 = vunpack.c.h.b16 %v238
    %v1838 = vunpack.c.l.b16 %v239
    %v1839 = vunpack.c.h.b16 %v239
    %v1840 = vunpack.c.l.b16 %v240
    %v1841 = vunpack.c.h.b16 %v240
    %v1842 = vunpack.c.l.b16 %v241
    %v1843 = vunpack.c.h.b16 %v241
    %v1844 = vunpack.c.l.b16 %v242
    %v1845 = vunpack.c.h.b16 %v242
    %v1846 = vunpack.c.l.b16 %v243
    %v1847 = vunpack.c.h.b16 %v243
    %v1848 = vunpack.c.l.b16 %v244
    %v1849 = vunpack.c.h.b16 %v244
    %v1850 = vunpack.c.l.b16 %v245
    %v1851 = vunpack.c.h.b16 %v245
    %v1852 = vunpack.c.l.b16 %v246
    %v1853 = vunpack.c.h.b16 %v246
    %v1854 = vunpack.c.l.b16 %v247
    %v1855 = vunpack.c.h.b16 %v247
    %v1856 = vunpack.c.l.b16 %v248
    %v1857 = vunpack.c.h.b16 %v248
    %v1858 = vunpack.c.l.b16 %v249
    %v1859 = vunpack.c.h.b16 %v249
    %v1860 = vunpack.c.l.b16 %v250
    %v1861 = vunpack.c.h.b16 %v250
    %v1862 = vunpack.c.l.b16 %v251
    %v1863 = vunpack.c.h.b16 %v251
    %v1864 = vunpack.c.l.b16 %v252
    %v1865 = vunpack.c.h.b16 %v252
    %v1866 = vunpack.c.l.b16 %v253
    %v1867 = vunpack.c.h.b16 %v253
    %v1868 = vunpack.c.l.b16 %v254
    %v1869 = vunpack.c.h.b16 %v254
    %v1870 = vunpack.c.l.b16 %v255
    %v1871 = vunpack.c.h.b16 %v255
    %v1872 = vunpack.c.l.b16 %v256
    %v1873 = vunpack.c.h.b16 %v256
    %v1874 = vunpack.c.l.b16 %v257
    %v1875 = vunpack.c.h.b16 %v257
    %v1876 = vunpack.c.l.b16 %v258
    %v1877 = vunpack.c.h.b16 %v258
    %v1878 = vunpack.c.l.b16 %v259
    %v1879 = vunpack.c.h.b16 %v259
    %v1880 = vunpack.c.l.b16 %v260
    %v1881 = vunpack.c.h.b16 %v260
    %v1882 = vunpack.c.l.b16 %v261
    %v1883 = vunpack.c.h.b16 %v261
    %v1884 = vunpack.c.l.b16 %v262
    %v1885 = vunpack.c.h.b16 %v262
    %v1886 = vunpack.c.l.b16 %v263
    %v1887 = vunpack.c.h.b16 %v263
    %v1888 = vunpack.c.l.b16 %v264
    %v1889 = vunpack.c.h.b16 %v264
    %v1890 = vunpack.c.l.b16 %v265
    %v1891 = vunpack.c.h.b16 %v265
    %v1892 = vunpack.c.l.b16 %v266
    %v1893 = vunpack.c.h.b16 %v266
    %v1894 = vunpack.c.l.b16 %v267
    %v1895 = vunpack.c.h.b16 %v267
    %v1896 = vunpack.c.l.b16 %v268
    %v1897 = vunpack.c.h.b16 %v268
    %v1898 = vunpack.c.l.b16 %v269
    %v1899 = vunpack.c.h.b16 %v269
    %v1900 = vunpack.c.l.b16 %v270
    %v1901 = vunpack.c.h.b16 %v270
    %v1902 = vunpack.c.l.b16 %v271
    %v1903 = vunpack.c.h.b16 %v271
    %v1904 = vunpack.c.l.b16 %v272
    %v1905 = vunpack.c.h.b16 %v272
    %v1906 = vunpack.c.l.b16 %v273
    %v1907 = vunpack.c.h.b16 %v273
    %v1908 = vunpack.c.l.b16 %v274
    %v1909 = vunpack.c.h.b16 %v274
    %v1910 = vunpack.c.l.b16 %v275
    %v1911 = vunpack.c.h.b16 %v275
    %v1912 = vunpack.c.l.b16 %v276
    %v1913 = vunpack.c.h.b16 %v276
    %v1914 = vunpack.c.l.b16 %v277
    %v1915 = vunpack.c.h.b16 %v277
    %v1916 = vunpack.c.l.b16 %v278
    %v1917 = vunpack.c.h.b16 %v278
    %v1918 = vunpack.c.l.b16 %v279
    %v1919 = vunpack.c.h.b16 %v279
    %v1920 = vunpack.c.l.b16 %v280
    %v1921 = vunpack.c.h.b16 %v280
    %v1922 = vunpack.c.l.b16 %v281
    %v1923 = vunpack.c.h.b16 %v281
    %v1924 = vunpack.c.l.b16 %v282
    %v1925 = vunpack.c.h.b16 %v282
    %v1926 = vunpack.c.l.b16 %v283
    %v1927 = vunpack.c.h.b16 %v283
    %v1928 = vunpack.c.l.b16 %v284
    %v1929 = vunpack.c.h.b16 %v284
    %v1930 = vunpack.c.l.b16 %v285
    %v1931 = vunpack.c.h.b16 %v285
    %v1932 = vunpack.c.l.b16 %v286
    %v1933 = vunpack.c.h.b16 %v286
    %v1934 = vunpack.c.l.b16 %v287
    %v1935 = vunpack.c.h.b16 %v287
    %v1936 = vunpack.c.l.b16 %v288
    %v1937 = vunpack.c.h.b16 %v288
    %v1938 = vunpack.c.l.b16 %v289
    %v1939 = vunpack.c.h.b16 %v289
    %v1940 = vunpack.c.l.b16 %v290
    %v1941 = vunpack.c.h.b16 %v290
    %v1942 = vunpack.c.l.b16 %v291
    %v1943 = vunpack.c.h.b16 %v291
    %v1944 = vunpack.c.l.b16 %v292
    %v1945 = vunpack.c.h.b16 %v292
    %v1946 = vunpack.c.l.b16 %v293
    %v1947 = vunpack.c.h.b16 %v293
    %v1948 = vunpack.c.l.b16 %v294
    %v1949 = vunpack.c.h.b16 %v294
    %v1950 = vunpack.c.l.b16 %v295
    %v1951 = vunpack.c.h.b16 %v295
    %v1952 = vunpack.c.l.b16 %v296
    %v1953 = vunpack.c.h.b16 %v296
    %v1954 = vunpack.c.l.b16 %v297
    %v1955 = vunpack.c.h.b16 %v297
    %v1956 = vunpack.c.l.b16 %v298
    %v1957 = vunpack.c.h.b16 %v298
    %v1958 = vunpack.c.l.b16 %v299
    %v1959 = vunpack.c.h.b16 %v299
    %v1960 = vunpack.c.l.b16 %v300
    %v1961 = vunpack.c.h.b16 %v300
    %v1962 = vunpack.c.l.b16 %v301
    %v1963 = vunpack.c.h.b16 %v301
    %v1964 = vunpack.c.l.b16 %v302
    %v1965 = vunpack.c.h.b16 %v302
    %v1966 = vunpack.c.l.b16 %v303
    %v1967 = vunpack.c.h.b16 %v303
    %v1968 = vunpack.c.l.b16 %v304
    %v1969 = vunpack.c.h.b16 %v304
    %v1970 = vunpack.c.l.b16 %v305
    %v1971 = vunpack.c.h.b16 %v305
    %v1972 = vunpack.c.l.b16 %v306
    %v1973 = vunpack.c.h.b16 %v306
    %v1974 = vunpack.c.l.b16 %v307
    %v1975 = vunpack.c.h.b16 %v307
    %v1976 = vunpack.c.l.b16 %v308
    %v1977 = vunpack.c.h.b16 %v308
    %v1978 = vunpack.c.l.b16 %v309
    %v1979 = vunpack.c.h.b16 %v309
    %v1980 = vunpack.c.l.b16 %v310
    %v1981 = vunpack.c.h.b16 %v310
    %v1982 = vunpack.c.l.b16 %v311
    %v1983 = vunpack.c.h.b16 %v311
    %v1984 = vunpack.c.l.b16 %v312
    %v1985 = vunpack.c.h.b16 %v312
    %v1986 = vunpack.c.l.b16 %v313
    %v1987 = vunpack.c.h.b16 %v313
    %v1988 = vunpack.c.l.b16 %v314
    %v1989 = vunpack.c.h.b16 %v314
    %v1990 = vunpack.c.l.b16 %v315
    %v1991 = vunpack.c.h.b16 %v315
    %v1992 = vunpack.c.l.b16 %v316
    %v1993 = vunpack.c.h.b16 %v316
    %v1994 = vunpack.c.l.b16 %v317
    %v1995 = vunpack.c.h.b16 %v317
    %v1996 = vunpack.c.l.b16 %v318
    %v1997 = vunpack.c.h.b16 %v318
    %v1998 = vunpack.c.l.b16 %v319
    %v1999 = vunpack.c.h.b16 %v319
    %v2000 = vunpack.c.l.b16 %v320
    %v2001 = vunpack.c.h.b16 %v320
    %v2002 = vunpack.c.l.b16 %v321
    %v2003 = vunpack.c.h.b16 %v321
    %v2004 = vunpack.c.l.b16 %v322
    %v2005 = vunpack.c.h.b16 %v322
    %v2006 = vunpack.c.l.b16 %v323
    %v2007 = vunpack.c.h.b16 %v323
    %v2008 = vunpack.c.l.b16 %v324
    %v2009 = vunpack.c.h.b16 %v324
    %v2010 = vunpack.c.l.b16 %v325
    %v2011 = vunpack.c.h.b16 %v325
    %v2012 = vunpack.c.l.b16 %v326
    %v2013 = vunpack.c.h.b16 %v326
    %v2014 = vunpack.c.l.b16 %v327
    %v2015 = vunpack.c.h.b16 %v327
    %v2016 = vunpack.c.l.b16 %v328
    %v2017 = vunpack.c.h.b16 %v328
    %v2018 = vunpack.c.l.b16 %v329
    %v2019 = vunpack.c.h.b16 %v329
    %v2020 = vunpack.c.l.b16 %v330
    %v2021 = vunpack.c.h.b16 %v330
    %v2022 = vunpack.c.l.b16 %v331
    %v2023 = vunpack.c.h.b16 %v331
    %v2024 = vunpack.c.l.b16 %v332
    %v2025 = vunpack.c.h.b16 %v332
    %v2026 = vunpack.c.l.b16 %v333
    %v2027 = vunpack.c.h.b16 %v333
    %v2028 = vunpack.c.l.b16 %v334
    %v2029 = vunpack.c.h.b16 %v334
    %v2030 = vunpack.c.l.b16 %v335
    %v2031 = vunpack.c.h.b16 %v335
    %v2032 = vunpack.c.l.b16 %v336
    %v2033 = vunpack.c.h.b16 %v336
    %v2034 = vunpack.c.l.b16 %v337
    %v2035 = vunpack.c.h.b16 %v337
    %v2036 = vunpack.c.l.b16 %v338
    %v2037 = vunpack.c.h.b16 %v338
    %v2038 = vunpack.c.l.b16 %v339
    %v2039 = vunpack.c.h.b16 %v339
    %v2040 = vunpack.c.l.b16 %v340
    %v2041 = vunpack.c.h.b16 %v340
    %v2042 = vunpack.c.l.b16 %v341
    %v2043 = vunpack.c.h.b16 %v341
    %v2044 = vunpack.c.l.b16 %v342
    %v2045 = vunpack.c.h.b16 %v342
    %v2046 = vunpack.c.l.b16 %v343
    %v2047 = vunpack.c.h.b16 %v343
    %v2048 = vunpack.c.l.b16 %v344
    %v2049 = vunpack.c.h.b16 %v344
    %v2050 = vunpack.c.l.b16 %v345
    %v2051 = vunpack.c.h.b16 %v345
    %v2052 = vunpack.c.l.b16 %v346
    %v2053 = vunpack.c.h.b16 %v346
    %v2054 = vunpack.c.l.b16 %v347
    %v2055 = vunpack.c.h.b16 %v347
    %v2056 = vunpack.c.l.b16 %v348
    %v2057 = vunpack.c.h.b16 %v348
    %v2058 = vunpack.c.l.b16 %v349
    %v2059 = vunpack.c.h.b16 %v349
    %v2060 = vunpack.c.l.b16 %v350
    %v2061 = vunpack.c.h.b16 %v350
    %v2062 = vunpack.c.l.b16 %v351
    %v2063 = vunpack.c.h.b16 %v351
    %v2064 = vunpack.c.l.b16 %v352
    %v2065 = vunpack.c.h.b16 %v352
    %v2066 = vunpack.c.l.b16 %v353
    %v2067 = vunpack.c.h.b16 %v353
    %v2068 = vunpack.c.l.b16 %v354
    %v2069 = vunpack.c.h.b16 %v354
    %v2070 = vunpack.c.l.b16 %v355
    %v2071 = vunpack.c.h.b16 %v355
    %v2072 = vunpack.c.l.b16 %v356
    %v2073 = vunpack.c.h.b16 %v356
    %v2074 = vunpack.c.l.b16 %v357
    %v2075 = vunpack.c.h.b16 %v357
    %v2076 = vunpack.c.l.b16 %v358
    %v2077 = vunpack.c.h.b16 %v358
    %v2078 = vunpack.c.l.b16 %v359
    %v2079 = vunpack.c.h.b16 %v359
    %v2080 = vunpack.c.l.b16 %v360
    %v2081 = vunpack.c.h.b16 %v360
    %v2082 = vunpack.c.l.b16 %v361
    %v2083 = vunpack.c.h.b16 %v361
    %v2084 = vunpack.c.l.b16 %v362
    %v2085 = vunpack.c.h.b16 %v362
    %v2086 = vunpack.c.l.b16 %v363
    %v2087 = vunpack.c.h.b16 %v363
    %v2088 = vunpack.c.l.b16 %v364
    %v2089 = vunpack.c.h.b16 %v364
    %v2090 = vunpack.c.l.b16 %v365
    %v2091 = vunpack.c.h.b16 %v365
    %v2092 = vunpack.c.l.b16 %v366
    %v2093 = vunpack.c.h.b16 %v366
    %v2094 = vunpack.c.l.b16 %v367
    %v2095 = vunpack.c.h.b16 %v367
    %v2096 = vunpack.c.l.b16 %v368
    %v2097 = vunpack.c.h.b16 %v368
    %v2098 = vunpack.c.l.b16 %v369
    %v2099 = vunpack.c.h.b16 %v369
    %v2100 = vunpack.c.l.b16 %v370
    %v2101 = vunpack.c.h.b16 %v370
    %v2102 = vunpack.c.l.b16 %v371
    %v2103 = vunpack.c.h.b16 %v371
    %v2104 = vunpack.c.l.b16 %v372
    %v2105 = vunpack.c.h.b16 %v372
    %v2106 = vunpack.c.l.b16 %v373
    %v2107 = vunpack.c.h.b16 %v373
    %v2108 = vunpack.c.l.b16 %v374
    %v2109 = vunpack.c.h.b16 %v374
    %v2110 = vunpack.c.l.b16 %v375
    %v2111 = vunpack.c.h.b16 %v375
    %v2112 = vunpack.c.l.b16 %v376
    %v2113 = vunpack.c.h.b16 %v376
    %v2114 = vunpack.c.l.b16 %v377
    %v2115 = vunpack.c.h.b16 %v377
    %v2116 = vunpack.c.l.b16 %v378
    %v2117 = vunpack.c.h.b16 %v378
    %v2118 = vunpack.c.l.b16 %v379
    %v2119 = vunpack.c.h.b16 %v379
    %v2120 = vunpack.c.l.b16 %v380
    %v2121 = vunpack.c.h.b16 %v380
    %v2122 = vunpack.c.l.b16 %v381
    %v2123 = vunpack.c.h.b16 %v381
    %v2124 = vunpack.c.l.b16 %v382
    %v2125 = vunpack.c.h.b16 %v382
    %v2126 = vunpack.c.l.b16 %v383
    %v2127 = vunpack.c.h.b16 %v383
    %v2128 = vunpack.c.l.b16 %v384
    %v2129 = vunpack.c.h.b16 %v384
    %v2130 = vunpack.c.l.b16 %v385
    %v2131 = vunpack.c.h.b16 %v385
    %v2132 = vunpack.c.l.b16 %v386
    %v2133 = vunpack.c.h.b16 %v386
    %v2134 = vunpack.c.l.b16 %v387
    %v2135 = vunpack.c.h.b16 %v387
    %v2136 = vunpack.c.l.b16 %v388
    %v2137 = vunpack.c.h.b16 %v388
    %v2138 = vunpack.c.l.b16 %v389
    %v2139 = vunpack.c.h.b16 %v389
    %v2140 = vunpack.c.l.b16 %v390
    %v2141 = vunpack.c.h.b16 %v390
    %v2142 = vunpack.c.l.b16 %v391
    %v2143 = vunpack.c.h.b16 %v391
    %v2144 = vunpack.c.l.b16 %v392
    %v2145 = vunpack.c.h.b16 %v392
    %v2146 = vunpack.c.l.b16 %v393
    %v2147 = vunpack.c.h.b16 %v393
    %v2148 = vunpack.c.l.b16 %v394
    %v2149 = vunpack.c.h.b16 %v394
    %v2150 = vunpack.c.l.b16 %v395
    %v2151 = vunpack.c.h.b16 %v395
    %v2152 = vunpack.c.l.b16 %v396
    %v2153 = vunpack.c.h.b16 %v396
    %v2154 = vunpack.c.l.b16 %v397
    %v2155 = vunpack.c.h.b16 %v397
    %v2156 = vunpack.c.l.b16 %v398
    %v2157 = vunpack.c.h.b16 %v398
    %v2158 = vunpack.c.l.b16 %v399
    %v2159 = vunpack.c.h.b16 %v399
    %v2160 = vunpack.c.l.b16 %v400
    %v2161 = vunpack.c.h.b16 %v400
    %v2162 = vunpack.c.l.b16 %v401
    %v2163 = vunpack.c.h.b16 %v401
    %v2164 = vunpack.c.l.b16 %v402
    %v2165 = vunpack.c.h.b16 %v402
    %v2166 = vunpack.c.l.b16 %v403
    %v2167 = vunpack.c.h.b16 %v403
    %v2168 = vunpack.c.l.b16 %v404
    %v2169 = vunpack.c.h.b16 %v404
    %v2170 = vunpack.c.l.b16 %v405
    %v2171 = vunpack.c.h.b16 %v405
    %v2172 = vunpack.c.l.b16 %v406
    %v2173 = vunpack.c.h.b16 %v406
    %v2174 = vunpack.c.l.b16 %v407
    %v2175 = vunpack.c.h.b16 %v407
    %v2176 = vunpack.c.l.b16 %v408
    %v2177 = vunpack.c.h.b16 %v408
    %v2178 = vunpack.c.l.b16 %v409
    %v2179 = vunpack.c.h.b16 %v409
    %v2180 = vunpack.c.l.b16 %v410
    %v2181 = vunpack.c.h.b16 %v410
    %v2182 = vunpack.c.l.b16 %v411
    %v2183 = vunpack.c.h.b16 %v411
    %v2184 = vunpack.c.l.b16 %v412
    %v2185 = vunpack.c.h.b16 %v412
    %v2186 = vunpack.c.l.b16 %v413
    %v2187 = vunpack.c.h.b16 %v413
    %v2188 = vunpack.c.l.b16 %v414
    %v2189 = vunpack.c.h.b16 %v414
    %v2190 = vunpack.c.l.b16 %v415
    %v2191 = vunpack.c.h.b16 %v415
    %v2192 = vunpack.c.l.b16 %v416
    %v2193 = vunpack.c.h.b16 %v416
    %v2194 = vunpack.c.l.b16 %v417
    %v2195 = vunpack.c.h.b16 %v417
    %v2196 = vunpack.c.l.b16 %v418
    %v2197 = vunpack.c.h.b16 %v418
    %v2198 = vunpack.c.l.b16 %v419
    %v2199 = vunpack.c.h.b16 %v419
    %v2200 = vunpack.c.l.b16 %v420
    %v2201 = vunpack.c.h.b16 %v420
    %v2202 = vunpack.c.l.b16 %v421
    %v2203 = vunpack.c.h.b16 %v421
    %v2204 = vunpack.c.l.b16 %v422
    %v2205 = vunpack.c.h.b16 %v422
    %v2206 = vunpack.c.l.b16 %v423
    %v2207 = vunpack.c.h.b16 %v423
    %v2208 = vunpack.c.l.b16 %v424
    %v2209 = vunpack.c.h.b16 %v424
    %v2210 = vunpack.c.l.b16 %v425
    %v2211 = vunpack.c.h.b16 %v425
    %v2212 = vunpack.c.l.b16 %v426
    %v2213 = vunpack.c.h.b16 %v426
    %v2214 = vunpack.c.l.b16 %v427
    %v2215 = vunpack.c.h.b16 %v427
    %v2216 = vunpack.c.l.b16 %v428
    %v2217 = vunpack.c.h.b16 %v428
    %v2218 = vunpack.c.l.b16 %v429
    %v2219 = vunpack.c.h.b16 %v429
    %v2220 = vunpack.c.l.b16 %v430
    %v2221 = vunpack.c.h.b16 %v430
    %v2222 = vunpack.c.l.b16 %v431
    %v2223 = vunpack.c.h.b16 %v431
    %v2224 = vunpack.c.l.b16 %v432
    %v2225 = vunpack.c.h.b16 %v432
    %v2226 = vunpack.c.l.b16 %v433
    %v2227 = vunpack.c.h.b16 %v433
    %v2228 = vunpack.c.l.b16 %v434
    %v2229 = vunpack.c.h.b16 %v434
    %v2230 = vunpack.c.l.b16 %v435
    %v2231 = vunpack.c.h.b16 %v435
    %v2232 = vunpack.c.l.b16 %v436
    %v2233 = vunpack.c.h.b16 %v436
    %v2234 = vunpack.c.l.b16 %v437
    %v2235 = vunpack.c.h.b16 %v437
    %v2236 = vunpack.c.l.b16 %v438
    %v2237 = vunpack.c.h.b16 %v438
    %v2238 = vunpack.c.l.b16 %v439
    %v2239 = vunpack.c.h.b16 %v439
    %v2240 = vunpack.c.l.b16 %v440
    %v2241 = vunpack.c.h.b16 %v440
    %v2242 = vunpack.c.l.b16 %v441
    %v2243 = vunpack.c.h.b16 %v441
    %v2244 = vunpack.c.l.b16 %v442
    %v2245 = vunpack.c.h.b16 %v442
    %v2246 = vunpack.c.l.b16 %v443
    %v2247 = vunpack.c.h.b16 %v443
    %v2248 = vunpack.c.l.b16 %v444
    %v2249 = vunpack.c.h.b16 %v444
    %v2250 = vunpack.c.l.b16 %v445
    %v2251 = vunpack.c.h.b16 %v445
    %v2252 = vunpack.c.l.b16 %v446
    %v2253 = vunpack.c.h.b16 %v446
    %v2254 = vunpack.c.l.b16 %v447
    %v2255 = vunpack.c.h.b16 %v447
    %v2256 = vunpack.c.l.b16 %v448
    %v2257 = vunpack.c.h.b16 %v448
    %v2258 = vunpack.c.l.b16 %v449
    %v2259 = vunpack.c.h.b16 %v449
    %v2260 = vunpack.c.l.b16 %v450
    %v2261 = vunpack.c.h.b16 %v450
    %v2262 = vunpack.c.l.b16 %v451
    %v2263 = vunpack.c.h.b16 %v451
    %v2264 = vunpack.c.l.b16 %v452
    %v2265 = vunpack.c.h.b16 %v452
    %v2266 = vunpack.c.l.b16 %v453
    %v2267 = vunpack.c.h.b16 %v453
    %v2268 = vunpack.c.l.b16 %v454
    %v2269 = vunpack.c.h.b16 %v454
    %v2270 = vunpack.c.l.b16 %v455
    %v2271 = vunpack.c.h.b16 %v455
    %v2272 = vunpack.c.l.b16 %v456
    %v2273 = vunpack.c.h.b16 %v456
    %v2274 = vunpack.c.l.b16 %v457
    %v2275 = vunpack.c.h.b16 %v457
    %v2276 = vunpack.c.l.b16 %v458
    %v2277 = vunpack.c.h.b16 %v458
    %v2278 = vunpack.c.l.b16 %v459
    %v2279 = vunpack.c.h.b16 %v459
    %v2280 = vunpack.c.l.b16 %v460
    %v2281 = vunpack.c.h.b16 %v460
    %v2282 = vunpack.c.l.b16 %v461
    %v2283 = vunpack.c.h.b16 %v461
    %v2284 = vunpack.c.l.b16 %v462
    %v2285 = vunpack.c.h.b16 %v462
    %v2286 = vunpack.c.l.b16 %v463
    %v2287 = vunpack.c.h.b16 %v463
    %v2288 = vunpack.c.l.b16 %v464
    %v2289 = vunpack.c.h.b16 %v464
    %v2290 = vunpack.c.l.b16 %v465
    %v2291 = vunpack.c.h.b16 %v465
    %v2292 = vunpack.c.l.b16 %v466
    %v2293 = vunpack.c.h.b16 %v466
    %v2294 = vunpack.c.l.b16 %v467
    %v2295 = vunpack.c.h.b16 %v467
    %v2296 = vunpack.c.l.b16 %v468
    %v2297 = vunpack.c.h.b16 %v468
    %v2298 = vunpack.c.l.b16 %v469
    %v2299 = vunpack.c.h.b16 %v469
    %v2300 = vunpack.c.l.b16 %v470
    %v2301 = vunpack.c.h.b16 %v470
    %v2302 = vunpack.c.l.b16 %v471
    %v2303 = vunpack.c.h.b16 %v471
    %v2304 = vunpack.c.l.b16 %v472
    %v2305 = vunpack.c.h.b16 %v472
    %v2306 = vunpack.c.l.b16 %v473
    %v2307 = vunpack.c.h.b16 %v473
    %v2308 = vunpack.c.l.b16 %v474
    %v2309 = vunpack.c.h.b16 %v474
    %v2310 = vunpack.c.l.b16 %v475
    %v2311 = vunpack.c.h.b16 %v475
    %v2312 = vunpack.c.l.b16 %v476
    %v2313 = vunpack.c.h.b16 %v476
    %v2314 = vunpack.c.l.b16 %v477
    %v2315 = vunpack.c.h.b16 %v477
    %v2316 = vunpack.c.l.b16 %v478
    %v2317 = vunpack.c.h.b16 %v478
    %v2318 = vunpack.c.l.b16 %v479
    %v2319 = vunpack.c.h.b16 %v479
    %v2320 = vunpack.c.l.b16 %v480
    %v2321 = vunpack.c.h.b16 %v480
    %v2322 = vunpack.c.l.b16 %v481
    %v2323 = vunpack.c.h.b16 %v481
    %v2324 = vunpack.c.l.b16 %v482
    %v2325 = vunpack.c.h.b16 %v482
    %v2326 = vunpack.c.l.b16 %v483
    %v2327 = vunpack.c.h.b16 %v483
    %v2328 = vunpack.c.l.b16 %v484
    %v2329 = vunpack.c.h.b16 %v484
    %v2330 = vunpack.c.l.b16 %v485
    %v2331 = vunpack.c.h.b16 %v485
    %v2332 = vunpack.c.l.b16 %v486
    %v2333 = vunpack.c.h.b16 %v486
    %v2334 = vunpack.c.l.b16 %v487
    %v2335 = vunpack.c.h.b16 %v487
    %v2336 = vunpack.c.l.b16 %v488
    %v2337 = vunpack.c.h.b16 %v488
    %v2338 = vunpack.c.l.b16 %v489
    %v2339 = vunpack.c.h.b16 %v489
    %v2340 = vunpack.c.l.b16 %v490
    %v2341 = vunpack.c.h.b16 %v490
    %v2342 = vunpack.c.l.b16 %v491
    %v2343 = vunpack.c.h.b16 %v491
    %v2344 = vunpack.c.l.b16 %v492
    %v2345 = vunpack.c.h.b16 %v492
    %v2346 = vunpack.c.l.b16 %v493
    %v2347 = vunpack.c.h.b16 %v493
    %v2348 = vunpack.c.l.b16 %v494
    %v2349 = vunpack.c.h.b16 %v494
    %v2350 = vunpack.c.l.b16 %v495
    %v2351 = vunpack.c.h.b16 %v495
    %v2352 = vunpack.c.l.b16 %v496
    %v2353 = vunpack.c.h.b16 %v496
    %v2354 = vunpack.c.l.b16 %v497
    %v2355 = vunpack.c.h.b16 %v497
    %v2356 = vunpack.c.l.b16 %v498
    %v2357 = vunpack.c.h.b16 %v498
    %v2358 = vunpack.c.l.b16 %v499
    %v2359 = vunpack.c.h.b16 %v499
    %v2360 = vunpack.c.l.b16 %v500
    %v2361 = vunpack.c.h.b16 %v500
    %v2362 = vunpack.c.l.b16 %v501
    %v2363 = vunpack.c.h.b16 %v501
    %v2364 = vunpack.c.l.b16 %v502
    %v2365 = vunpack.c.h.b16 %v502
    %v2366 = vunpack.c.l.b16 %v503
    %v2367 = vunpack.c.h.b16 %v503
    %v2368 = vunpack.c.l.b16 %v504
    %v2369 = vunpack.c.h.b16 %v504
    %v2370 = vunpack.c.l.b16 %v505
    %v2371 = vunpack.c.h.b16 %v505
    %v2372 = vunpack.c.l.b16 %v506
    %v2373 = vunpack.c.h.b16 %v506
    %v2374 = vunpack.c.l.b16 %v507
    %v2375 = vunpack.c.h.b16 %v507
    %v2376 = vunpack.c.l.b16 %v508
    %v2377 = vunpack.c.h.b16 %v508
    %v2378 = vunpack.c.l.b16 %v509
    %v2379 = vunpack.c.h.b16 %v509
    %v2380 = vunpack.c.l.b16 %v510
    %v2381 = vunpack.c.h.b16 %v510
    %v2382 = vunpack.c.l.b16 %v511
    %v2383 = vunpack.c.h.b16 %v511
    %v2384 = vunpack.c.l.b16 %v512
    %v2385 = vunpack.c.h.b16 %v512
    %v2386 = vunpack.c.l.b16 %v513
    %v2387 = vunpack.c.h.b16 %v513
    %v2388 = vunpack.c.l.b16 %v514
    %v2389 = vunpack.c.h.b16 %v514
    %v2390 = vunpack.c.l.b16 %v515
    %v2391 = vunpack.c.h.b16 %v515
    %v2392 = vunpack.c.l.b16 %v516
    %v2393 = vunpack.c.h.b16 %v516
    %v2394 = vunpack.c.l.b16 %v517
    %v2395 = vunpack.c.h.b16 %v517
    %v2396 = vunpack.c.l.b16 %v518
    %v2397 = vunpack.c.h.b16 %v518
    %v2398 = vunpack.c.l.b16 %v519
    %v2399 = vunpack.c.h.b16 %v519
    %v2400 = vunpack.c.l.b16 %v520
    %v2401 = vunpack.c.h.b16 %v520
    %v2402 = vunpack.c.l.b16 %v521
    %v2403 = vunpack.c.h.b16 %v521
    %v2404 = vunpack.c.l.b16 %v522
    %v2405 = vunpack.c.h.b16 %v522
    %v2406 = vunpack.c.l.b16 %v523
    %v2407 = vunpack.c.h.b16 %v523
    %v2408 = vunpack.c.l.b16 %v524
    %v2409 = vunpack.c.h.b16 %v524
    %v2410 = vunpack.c.l.b16 %v525
    %v2411 = vunpack.c.h.b16 %v525
    %v2412 = vunpack.c.l.b16 %v526
    %v2413 = vunpack.c.h.b16 %v526
    %v2414 = vunpack.c.l.b16 %v527
    %v2415 = vunpack.c.h.b16 %v527
    %v2416 = vunpack.c.l.b16 %v528
    %v2417 = vunpack.c.h.b16 %v528
    %v2418 = vunpack.c.l.b16 %v529
    %v2419 = vunpack.c.h.b16 %v529
    %v2420 = vunpack.c.l.b16 %v530
    %v2421 = vunpack.c.h.b16 %v530
    %v2422 = vunpack.c.l.b16 %v531
    %v2423 = vunpack.c.h.b16 %v531
    %v2424 = vunpack.c.l.b16 %v532
    %v2425 = vunpack.c.h.b16 %v532
    %v2426 = vunpack.c.l.b16 %v533
    %v2427 = vunpack.c.h.b16 %v533
    %v2428 = vunpack.c.l.b16 %v534
    %v2429 = vunpack.c.h.b16 %v534
    %v2430 = vunpack.c.l.b16 %v535
    %v2431 = vunpack.c.h.b16 %v535
    %v2432 = vunpack.c.l.b16 %v536
    %v2433 = vunpack.c.h.b16 %v536
    %v2434 = vunpack.c.l.b16 %v537
    %v2435 = vunpack.c.h.b16 %v537
    %v2436 = vunpack.c.l.b16 %v538
    %v2437 = vunpack.c.h.b16 %v538
    %v2438 = vunpack.c.l.b16 %v539
    %v2439 = vunpack.c.h.b16 %v539
    %v2440 = vunpack.c.l.b16 %v540
    %v2441 = vunpack.c.h.b16 %v540
    %v2442 = vunpack.c.l.b16 %v541
    %v2443 = vunpack.c.h.b16 %v541
    %v2444 = vunpack.c.l.b16 %v542
    %v2445 = vunpack.c.h.b16 %v542
    %v2446 = vunpack.c.l.b16 %v543
    %v2447 = vunpack.c.h.b16 %v543
    %v2448 = vunpack.c.l.b16 %v544
    %v2449 = vunpack.c.h.b16 %v544
    %v2450 = vunpack.c.l.b16 %v545
    %v2451 = vunpack.c.h.b16 %v545
    %v2452 = vunpack.c.l.b16 %v546
    %v2453 = vunpack.c.h.b16 %v546
    %v2454 = vunpack.c.l.b16 %v547
    %v2455 = vunpack.c.h.b16 %v547
    %v2456 = vunpack.c.l.b16 %v548
    %v2457 = vunpack.c.h.b16 %v548
    %v2458 = vunpack.c.l.b16 %v549
    %v2459 = vunpack.c.h.b16 %v549
    %v2460 = vunpack.c.l.b16 %v550
    %v2461 = vunpack.c.h.b16 %v550
    %v2462 = vunpack.c.l.b16 %v551
    %v2463 = vunpack.c.h.b16 %v551
    %v2464 = vunpack.c.l.b16 %v552
    %v2465 = vunpack.c.h.b16 %v552
    %v2466 = vunpack.c.l.b16 %v553
    %v2467 = vunpack.c.h.b16 %v553
    %v2468 = vunpack.c.l.b16 %v554
    %v2469 = vunpack.c.h.b16 %v554
    %v2470 = vunpack.c.l.b16 %v555
    %v2471 = vunpack.c.h.b16 %v555
    %v2472 = vunpack.c.l.b16 %v556
    %v2473 = vunpack.c.h.b16 %v556
    %v2474 = vunpack.c.l.b16 %v557
    %v2475 = vunpack.c.h.b16 %v557
    %v2476 = vunpack.c.l.b16 %v558
    %v2477 = vunpack.c.h.b16 %v558
    %v2478 = vunpack.c.l.b16 %v559
    %v2479 = vunpack.c.h.b16 %v559
    %v2480 = vunpack.c.l.b16 %v560
    %v2481 = vunpack.c.h.b16 %v560
    %v2482 = vunpack.c.l.b16 %v561
    %v2483 = vunpack.c.h.b16 %v561
    %v2484 = vunpack.c.l.b16 %v562
    %v2485 = vunpack.c.h.b16 %v562
    %v2486 = vunpack.c.l.b16 %v563
    %v2487 = vunpack.c.h.b16 %v563
    %v2488 = vunpack.c.l.b16 %v564
    %v2489 = vunpack.c.h.b16 %v564
    %v2490 = vunpack.c.l.b16 %v565
    %v2491 = vunpack.c.h.b16 %v565
    %v2492 = vunpack.c.l.b16 %v566
    %v2493 = vunpack.c.h.b16 %v566
    %v2494 = vunpack.c.l.b16 %v567
    %v2495 = vunpack.c.h.b16 %v567
    %v2496 = vunpack.c.l.b16 %v568
    %v2497 = vunpack.c.h.b16 %v568
    %v2498 = vunpack.c.l.b16 %v569
    %v2499 = vunpack.c.h.b16 %v569
    %v2500 = vunpack.c.l.b16 %v570
    %v2501 = vunpack.c.h.b16 %v570
    %v2502 = vunpack.c.l.b16 %v571
    %v2503 = vunpack.c.h.b16 %v571
    %v2504 = vunpack.c.l.b16 %v572
    %v2505 = vunpack.c.h.b16 %v572
    %v2506 = vunpack.c.l.b16 %v573
    %v2507 = vunpack.c.h.b16 %v573
    %v2508 = vunpack.c.l.b16 %v574
    %v2509 = vunpack.c.h.b16 %v574
    %v2510 = vunpack.c.l.b16 %v575
    %v2511 = vunpack.c.h.b16 %v575
    %v2512 = vunpack.c.l.b16 %v576
    %v2513 = vunpack.c.h.b16 %v576
    %v2514 = vunpack.c.l.b16 %v577
    %v2515 = vunpack.c.h.b16 %v577
    %v2516 = vunpack.c.l.b16 %v578
    %v2517 = vunpack.c.h.b16 %v578
    %v2518 = vunpack.c.l.b16 %v579
    %v2519 = vunpack.c.h.b16 %v579
    %v2520 = vunpack.c.l.b16 %v580
    %v2521 = vunpack.c.h.b16 %v580
    %v2522 = vunpack.c.l.b16 %v581
    %v2523 = vunpack.c.h.b16 %v581
    %v2524 = vunpack.c.l.b16 %v582
    %v2525 = vunpack.c.h.b16 %v582
    %v2526 = vunpack.c.l.b16 %v583
    %v2527 = vunpack.c.h.b16 %v583
    %v2528 = vunpack.c.l.b16 %v584
    %v2529 = vunpack.c.h.b16 %v584
    %v2530 = vunpack.c.l.b16 %v585
    %v2531 = vunpack.c.h.b16 %v585
    %v2532 = vunpack.c.l.b16 %v586
    %v2533 = vunpack.c.h.b16 %v586
    %v2534 = vunpack.c.l.b16 %v587
    %v2535 = vunpack.c.h.b16 %v587
    %v2536 = vunpack.c.l.b16 %v588
    %v2537 = vunpack.c.h.b16 %v588
    %v2538 = vunpack.c.l.b16 %v589
    %v2539 = vunpack.c.h.b16 %v589
    %v2540 = vunpack.c.l.b16 %v590
    %v2541 = vunpack.c.h.b16 %v590
    %v2542 = vunpack.c.l.b16 %v591
    %v2543 = vunpack.c.h.b16 %v591
    %v2544 = vunpack.c.l.b16 %v592
    %v2545 = vunpack.c.h.b16 %v592
    %v2546 = vunpack.c.l.b16 %v593
    %v2547 = vunpack.c.h.b16 %v593
    %v2548 = vunpack.c.l.b16 %v594
    %v2549 = vunpack.c.h.b16 %v594
    %v2550 = vunpack.c.l.b16 %v595
    %v2551 = vunpack.c.h.b16 %v595
    %v2552 = vunpack.c.l.b16 %v596
    %v2553 = vunpack.c.h.b16 %v596
    %v2554 = vunpack.c.l.b16 %v597
    %v2555 = vunpack.c.h.b16 %v597
    %v2556 = vunpack.c.l.b16 %v598
    %v2557 = vunpack.c.h.b16 %v598
    %v2558 = vunpack.c.l.b16 %v599
    %v2559 = vunpack.c.h.b16 %v599
    %v2560 = vunpack.c.l.b16 %v600
    %v2561 = vunpack.c.h.b16 %v600
    %v2562 = vunpack.c.l.b16 %v601
    %v2563 = vunpack.c.h.b16 %v601
    %v2564 = vunpack.c.l.b16 %v602
    %v2565 = vunpack.c.h.b16 %v602
    %v2566 = vunpack.c.l.b16 %v603
    %v2567 = vunpack.c.h.b16 %v603
    %v2568 = vunpack.c.l.b16 %v604
    %v2569 = vunpack.c.h.b16 %v604
    %v2570 = vunpack.c.l.b16 %v605
    %v2571 = vunpack.c.h.b16 %v605
    %v2572 = vunpack.c.l.b16 %v606
    %v2573 = vunpack.c.h.b16 %v606
    %v2574 = vunpack.c.l.b16 %v607
    %v2575 = vunpack.c.h.b16 %v607
    %v2576 = vunpack.c.l.b16 %v608
    %v2577 = vunpack.c.h.b16 %v608
    %v2578 = vunpack.c.l.b16 %v609
    %v2579 = vunpack.c.h.b16 %v609
    %v2580 = vunpack.c.l.b16 %v610
    %v2581 = vunpack.c.h.b16 %v610
    %v2582 = vunpack.c.l.b16 %v611
    %v2583 = vunpack.c.h.b16 %v611
    %v2584 = vunpack.c.l.b16 %v612
    %v2585 = vunpack.c.h.b16 %v612
    %v2586 = vunpack.c.l.b16 %v613
    %v2587 = vunpack.c.h.b16 %v613
    %v2588 = vunpack.c.l.b16 %v614
    %v2589 = vunpack.c.h.b16 %v614
    %v2590 = vunpack.c.l.b16 %v615
    %v2591 = vunpack.c.h.b16 %v615
    %v2592 = vunpack.c.l.b16 %v616
    %v2593 = vunpack.c.h.b16 %v616
    %v2594 = vunpack.c.l.b16 %v617
    %v2595 = vunpack.c.h.b16 %v617
    %v2596 = vunpack.c.l.b16 %v618
    %v2597 = vunpack.c.h.b16 %v618
    %v2598 = vunpack.c.l.b16 %v619
    %v2599 = vunpack.c.h.b16 %v619
    %v2600 = vunpack.c.l.b16 %v620
    %v2601 = vunpack.c.h.b16 %v620
    %v2602 = vunpack.c.l.b16 %v621
    %v2603 = vunpack.c.h.b16 %v621
    %v2604 = vunpack.c.l.b16 %v622
    %v2605 = vunpack.c.h.b16 %v622
    %v2606 = vunpack.c.l.b16 %v623
    %v2607 = vunpack.c.h.b16 %v623
    %v2608 = vunpack.c.l.b16 %v624
    %v2609 = vunpack.c.h.b16 %v624
    %v2610 = vunpack.c.l.b16 %v625
    %v2611 = vunpack.c.h.b16 %v625
    %v2612 = vunpack.c.l.b16 %v626
    %v2613 = vunpack.c.h.b16 %v626
    %v2614 = vunpack.c.l.b16 %v627
    %v2615 = vunpack.c.h.b16 %v627
    %v2616 = vunpack.c.l.b16 %v628
    %v2617 = vunpack.c.h.b16 %v628
    %v2618 = vunpack.c.l.b16 %v629
    %v2619 = vunpack.c.h.b16 %v629
    %v2620 = vunpack.c.l.b16 %v630
    %v2621 = vunpack.c.h.b16 %v630
    %v2622 = vunpack.c.l.b16 %v631
    %v2623 = vunpack.c.h.b16 %v631
    %v2624 = vunpack.c.l.b16 %v632
    %v2625 = vunpack.c.h.b16 %v632
    %v2626 = vunpack.c.l.b16 %v633
    %v2627 = vunpack.c.h.b16 %v633
    %v2628 = vunpack.c.l.b16 %v634
    %v2629 = vunpack.c.h.b16 %v634
    %v2630 = vunpack.c.l.b16 %v635
    %v2631 = vunpack.c.h.b16 %v635
    %v2632 = vunpack.c.l.b16 %v636
    %v2633 = vunpack.c.h.b16 %v636
    %v2634 = vunpack.c.l.b16 %v637
    %v2635 = vunpack.c.h.b16 %v637
    %v2636 = vunpack.c.l.b16 %v638
    %v2637 = vunpack.c.h.b16 %v638
    %v2638 = vunpack.c.l.b16 %v639
    %v2639 = vunpack.c.h.b16 %v639
    %v2640 = vunpack.c.l.b16 %v640
    %v2641 = vunpack.c.h.b16 %v640
    %v2642 = vunpack.c.l.b16 %v641
    %v2643 = vunpack.c.h.b16 %v641
    %v2644 = vunpack.c.l.b16 %v642
    %v2645 = vunpack.c.h.b16 %v642
    %v2646 = vunpack.c.l.b16 %v643
    %v2647 = vunpack.c.h.b16 %v643
    %v2648 = vunpack.c.l.b16 %v644
    %v2649 = vunpack.c.h.b16 %v644
    %v2650 = vunpack.c.l.b16 %v645
    %v2651 = vunpack.c.h.b16 %v645
    %v2652 = vunpack.c.l.b16 %v646
    %v2653 = vunpack.c.h.b16 %v646
    %v2654 = vunpack.c.l.b16 %v647
    %v2655 = vunpack.c.h.b16 %v647
    %v2656 = vunpack.c.l.b16 %v648
    %v2657 = vunpack.c.h.b16 %v648
    %v2658 = vunpack.c.l.b16 %v649
    %v2659 = vunpack.c.h.b16 %v649
    %v2660 = vunpack.c.l.b16 %v650
    %v2661 = vunpack.c.h.b16 %v650
    %v2662 = vunpack.c.l.b16 %v651
    %v2663 = vunpack.c.h.b16 %v651
    %v2664 = vunpack.c.l.b16 %v652
    %v2665 = vunpack.c.h.b16 %v652
    %v2666 = vunpack.c.l.b16 %v653
    %v2667 = vunpack.c.h.b16 %v653
    %v2668 = vunpack.c.l.b16 %v654
    %v2669 = vunpack.c.h.b16 %v654
    %v2670 = vunpack.c.l.b16 %v655
    %v2671 = vunpack.c.h.b16 %v655
    %v2672 = vunpack.c.l.b16 %v656
    %v2673 = vunpack.c.h.b16 %v656
    %v2674 = vunpack.c.l.b16 %v657
    %v2675 = vunpack.c.h.b16 %v657
    %v2676 = vunpack.c.l.b16 %v658
    %v2677 = vunpack.c.h.b16 %v658
    %v2678 = vunpack.c.l.b16 %v659
    %v2679 = vunpack.c.h.b16 %v659
    %v2680 = vunpack.c.l.b16 %v660
    %v2681 = vunpack.c.h.b16 %v660
    %v2682 = vunpack.c.l.b16 %v661
    %v2683 = vunpack.c.h.b16 %v661
    %v2684 = vunpack.c.l.b16 %v662
    %v2685 = vunpack.c.h.b16 %v662
    %v2686 = vunpack.c.l.b16 %v663
    %v2687 = vunpack.c.h.b16 %v663
    %v2688 = vunpack.c.l.b16 %v664
    %v2689 = vunpack.c.h.b16 %v664
    %v2690 = vunpack.c.l.b16 %v665
    %v2691 = vunpack.c.h.b16 %v665
    %v2692 = vunpack.c.l.b16 %v666
    %v2693 = vunpack.c.h.b16 %v666
    %v2694 = vunpack.c.l.b16 %v667
    %v2695 = vunpack.c.h.b16 %v667
    %v2696 = vunpack.c.l.b16 %v668
    %v2697 = vunpack.c.h.b16 %v668
    %v2698 = vunpack.c.l.b16 %v669
    %v2699 = vunpack.c.h.b16 %v669
    %v2700 = vunpack.c.l.b16 %v670
    %v2701 = vunpack.c.h.b16 %v670
    %v2702 = vunpack.c.l.b16 %v671
    %v2703 = vunpack.c.h.b16 %v671
    %v2704 = vunpack.c.l.b16 %v672
    %v2705 = vunpack.c.h.b16 %v672
    %v2706 = vunpack.c.l.b16 %v673
    %v2707 = vunpack.c.h.b16 %v673
    %v2708 = vunpack.c.l.b16 %v674
    %v2709 = vunpack.c.h.b16 %v674
    %v2710 = vunpack.c.l.b16 %v675
    %v2711 = vunpack.c.h.b16 %v675
    %v2712 = vunpack.c.l.b16 %v676
    %v2713 = vunpack.c.h.b16 %v676
    %v2714 = vunpack.c.l.b16 %v677
    %v2715 = vunpack.c.h.b16 %v677
    %v2716 = vunpack.c.l.b16 %v678
    %v2717 = vunpack.c.h.b16 %v678
    %v2718 = vunpack.c.l.b16 %v679
    %v2719 = vunpack.c.h.b16 %v679
    %v2720 = vunpack.c.l.b16 %v680
    %v2721 = vunpack.c.h.b16 %v680
    %v2722 = vunpack.c.l.b16 %v681
    %v2723 = vunpack.c.h.b16 %v681
    %v2724 = vunpack.c.l.b16 %v682
    %v2725 = vunpack.c.h.b16 %v682
    %v2726 = vunpack.c.l.b16 %v683
    %v2727 = vunpack.c.h.b16 %v683
    %v2728 = vunpack.c.l.b16 %v684
    %v2729 = vunpack.c.h.b16 %v684
    %v2730 = vunpack.c.l.b16 %v685
    %v2731 = vunpack.c.h.b16 %v685
    %v2732 = vunpack.c.l.b16 %v686
    %v2733 = vunpack.c.h.b16 %v686
    %v2734 = vunpack.c.l.b16 %v687
    %v2735 = vunpack.c.h.b16 %v687
    %v2736 = vunpack.c.l.b16 %v688
    %v2737 = vunpack.c.h.b16 %v688
    %v2738 = vunpack.c.l.b16 %v689
    %v2739 = vunpack.c.h.b16 %v689
    %v2740 = vunpack.c.l.b16 %v690
    %v2741 = vunpack.c.h.b16 %v690
    %v2742 = vunpack.c.l.b16 %v691
    %v2743 = vunpack.c.h.b16 %v691
    %v2744 = vunpack.c.l.b16 %v692
    %v2745 = vunpack.c.h.b16 %v692
    %v2746 = vunpack.c.l.b16 %v693
    %v2747 = vunpack.c.h.b16 %v693
    %v2748 = vunpack.c.l.b16 %v694
    %v2749 = vunpack.c.h.b16 %v694
    %v2750 = vunpack.c.l.b16 %v695
    %v2751 = vunpack.c.h.b16 %v695
    %v2752 = vunpack.c.l.b16 %v696
    %v2753 = vunpack.c.h.b16 %v696
    %v2754 = vunpack.c.l.b16 %v697
    %v2755 = vunpack.c.h.b16 %v697
    %v2756 = vunpack.c.l.b16 %v698
    %v2757 = vunpack.c.h.b16 %v698
    %v2758 = vunpack.c.l.b16 %v699
    %v2759 = vunpack.c.h.b16 %v699
    %v2760 = vunpack.c.l.b16 %v700
    %v2761 = vunpack.c.h.b16 %v700
    %v2762 = vunpack.c.l.b16 %v701
    %v2763 = vunpack.c.h.b16 %v701
    %v2764 = vunpack.c.l.b16 %v702
    %v2765 = vunpack.c.h.b16 %v702
    %v2766 = vunpack.c.l.b16 %v703
    %v2767 = vunpack.c.h.b16 %v703
    %v2768 = vunpack.c.l.b16 %v704
    %v2769 = vunpack.c.h.b16 %v704
    %v2770 = vunpack.c.l.b16 %v705
    %v2771 = vunpack.c.h.b16 %v705
    %v2772 = vunpack.c.l.b16 %v706
    %v2773 = vunpack.c.h.b16 %v706
    %v2774 = vunpack.c.l.b16 %v707
    %v2775 = vunpack.c.h.b16 %v707
    %v2776 = vunpack.c.l.b16 %v708
    %v2777 = vunpack.c.h.b16 %v708
    %v2778 = vunpack.c.l.b16 %v709
    %v2779 = vunpack.c.h.b16 %v709
    %v2780 = vunpack.c.l.b16 %v710
    %v2781 = vunpack.c.h.b16 %v710
    %v2782 = vunpack.c.l.b16 %v711
    %v2783 = vunpack.c.h.b16 %v711
    %v2784 = vunpack.c.l.b16 %v712
    %v2785 = vunpack.c.h.b16 %v712
    %v2786 = vunpack.c.l.b16 %v713
    %v2787 = vunpack.c.h.b16 %v713
    %v2788 = vunpack.c.l.b16 %v714
    %v2789 = vunpack.c.h.b16 %v714
    %v2790 = vunpack.c.l.b16 %v715
    %v2791 = vunpack.c.h.b16 %v715
    %v2792 = vunpack.c.l.b16 %v716
    %v2793 = vunpack.c.h.b16 %v716
    %v2794 = vunpack.c.l.b16 %v717
    %v2795 = vunpack.c.h.b16 %v717
    %v2796 = vunpack.c.l.b16 %v718
    %v2797 = vunpack.c.h.b16 %v718
    %v2798 = vunpack.c.l.b16 %v719
    %v2799 = vunpack.c.h.b16 %v719
    %v2800 = vunpack.c.l.b16 %v720
    %v2801 = vunpack.c.h.b16 %v720
    %v2802 = vunpack.c.l.b16 %v721
    %v2803 = vunpack.c.h.b16 %v721
    %v2804 = vunpack.c.l.b16 %v722
    %v2805 = vunpack.c.h.b16 %v722
    %v2806 = vunpack.c.l.b16 %v723
    %v2807 = vunpack.c.h.b16 %v723
    %v2808 = vunpack.c.l.b16 %v724
    %v2809 = vunpack.c.h.b16 %v724
    %v2810 = vunpack.c.l.b16 %v725
    %v2811 = vunpack.c.h.b16 %v725
    %v2812 = vunpack.c.l.b16 %v726
    %v2813 = vunpack.c.h.b16 %v726
    %v2814 = vunpack.c.l.b16 %v727
    %v2815 = vunpack.c.h.b16 %v727
    %v2816 = vunpack.c.l.b16 %v728
    %v2817 = vunpack.c.h.b16 %v728
    %v2818 = vunpack.c.l.b16 %v729
    %v2819 = vunpack.c.h.b16 %v729
    %v2820 = vunpack.c.l.b16 %v730
    %v2821 = vunpack.c.h.b16 %v730
    %v2822 = vunpack.c.l.b16 %v731
    %v2823 = vunpack.c.h.b16 %v731
    %v2824 = vunpack.c.l.b16 %v732
    %v2825 = vunpack.c.h.b16 %v732
    %v2826 = vunpack.c.l.b16 %v733
    %v2827 = vunpack.c.h.b16 %v733
    %v2828 = vunpack.c.l.b16 %v734
    %v2829 = vunpack.c.h.b16 %v734
    %v2830 = vunpack.c.l.b16 %v735
    %v2831 = vunpack.c.h.b16 %v735
    %v2832 = vunpack.c.l.b16 %v736
    %v2833 = vunpack.c.h.b16 %v736
    %v2834 = vunpack.c.l.b16 %v737
    %v2835 = vunpack.c.h.b16 %v737
    %v2836 = vunpack.c.l.b16 %v738
    %v2837 = vunpack.c.h.b16 %v738
    %v2838 = vunpack.c.l.b16 %v739
    %v2839 = vunpack.c.h.b16 %v739
    %v2840 = vunpack.c.l.b16 %v740
    %v2841 = vunpack.c.h.b16 %v740
    %v2842 = vunpack.c.l.b16 %v741
    %v2843 = vunpack.c.h.b16 %v741
    %v2844 = vunpack.c.l.b16 %v742
    %v2845 = vunpack.c.h.b16 %v742
    %v2846 = vunpack.c.l.b16 %v743
    %v2847 = vunpack.c.h.b16 %v743
    %v2848 = vunpack.c.l.b16 %v744
    %v2849 = vunpack.c.h.b16 %v744
    %v2850 = vunpack.c.l.b16 %v745
    %v2851 = vunpack.c.h.b16 %v745
    %v2852 = vunpack.c.l.b16 %v746
    %v2853 = vunpack.c.h.b16 %v746
    %v2854 = vunpack.c.l.b16 %v747
    %v2855 = vunpack.c.h.b16 %v747
    %v2856 = vunpack.c.l.b16 %v748
    %v2857 = vunpack.c.h.b16 %v748
    %v2858 = vunpack.c.l.b16 %v749
    %v2859 = vunpack.c.h.b16 %v749
    %v2860 = vunpack.c.l.b16 %v750
    %v2861 = vunpack.c.h.b16 %v750
    %v2862 = vunpack.c.l.b16 %v751
    %v2863 = vunpack.c.h.b16 %v751
    %v2864 = vunpack.c.l.b16 %v752
    %v2865 = vunpack.c.h.b16 %v752
    %v2866 = vunpack.c.l.b16 %v753
    %v2867 = vunpack.c.h.b16 %v753
    %v2868 = vunpack.c.l.b16 %v754
    %v2869 = vunpack.c.h.b16 %v754
    %v2870 = vunpack.c.l.b16 %v755
    %v2871 = vunpack.c.h.b16 %v755
    %v2872 = vunpack.c.l.b16 %v756
    %v2873 = vunpack.c.h.b16 %v756
    %v2874 = vunpack.c.l.b16 %v757
    %v2875 = vunpack.c.h.b16 %v757
    %v2876 = vunpack.c.l.b16 %v758
    %v2877 = vunpack.c.h.b16 %v758
    %v2878 = vunpack.c.l.b16 %v759
    %v2879 = vunpack.c.h.b16 %v759
    %v2880 = vunpack.c.l.b16 %v760
    %v2881 = vunpack.c.h.b16 %v760
    %v2882 = vunpack.c.l.b16 %v761
    %v2883 = vunpack.c.h.b16 %v761
    %v2884 = vunpack.c.l.b16 %v762
    %v2885 = vunpack.c.h.b16 %v762
    %v2886 = vunpack.c.l.b16 %v763
    %v2887 = vunpack.c.h.b16 %v763
    %v2888 = vunpack.c.l.b16 %v764
    %v2889 = vunpack.c.h.b16 %v764
    %v2890 = vunpack.c.l.b16 %v765
    %v2891 = vunpack.c.h.b16 %v765
    %v2892 = vunpack.c.l.b16 %v766
    %v2893 = vunpack.c.h.b16 %v766
    %v2894 = vunpack.c.l.b16 %v767
    %v2895 = vunpack.c.h.b16 %v767
    %v2896 = vunpack.c.l.b16 %v768
    %v2897 = vunpack.c.h.b16 %v768
    %v2898 = vunpack.c.l.b16 %v769
    %v2899 = vunpack.c.h.b16 %v769
    %v2900 = vunpack.c.l.b16 %v770
    %v2901 = vunpack.c.h.b16 %v770
    %v2902 = vunpack.c.l.b16 %v771
    %v2903 = vunpack.c.h.b16 %v771
    %v2904 = vunpack.c.l.b16 %v772
    %v2905 = vunpack.c.h.b16 %v772
    %v2906 = vunpack.c.l.b16 %v773
    %v2907 = vunpack.c.h.b16 %v773
    %v2908 = vunpack.c.l.b16 %v774
    %v2909 = vunpack.c.h.b16 %v774
    %v2910 = vunpack.c.l.b16 %v775
    %v2911 = vunpack.c.h.b16 %v775
    %v2912 = vunpack.c.l.b16 %v776
    %v2913 = vunpack.c.h.b16 %v776
    %v2914 = vunpack.c.l.b16 %v777
    %v2915 = vunpack.c.h.b16 %v777
    %v2916 = vunpack.c.l.b16 %v778
    %v2917 = vunpack.c.h.b16 %v778
    %v2918 = vunpack.c.l.b16 %v779
    %v2919 = vunpack.c.h.b16 %v779
    %v2920 = vunpack.c.l.b16 %v780
    %v2921 = vunpack.c.h.b16 %v780
    %v2922 = vunpack.c.l.b16 %v781
    %v2923 = vunpack.c.h.b16 %v781
    %v2924 = vunpack.c.l.b16 %v782
    %v2925 = vunpack.c.h.b16 %v782
    %v2926 = vunpack.c.l.b16 %v783
    %v2927 = vunpack.c.h.b16 %v783
    %v2928 = vunpack.c.l.b16 %v784
    %v2929 = vunpack.c.h.b16 %v784
    %v2930 = vunpack.c.l.b16 %v785
    %v2931 = vunpack.c.h.b16 %v785
    %v2932 = vunpack.c.l.b16 %v786
    %v2933 = vunpack.c.h.b16 %v786
    %v2934 = vunpack.c.l.b16 %v787
    %v2935 = vunpack.c.h.b16 %v787
    %v2936 = vunpack.c.l.b16 %v788
    %v2937 = vunpack.c.h.b16 %v788
    %v2938 = vunpack.c.l.b16 %v789
    %v2939 = vunpack.c.h.b16 %v789
    %v2940 = vunpack.c.l.b16 %v790
    %v2941 = vunpack.c.h.b16 %v790
    %v2942 = vunpack.c.l.b16 %v791
    %v2943 = vunpack.c.h.b16 %v791
    %v2944 = vunpack.c.l.b16 %v792
    %v2945 = vunpack.c.h.b16 %v792
    %v2946 = vunpack.c.l.b16 %v793
    %v2947 = vunpack.c.h.b16 %v793
    %v2948 = vunpack.c.l.b16 %v794
    %v2949 = vunpack.c.h.b16 %v794
    %v2950 = vunpack.c.l.b16 %v795
    %v2951 = vunpack.c.h.b16 %v795
    %v2952 = vunpack.c.l.b16 %v796
    %v2953 = vunpack.c.h.b16 %v796
    %v2954 = vunpack.c.l.b16 %v797
    %v2955 = vunpack.c.h.b16 %v797
    %v2956 = vunpack.c.l.b16 %v798
    %v2957 = vunpack.c.h.b16 %v798
    %v2958 = vunpack.c.l.b16 %v799
    %v2959 = vunpack.c.h.b16 %v799
    %v2960 = vunpack.c.l.b16 %v800
    %v2961 = vunpack.c.h.b16 %v800
    %v2962 = vunpack.c.l.b16 %v801
    %v2963 = vunpack.c.h.b16 %v801
    %v2964 = vunpack.c.l.b16 %v802
    %v2965 = vunpack.c.h.b16 %v802
    %v2966 = vunpack.c.l.b16 %v803
    %v2967 = vunpack.c.h.b16 %v803
    %v2968 = vunpack.c.l.b16 %v804
    %v2969 = vunpack.c.h.b16 %v804
    %v2970 = vunpack.c.l.b16 %v805
    %v2971 = vunpack.c.h.b16 %v805
    %v2972 = vunpack.c.l.b16 %v806
    %v2973 = vunpack.c.h.b16 %v806
    %v2974 = vunpack.c.l.b16 %v807
    %v2975 = vunpack.c.h.b16 %v807
    %v2976 = vunpack.c.l.b16 %v808
    %v2977 = vunpack.c.h.b16 %v808
    %v2978 = vunpack.c.l.b16 %v809
    %v2979 = vunpack.c.h.b16 %v809
    %v2980 = vunpack.c.l.b16 %v810
    %v2981 = vunpack.c.h.b16 %v810
    %v2982 = vunpack.c.l.b16 %v811
    %v2983 = vunpack.c.h.b16 %v811
    %v2984 = vunpack.c.l.b16 %v812
    %v2985 = vunpack.c.h.b16 %v812
    %v2986 = vunpack.c.l.b16 %v813
    %v2987 = vunpack.c.h.b16 %v813
    %v2988 = vunpack.c.l.b16 %v814
    %v2989 = vunpack.c.h.b16 %v814
    %v2990 = vunpack.c.l.b16 %v815
    %v2991 = vunpack.c.h.b16 %v815
    %v2992 = vunpack.c.l.b16 %v816
    %v2993 = vunpack.c.h.b16 %v816
    %v2994 = vunpack.c.l.b16 %v817
    %v2995 = vunpack.c.h.b16 %v817
    %v2996 = vunpack.c.l.b16 %v818
    %v2997 = vunpack.c.h.b16 %v818
    %v2998 = vunpack.c.l.b16 %v819
    %v2999 = vunpack.c.h.b16 %v819
    %v3000 = vunpack.c.l.b16 %v820
    %v3001 = vunpack.c.h.b16 %v820
    %v3002 = vunpack.c.l.b16 %v821
    %v3003 = vunpack.c.h.b16 %v821
    %v3004 = vunpack.c.l.b16 %v822
    %v3005 = vunpack.c.h.b16 %v822
    %v3006 = vunpack.c.l.b16 %v823
    %v3007 = vunpack.c.h.b16 %v823
    %v3008 = vunpack.c.l.b16 %v824
    %v3009 = vunpack.c.h.b16 %v824
    %v3010 = vunpack.c.l.b16 %v825
    %v3011 = vunpack.c.h.b16 %v825
    %v3012 = vunpack.c.l.b16 %v826
    %v3013 = vunpack.c.h.b16 %v826
    %v3014 = vunpack.c.l.b16 %v827
    %v3015 = vunpack.c.h.b16 %v827
    %v3016 = vunpack.c.l.b16 %v828
    %v3017 = vunpack.c.h.b16 %v828
    %v3018 = vunpack.c.l.b16 %v829
    %v3019 = vunpack.c.h.b16 %v829
    %v3020 = vunpack.c.l.b16 %v830
    %v3021 = vunpack.c.h.b16 %v830
    %v3022 = vunpack.c.l.b16 %v831
    %v3023 = vunpack.c.h.b16 %v831
    %v3024 = vunpack.c.l.b16 %v832
    %v3025 = vunpack.c.h.b16 %v832
    %v3026 = vunpack.c.l.b16 %v833
    %v3027 = vunpack.c.h.b16 %v833
    %v3028 = vunpack.c.l.b16 %v834
    %v3029 = vunpack.c.h.b16 %v834
    %v3030 = vunpack.c.l.b16 %v835
    %v3031 = vunpack.c.h.b16 %v835
    %v3032 = vunpack.c.l.b16 %v836
    %v3033 = vunpack.c.h.b16 %v836
    %v3034 = vunpack.c.l.b16 %v837
    %v3035 = vunpack.c.h.b16 %v837
    %v3036 = vunpack.c.l.b16 %v838
    %v3037 = vunpack.c.h.b16 %v838
    %v3038 = vunpack.c.l.b16 %v839
    %v3039 = vunpack.c.h.b16 %v839
    %v3040 = vunpack.c.l.b16 %v840
    %v3041 = vunpack.c.h.b16 %v840
    %v3042 = vunpack.c.l.b16 %v841
    %v3043 = vunpack.c.h.b16 %v841
    %v3044 = vunpack.c.l.b16 %v842
    %v3045 = vunpack.c.h.b16 %v842
    %v3046 = vunpack.c.l.b16 %v843
    %v3047 = vunpack.c.h.b16 %v843
    %v3048 = vunpack.c.l.b16 %v844
    %v3049 = vunpack.c.h.b16 %v844
    %v3050 = vunpack.c.l.b16 %v845
    %v3051 = vunpack.c.h.b16 %v845
    %v3052 = vunpack.c.l.b16 %v846
    %v3053 = vunpack.c.h.b16 %v846
    %v3054 = vunpack.c.l.b16 %v847
    %v3055 = vunpack.c.h.b16 %v847
    %v3056 = vunpack.c.l.b16 %v848
    %v3057 = vunpack.c.h.b16 %v848
    %v3058 = vunpack.c.l.b16 %v849
    %v3059 = vunpack.c.h.b16 %v849
    %v3060 = vunpack.c.l.b16 %v850
    %v3061 = vunpack.c.h.b16 %v850
    %v3062 = vunpack.c.l.b16 %v851
    %v3063 = vunpack.c.h.b16 %v851
    %v3064 = vunpack.c.l.b16 %v852
    %v3065 = vunpack.c.h.b16 %v852
    %v3066 = vunpack.c.l.b16 %v853
    %v3067 = vunpack.c.h.b16 %v853
    %v3068 = vunpack.c.l.b16 %v854
    %v3069 = vunpack.c.h.b16 %v854
    %v3070 = vunpack.c.l.b16 %v855
    %v3071 = vunpack.c.h.b16 %v855
    %v3072 = vunpack.c.l.b16 %v856
    %v3073 = vunpack.c.h.b16 %v856
    %v3074 = vunpack.c.l.b16 %v857
    %v3075 = vunpack.c.h.b16 %v857
    %v3076 = vunpack.c.l.b16 %v858
    %v3077 = vunpack.c.h.b16 %v858
    %v3078 = vunpack.c.l.b16 %v859
    %v3079 = vunpack.c.h.b16 %v859
    %v3080 = vunpack.c.l.b16 %v860
    %v3081 = vunpack.c.h.b16 %v860
    %v3082 = vunpack.c.l.b16 %v861
    %v3083 = vunpack.c.h.b16 %v861
    %v3084 = vunpack.c.l.b16 %v862
    %v3085 = vunpack.c.h.b16 %v862
    %v3086 = vunpack.c.l.b16 %v863
    %v3087 = vunpack.c.h.b16 %v863
    %v3088 = vunpack.c.l.b16 %v864
    %v3089 = vunpack.c.h.b16 %v864
    %v3090 = vunpack.c.l.b16 %v865
    %v3091 = vunpack.c.h.b16 %v865
    %v3092 = vunpack.c.l.b16 %v866
    %v3093 = vunpack.c.h.b16 %v866
    %v3094 = vunpack.c.l.b16 %v867
    %v3095 = vunpack.c.h.b16 %v867
    %v3096 = vunpack.c.l.b16 %v868
    %v3097 = vunpack.c.h.b16 %v868
    %v3098 = vunpack.c.l.b16 %v869
    %v3099 = vunpack.c.h.b16 %v869
    %v3100 = vunpack.c.l.b16 %v870
    %v3101 = vunpack.c.h.b16 %v870
    %v3102 = vunpack.c.l.b16 %v871
    %v3103 = vunpack.c.h.b16 %v871
    %v3104 = vunpack.c.l.b16 %v872
    %v3105 = vunpack.c.h.b16 %v872
    %v3106 = vunpack.c.l.b16 %v873
    %v3107 = vunpack.c.h.b16 %v873
    %v3108 = vunpack.c.l.b16 %v874
    %v3109 = vunpack.c.h.b16 %v874
    %v3110 = vunpack.c.l.b16 %v875
    %v3111 = vunpack.c.h.b16 %v875
    %v3112 = vunpack.c.l.b16 %v876
    %v3113 = vunpack.c.h.b16 %v876
    %v3114 = vunpack.c.l.b16 %v877
    %v3115 = vunpack.c.h.b16 %v877
    %v3116 = vunpack.c.l.b16 %v878
    %v3117 = vunpack.c.h.b16 %v878
    %v3118 = vunpack.c.l.b16 %v879
    %v3119 = vunpack.c.h.b16 %v879
    %v3120 = vunpack.c.l.b16 %v880
    %v3121 = vunpack.c.h.b16 %v880
    %v3122 = vunpack.c.l.b16 %v881
    %v3123 = vunpack.c.h.b16 %v881
    %v3124 = vunpack.c.l.b16 %v882
    %v3125 = vunpack.c.h.b16 %v882
    %v3126 = vunpack.c.l.b16 %v883
    %v3127 = vunpack.c.h.b16 %v883
    %v3128 = vunpack.c.l.b16 %v884
    %v3129 = vunpack.c.h.b16 %v884
    %v3130 = vunpack.c.l.b16 %v885
    %v3131 = vunpack.c.h.b16 %v885
    %v3132 = vunpack.c.l.b16 %v886
    %v3133 = vunpack.c.h.b16 %v886
    %v3134 = vunpack.c.l.b16 %v887
    %v3135 = vunpack.c.h.b16 %v887
    %v3136 = vunpack.c.l.b16 %v888
    %v3137 = vunpack.c.h.b16 %v888
    %v3138 = vunpack.c.l.b16 %v889
    %v3139 = vunpack.c.h.b16 %v889
    %v3140 = vunpack.c.l.b16 %v890
    %v3141 = vunpack.c.h.b16 %v890
    %v3142 = vunpack.c.l.b16 %v891
    %v3143 = vunpack.c.h.b16 %v891
    %v3144 = vunpack.c.l.b16 %v892
    %v3145 = vunpack.c.h.b16 %v892
    %v3146 = vunpack.c.l.b16 %v893
    %v3147 = vunpack.c.h.b16 %v893
    %v3148 = vunpack.c.l.b16 %v894
    %v3149 = vunpack.c.h.b16 %v894
    %v3150 = vunpack.c.l.b16 %v895
    %v3151 = vunpack.c.h.b16 %v895
    %v3152 = vunpack.c.l.b16 %v896
    %v3153 = vunpack.c.h.b16 %v896
    %v3154 = vunpack.c.l.b16 %v897
    %v3155 = vunpack.c.h.b16 %v897
    %v3156 = vunpack.c.l.b16 %v898
    %v3157 = vunpack.c.h.b16 %v898
    %v3158 = vunpack.c.l.b16 %v899
    %v3159 = vunpack.c.h.b16 %v899
    %v3160 = vunpack.c.l.b16 %v900
    %v3161 = vunpack.c.h.b16 %v900
    %v3162 = vunpack.c.l.b16 %v901
    %v3163 = vunpack.c.h.b16 %v901
    %v3164 = vunpack.c.l.b16 %v902
    %v3165 = vunpack.c.h.b16 %v902
    %v3166 = vunpack.c.l.b16 %v903
    %v3167 = vunpack.c.h.b16 %v903
    %v3168 = vunpack.c.l.b16 %v904
    %v3169 = vunpack.c.h.b16 %v904
    %v3170 = vunpack.c.l.b16 %v905
    %v3171 = vunpack.c.h.b16 %v905
    %v3172 = vunpack.c.l.b16 %v906
    %v3173 = vunpack.c.h.b16 %v906
    %v3174 = vunpack.c.l.b16 %v907
    %v3175 = vunpack.c.h.b16 %v907
    %v3176 = vunpack.c.l.b16 %v908
    %v3177 = vunpack.c.h.b16 %v908
    %v3178 = vunpack.c.l.b16 %v909
    %v3179 = vunpack.c.h.b16 %v909
    %v3180 = vunpack.c.l.b16 %v910
    %v3181 = vunpack.c.h.b16 %v910
    %v3182 = vunpack.c.l.b16 %v911
    %v3183 = vunpack.c.h.b16 %v911
    %v3184 = vunpack.c.l.b16 %v912
    %v3185 = vunpack.c.h.b16 %v912
    %v3186 = vunpack.c.l.b16 %v913
    %v3187 = vunpack.c.h.b16 %v913
    %v3188 = vunpack.c.l.b16 %v914
    %v3189 = vunpack.c.h.b16 %v914
    %v3190 = vunpack.c.l.b16 %v915
    %v3191 = vunpack.c.h.b16 %v915
    %v3192 = vunpack.c.l.b16 %v916
    %v3193 = vunpack.c.h.b16 %v916
    %v3194 = vunpack.c.l.b16 %v917
    %v3195 = vunpack.c.h.b16 %v917
    %v3196 = vunpack.c.l.b16 %v918
    %v3197 = vunpack.c.h.b16 %v918
    %v3198 = vunpack.c.l.b16 %v919
    %v3199 = vunpack.c.h.b16 %v919
    %v3200 = vunpack.c.l.b16 %v920
    %v3201 = vunpack.c.h.b16 %v920
    %v3202 = vunpack.c.l.b16 %v921
    %v3203 = vunpack.c.h.b16 %v921
    %v3204 = vunpack.c.l.b16 %v922
    %v3205 = vunpack.c.h.b16 %v922
    %v3206 = vunpack.c.l.b16 %v923
    %v3207 = vunpack.c.h.b16 %v923
    %v3208 = vunpack.c.l.b16 %v924
    %v3209 = vunpack.c.h.b16 %v924
    %v3210 = vunpack.c.l.b16 %v925
    %v3211 = vunpack.c.h.b16 %v925
    %v3212 = vunpack.c.l.b16 %v926
    %v3213 = vunpack.c.h.b16 %v926
    %v3214 = vunpack.c.l.b16 %v927
    %v3215 = vunpack.c.h.b16 %v927
    %v3216 = vunpack.c.l.b16 %v928
    %v3217 = vunpack.c.h.b16 %v928
    %v3218 = vunpack.c.l.b16 %v929
    %v3219 = vunpack.c.h.b16 %v929
    %v3220 = vunpack.c.l.b16 %v930
    %v3221 = vunpack.c.h.b16 %v930
    %v3222 = vunpack.c.l.b16 %v931
    %v3223 = vunpack.c.h.b16 %v931
    %v3224 = vunpack.c.l.b16 %v932
    %v3225 = vunpack.c.h.b16 %v932
    %v3226 = vunpack.c.l.b16 %v933
    %v3227 = vunpack.c.h.b16 %v933
    %v3228 = vunpack.c.l.b16 %v934
    %v3229 = vunpack.c.h.b16 %v934
    %v3230 = vunpack.c.l.b16 %v935
    %v3231 = vunpack.c.h.b16 %v935
    %v3232 = vunpack.c.l.b16 %v936
    %v3233 = vunpack.c.h.b16 %v936
    %v3234 = vunpack.c.l.b16 %v937
    %v3235 = vunpack.c.h.b16 %v937
    %v3236 = vunpack.c.l.b16 %v938
    %v3237 = vunpack.c.h.b16 %v938
    %v3238 = vunpack.c.l.b16 %v939
    %v3239 = vunpack.c.h.b16 %v939
    %v3240 = vunpack.c.l.b16 %v940
    %v3241 = vunpack.c.h.b16 %v940
    %v3242 = vunpack.c.l.b16 %v941
    %v3243 = vunpack.c.h.b16 %v941
    %v3244 = vunpack.c.l.b16 %v942
    %v3245 = vunpack.c.h.b16 %v942
    %v3246 = vunpack.c.l.b16 %v943
    %v3247 = vunpack.c.h.b16 %v943
    %v3248 = vunpack.c.l.b16 %v944
    %v3249 = vunpack.c.h.b16 %v944
    %v3250 = vunpack.c.l.b16 %v945
    %v3251 = vunpack.c.h.b16 %v945
    %v3252 = vunpack.c.l.b16 %v946
    %v3253 = vunpack.c.h.b16 %v946
    %v3254 = vunpack.c.l.b16 %v947
    %v3255 = vunpack.c.h.b16 %v947
    %v3256 = vunpack.c.l.b16 %v948
    %v3257 = vunpack.c.h.b16 %v948
    %v3258 = vunpack.c.l.b16 %v949
    %v3259 = vunpack.c.h.b16 %v949
    %v3260 = vunpack.c.l.b16 %v950
    %v3261 = vunpack.c.h.b16 %v950
    %v3262 = vunpack.c.l.b16 %v951
    %v3263 = vunpack.c.h.b16 %v951
    %v3264 = vunpack.c.l.b16 %v952
    %v3265 = vunpack.c.h.b16 %v952
    %v3266 = vunpack.c.l.b16 %v953
    %v3267 = vunpack.c.h.b16 %v953
    %v3268 = vpack.c.b16 %v1736, %v1732
    %v3269 = vpack.c.b16 %v1737, %v1733
    %v3270 = vpack.c.b16 %v1738, %v1734
    %v3271 = vpack.c.b16 %v1739, %v1735
    %v3272 = vpack.c.b16 %v1744, %v1740
    %v3273 = vpack.c.b16 %v1745, %v1741
    %v3274 = vpack.c.b16 %v1746, %v1742
    %v3275 = vpack.c.b16 %v1747, %v1743
    %v3276 = vpack.c.b16 %v1752, %v1748
    %v3277 = vpack.c.b16 %v1753, %v1749
    %v3278 = vpack.c.b16 %v1754, %v1750
    %v3279 = vpack.c.b16 %v1755, %v1751
    %v3280 = vpack.c.b16 %v1760, %v1756
    %v3281 = vpack.c.b16 %v1761, %v1757
    %v3282 = vpack.c.b16 %v1762, %v1758
    %v3283 = vpack.c.b16 %v1763, %v1759
    %v3284 = vpack.c.b16 %v1768, %v1764
    %v3285 = vpack.c.b16 %v1769, %v1765
    %v3286 = vpack.c.b16 %v1770, %v1766
    %v3287 = vpack.c.b16 %v1771, %v1767
    %v3288 = vpack.c.b16 %v1776, %v1772
    %v3289 = vpack.c.b16 %v1777, %v1773
    %v3290 = vpack.c.b16 %v1778, %v1774
    %v3291 = vpack.c.b16 %v1779, %v1775
    %v3292 = vpack.c.b16 %v1784, %v1780
    %v3293 = vpack.c.b16 %v1785, %v1781
    %v3294 = vpack.c.b16 %v1786, %v1782
    %v3295 = vpack.c.b16 %v1787, %v1783
    %v3296 = vpack.c.b16 %v1792, %v1788
    %v3297 = vpack.c.b16 %v1793, %v1789
    %v3298 = vpack.c.b16 %v1794, %v1790
    %v3299 = vpack.c.b16 %v1795, %v1791
    %v3300 = vpack.c.b16 %v1800, %v1796
    %v3301 = vpack.c.b16 %v1801, %v1797
    %v3302 = vpack.c.b16 %v1802, %v1798
    %v3303 = vpack.c.b16 %v1803, %v1799
    %v3304 = vpack.c.b16 %v1808, %v1804
    %v3305 = vpack.c.b16 %v1809, %v1805
    %v3306 = vpack.c.b16 %v1810, %v1806
    %v3307 = vpack.c.b16 %v1811, %v1807
    %v3308 = vpack.c.b16 %v1816, %v1812
    %v3309 = vpack.c.b16 %v1817, %v1813
    %v3310 = vpack.c.b16 %v1818, %v1814
    %v3311 = vpack.c.b16 %v1819, %v1815
    %v3312 = vpack.c.b16 %v1824, %v1820
    %v3313 = vpack.c.b16 %v1825, %v1821
    %v3314 = vpack.c.b16 %v1826, %v1822
    %v3315 = vpack.c.b16 %v1827, %v1823
    %v3316 = vpack.c.b16 %v1832, %v1828
    %v3317 = vpack.c.b16 %v1833, %v1829
    %v3318 = vpack.c.b16 %v1834, %v1830
    %v3319 = vpack.c.b16 %v1835, %v1831
    %v3320 = vpack.c.b16 %v1840, %v1836
    %v3321 = vpack.c.b16 %v1841, %v1837
    %v3322 = vpack.c.b16 %v1842, %v1838
    %v3323 = vpack.c.b16 %v1843, %v1839
    %v3324 = vpack.c.b16 %v1848, %v1844
    %v3325 = vpack.c.b16 %v1849, %v1845
    %v3326 = vpack.c.b16 %v1850, %v1846
    %v3327 = vpack.c.b16 %v1851, %v1847
    %v3328 = vpack.c.b16 %v1856, %v1852
    %v3329 = vpack.c.b16 %v1857, %v1853
    %v3330 = vpack.c.b16 %v1858, %v1854
    %v3331 = vpack.c.b16 %v1859, %v1855
    %v3332 = vpack.c.b16 %v1864, %v1860
    %v3333 = vpack.c.b16 %v1865, %v1861
    %v3334 = vpack.c.b16 %v1866, %v1862
    %v3335 = vpack.c.b16 %v1867, %v1863
    %v3336 = vpack.c.b16 %v1872, %v1868
    %v3337 = vpack.c.b16 %v1873, %v1869
    %v3338 = vpack.c.b16 %v1874, %v1870
    %v3339 = vpack.c.b16 %v1875, %v1871
    %v3340 = vpack.c.b16 %v1880, %v1876
    %v3341 = vpack.c.b16 %v1881, %v1877
    %v3342 = vpack.c.b16 %v1882, %v1878
    %v3343 = vpack.c.b16 %v1883, %v1879
    %v3344 = vpack.c.b16 %v1888, %v1884
    %v3345 = vpack.c.b16 %v1889, %v1885
    %v3346 = vpack.c.b16 %v1890, %v1886
    %v3347 = vpack.c.b16 %v1891, %v1887
    %v3348 = vpack.c.b16 %v1896, %v1892
    %v3349 = vpack.c.b16 %v1897, %v1893
    %v3350 = vpack.c.b16 %v1898, %v1894
    %v3351 = vpack.c.b16 %v1899, %v1895
    %v3352 = vpack.c.b16 %v1904, %v1900
    %v3353 = vpack.c.b16 %v1905, %v1901
    %v3354 = vpack.c.b16 %v1906, %v1902
    %v3355 = vpack.c.b16 %v1907, %v1903
    %v3356 = vpack.c.b16 %v1912, %v1908
    %v3357 = vpack.c.b16 %v1913, %v1909
    %v3358 = vpack.c.b16 %v1914, %v1910
    %v3359 = vpack.c.b16 %v1915, %v1911
    %v3360 = vpack.c.b16 %v1920, %v1916
    %v3361 = vpack.c.b16 %v1921, %v1917
    %v3362 = vpack.c.b16 %v1922, %v1918
    %v3363 = vpack.c.b16 %v1923, %v1919
    %v3364 = vpack.c.b16 %v1928, %v1924
    %v3365 = vpack.c.b16 %v1929, %v1925
    %v3366 = vpack.c.b16 %v1930, %v1926
    %v3367 = vpack.c.b16 %v1931, %v1927
    %v3368 = vpack.c.b16 %v1936, %v1932
    %v3369 = vpack.c.b16 %v1937, %v1933
    %v3370 = vpack.c.b16 %v1938, %v1934
    %v3371 = vpack.c.b16 %v1939, %v1935
    %v3372 = vpack.c.b16 %v1944, %v1940
    %v3373 = vpack.c.b16 %v1945, %v1941
    %v3374 = vpack.c.b16 %v1946, %v1942
    %v3375 = vpack.c.b16 %v1947, %v1943
    %v3376 = vpack.c.b16 %v1952, %v1948
    %v3377 = vpack.c.b16 %v1953, %v1949
    %v3378 = vpack.c.b16 %v1954, %v1950
    %v3379 = vpack.c.b16 %v1955, %v1951
    %v3380 = vpack.c.b16 %v1960, %v1956
    %v3381 = vpack.c.b16 %v1961, %v1957
    %v3382 = vpack.c.b16 %v1962, %v1958
    %v3383 = vpack.c.b16 %v1963, %v1959
    %v3384 = vpack.c.b16 %v1968, %v1964
    %v3385 = vpack.c.b16 %v1969, %v1965
    %v3386 = vpack.c.b16 %v1970, %v1966
    %v3387 = vpack.c.b16 %v1971, %v1967
    %v3388 = vpack.c.b16 %v1976, %v1972
    %v3389 = vpack.c.b16 %v1977, %v1973
    %v3390 = vpack.c.b16 %v1978, %v1974
    %v3391 = vpack.c.b16 %v1979, %v1975
    %v3392 = vpack.c.b16 %v1984, %v1980
    %v3393 = vpack.c.b16 %v1985, %v1981
    %v3394 = vpack.c.b16 %v1986, %v1982
    %v3395 = vpack.c.b16 %v1987, %v1983
    %v3396 = vpack.c.b16 %v1992, %v1988
    %v3397 = vpack.c.b16 %v1993, %v1989
    %v3398 = vpack.c.b16 %v1994, %v1990
    %v3399 = vpack.c.b16 %v1995, %v1991
    %v3400 = vpack.c.b16 %v2000, %v1996
    %v3401 = vpack.c.b16 %v2001, %v1997
    %v3402 = vpack.c.b16 %v2002, %v1998
    %v3403 = vpack.c.b16 %v2003, %v1999
    %v3404 = vpack.c.b16 %v2008, %v2004
    %v3405 = vpack.c.b16 %v2009, %v2005
    %v3406 = vpack.c.b16 %v2010, %v2006
    %v3407 = vpack.c.b16 %v2011, %v2007
    %v3408 = vpack.c.b16 %v2016, %v2012
    %v3409 = vpack.c.b16 %v2017, %v2013
    %v3410 = vpack.c.b16 %v2018, %v2014
    %v3411 = vpack.c.b16 %v2019, %v2015
    %v3412 = vpack.c.b16 %v2024, %v2020
    %v3413 = vpack.c.b16 %v2025, %v2021
    %v3414 = vpack.c.b16 %v2026, %v2022
    %v3415 = vpack.c.b16 %v2027, %v2023
    %v3416 = vpack.c.b16 %v2032, %v2028
    %v3417 = vpack.c.b16 %v2033, %v2029
    %v3418 = vpack.c.b16 %v2034, %v2030
    %v3419 = vpack.c.b16 %v2035, %v2031
    %v3420 = vpack.c.b16 %v2040, %v2036
    %v3421 = vpack.c.b16 %v2041, %v2037
    %v3422 = vpack.c.b16 %v2042, %v2038
    %v3423 = vpack.c.b16 %v2043, %v2039
    %v3424 = vpack.c.b16 %v2048, %v2044
    %v3425 = vpack.c.b16 %v2049, %v2045
    %v3426 = vpack.c.b16 %v2050, %v2046
    %v3427 = vpack.c.b16 %v2051, %v2047
    %v3428 = vpack.c.b16 %v2056, %v2052
    %v3429 = vpack.c.b16 %v2057, %v2053
    %v3430 = vpack.c.b16 %v2058, %v2054
    %v3431 = vpack.c.b16 %v2059, %v2055
    %v3432 = vpack.c.b16 %v2064, %v2060
    %v3433 = vpack.c.b16 %v2065, %v2061
    %v3434 = vpack.c.b16 %v2066, %v2062
    %v3435 = vpack.c.b16 %v2067, %v2063
    %v3436 = vpack.c.b16 %v2072, %v2068
    %v3437 = vpack.c.b16 %v2073, %v2069
    %v3438 = vpack.c.b16 %v2074, %v2070
    %v3439 = vpack.c.b16 %v2075, %v2071
    %v3440 = vpack.c.b16 %v2080, %v2076
    %v3441 = vpack.c.b16 %v2081, %v2077
    %v3442 = vpack.c.b16 %v2082, %v2078
    %v3443 = vpack.c.b16 %v2083, %v2079
    %v3444 = vpack.c.b16 %v2088, %v2084
    %v3445 = vpack.c.b16 %v2089, %v2085
    %v3446 = vpack.c.b16 %v2090, %v2086
    %v3447 = vpack.c.b16 %v2091, %v2087
    %v3448 = vpack.c.b16 %v2096, %v2092
    %v3449 = vpack.c.b16 %v2097, %v2093
    %v3450 = vpack.c.b16 %v2098, %v2094
    %v3451 = vpack.c.b16 %v2099, %v2095
    %v3452 = vpack.c.b16 %v2104, %v2100
    %v3453 = vpack.c.b16 %v2105, %v2101
    %v3454 = vpack.c.b16 %v2106, %v2102
    %v3455 = vpack.c.b16 %v2107, %v2103
    %v3456 = vpack.c.b16 %v2112, %v2108
    %v3457 = vpack.c.b16 %v2113, %v2109
    %v3458 = vpack.c.b16 %v2114, %v2110
    %v3459 = vpack.c.b16 %v2115, %v2111
    %v3460 = vpack.c.b16 %v2120, %v2116
    %v3461 = vpack.c.b16 %v2121, %v2117
    %v3462 = vpack.c.b16 %v2122, %v2118
    %v3463 = vpack.c.b16 %v2123, %v2119
    %v3464 = vpack.c.b16 %v2128, %v2124
    %v3465 = vpack.c.b16 %v2129, %v2125
    %v3466 = vpack.c.b16 %v2130, %v2126
    %v3467 = vpack.c.b16 %v2131, %v2127
    %v3468 = vpack.c.b16 %v2136, %v2132
    %v3469 = vpack.c.b16 %v2137, %v2133
    %v3470 = vpack.c.b16 %v2138, %v2134
    %v3471 = vpack.c.b16 %v2139, %v2135
    %v3472 = vpack.c.b16 %v2144, %v2140
    %v3473 = vpack.c.b16 %v2145, %v2141
    %v3474 = vpack.c.b16 %v2146, %v2142
    %v3475 = vpack.c.b16 %v2147, %v2143
    %v3476 = vpack.c.b16 %v2152, %v2148
    %v3477 = vpack.c.b16 %v2153, %v2149
    %v3478 = vpack.c.b16 %v2154, %v2150
    %v3479 = vpack.c.b16 %v2155, %v2151
    %v3480 = vpack.c.b16 %v2160, %v2156
    %v3481 = vpack.c.b16 %v2161, %v2157
    %v3482 = vpack.c.b16 %v2162, %v2158
    %v3483 = vpack.c.b16 %v2163, %v2159
    %v3484 = vpack.c.b16 %v2168, %v2164
    %v3485 = vpack.c.b16 %v2169, %v2165
    %v3486 = vpack.c.b16 %v2170, %v2166
    %v3487 = vpack.c.b16 %v2171, %v2167
    %v3488 = vpack.c.b16 %v2176, %v2172
    %v3489 = vpack.c.b16 %v2177, %v2173
    %v3490 = vpack.c.b16 %v2178, %v2174
    %v3491 = vpack.c.b16 %v2179, %v2175
    %v3492 = vpack.c.b16 %v2184, %v2180
    %v3493 = vpack.c.b16 %v2185, %v2181
    %v3494 = vpack.c.b16 %v2186, %v2182
    %v3495 = vpack.c.b16 %v2187, %v2183
    %v3496 = vpack.c.b16 %v2192, %v2188
    %v3497 = vpack.c.b16 %v2193, %v2189
    %v3498 = vpack.c.b16 %v2194, %v2190
    %v3499 = vpack.c.b16 %v2195, %v2191
    %v3500 = vpack.c.b16 %v2200, %v2196
    %v3501 = vpack.c.b16 %v2201, %v2197
    %v3502 = vpack.c.b16 %v2202, %v2198
    %v3503 = vpack.c.b16 %v2203, %v2199
    %v3504 = vpack.c.b16 %v2208, %v2204
    %v3505 = vpack.c.b16 %v2209, %v2205
    %v3506 = vpack.c.b16 %v2210, %v2206
    %v3507 = vpack.c.b16 %v2211, %v2207
    %v3508 = vpack.c.b16 %v2216, %v2212
    %v3509 = vpack.c.b16 %v2217, %v2213
    %v3510 = vpack.c.b16 %v2218, %v2214
    %v3511 = vpack.c.b16 %v2219, %v2215
    %v3512 = vpack.c.b16 %v2224, %v2220
    %v3513 = vpack.c.b16 %v2225, %v2221
    %v3514 = vpack.c.b16 %v2226, %v2222
    %v3515 = vpack.c.b16 %v2227, %v2223
    %v3516 = vpack.c.b16 %v2232, %v2228
    %v3517 = vpack.c.b16 %v2233, %v2229
    %v3518 = vpack.c.b16 %v2234, %v2230
    %v3519 = vpack.c.b16 %v2235, %v2231
    %v3520 = vpack.c.b16 %v2240, %v2236
    %v3521 = vpack.c.b16 %v2241, %v2237
    %v3522 = vpack.c.b16 %v2242, %v2238
    %v3523 = vpack.c.b16 %v2243, %v2239
    %v3524 = vpack.c.b16 %v2248, %v2244
    %v3525 = vpack.c.b16 %v2249, %v2245
    %v3526 = vpack.c.b16 %v2250, %v2246
    %v3527 = vpack.c.b16 %v2251, %v2247
    %v3528 = vpack.c.b16 %v2256, %v2252
    %v3529 = vpack.c.b16 %v2257, %v2253
    %v3530 = vpack.c.b16 %v2258, %v2254
    %v3531 = vpack.c.b16 %v2259, %v2255
    %v3532 = vpack.c.b16 %v2264, %v2260
    %v3533 = vpack.c.b16 %v2265, %v2261
    %v3534 = vpack.c.b16 %v2266, %v2262
    %v3535 = vpack.c.b16 %v2267, %v2263
    %v3536 = vpack.c.b16 %v2272, %v2268
    %v3537 = vpack.c.b16 %v2273, %v2269
    %v3538 = vpack.c.b16 %v2274, %v2270
    %v3539 = vpack.c.b16 %v2275, %v2271
    %v3540 = vpack.c.b16 %v2280, %v2276
    %v3541 = vpack.c.b16 %v2281, %v2277
    %v3542 = vpack.c.b16 %v2282, %v2278
    %v3543 = vpack.c.b16 %v2283, %v2279
    %v3544 = vpack.c.b16 %v2288, %v2284
    %v3545 = vpack.c.b16 %v2289, %v2285
    %v3546 = vpack.c.b16 %v2290, %v2286
    %v3547 = vpack.c.b16 %v2291, %v2287
    %v3548 = vpack.c.b16 %v2296, %v2292
    %v3549 = vpack.c.b16 %v2297, %v2293
    %v3550 = vpack.c.b16 %v2298, %v2294
    %v3551 = vpack.c.b16 %v2299, %v2295
    %v3552 = vpack.c.b16 %v2304, %v2300
    %v3553 = vpack.c.b16 %v2305, %v2301
    %v3554 = vpack.c.b16 %v2306, %v2302
    %v3555 = vpack.c.b16 %v2307, %v2303
    %v3556 = vpack.c.b16 %v2312, %v2308
    %v3557 = vpack.c.b16 %v2313, %v2309
    %v3558 = vpack.c.b16 %v2314, %v2310
    %v3559 = vpack.c.b16 %v2315, %v2311
    %v3560 = vpack.c.b16 %v2320, %v2316
    %v3561 = vpack.c.b16 %v2321, %v2317
    %v3562 = vpack.c.b16 %v2322, %v2318
    %v3563 = vpack.c.b16 %v2323, %v2319
    %v3564 = vpack.c.b16 %v2328, %v2324
    %v3565 = vpack.c.b16 %v2329, %v2325
    %v3566 = vpack.c.b16 %v2330, %v2326
    %v3567 = vpack.c.b16 %v2331, %v2327
    %v3568 = vpack.c.b16 %v2336, %v2332
    %v3569 = vpack.c.b16 %v2337, %v2333
    %v3570 = vpack.c.b16 %v2338, %v2334
    %v3571 = vpack.c.b16 %v2339, %v2335
    %v3572 = vpack.c.b16 %v2344, %v2340
    %v3573 = vpack.c.b16 %v2345, %v2341
    %v3574 = vpack.c.b16 %v2346, %v2342
    %v3575 = vpack.c.b16 %v2347, %v2343
    %v3576 = vpack.c.b16 %v2352, %v2348
    %v3577 = vpack.c.b16 %v2353, %v2349
    %v3578 = vpack.c.b16 %v2354, %v2350
    %v3579 = vpack.c.b16 %v2355, %v2351
    %v3580 = vpack.c.b16 %v2360, %v2356
    %v3581 = vpack.c.b16 %v2361, %v2357
    %v3582 = vpack.c.b16 %v2362, %v2358
    %v3583 = vpack.c.b16 %v2363, %v2359
    %v3584 = vpack.c.b16 %v2368, %v2364
    %v3585 = vpack.c.b16 %v2369, %v2365
    %v3586 = vpack.c.b16 %v2370, %v2366
    %v3587 = vpack.c.b16 %v2371, %v2367
    %v3588 = vpack.c.b16 %v2376, %v2372
    %v3589 = vpack.c.b16 %v2377, %v2373
    %v3590 = vpack.c.b16 %v2378, %v2374
    %v3591 = vpack.c.b16 %v2379, %v2375
    %v3592 = vpack.c.b16 %v2384, %v2380
    %v3593 = vpack.c.b16 %v2385, %v2381
    %v3594 = vpack.c.b16 %v2386, %v2382
    %v3595 = vpack.c.b16 %v2387, %v2383
    %v3596 = vpack.c.b16 %v2392, %v2388
    %v3597 = vpack.c.b16 %v2393, %v2389
    %v3598 = vpack.c.b16 %v2394, %v2390
    %v3599 = vpack.c.b16 %v2395, %v2391
    %v3600 = vpack.c.b16 %v2400, %v2396
    %v3601 = vpack.c.b16 %v2401, %v2397
    %v3602 = vpack.c.b16 %v2402, %v2398
    %v3603 = vpack.c.b16 %v2403, %v2399
    %v3604 = vpack.c.b16 %v2408, %v2404
    %v3605 = vpack.c.b16 %v2409, %v2405
    %v3606 = vpack.c.b16 %v2410, %v2406
    %v3607 = vpack.c.b16 %v2411, %v2407
    %v3608 = vpack.c.b16 %v2416, %v2412
    %v3609 = vpack.c.b16 %v2417, %v2413
    %v3610 = vpack.c.b16 %v2418, %v2414
    %v3611 = vpack.c.b16 %v2419, %v2415
    %v3612 = vpack.c.b16 %v2424, %v2420
    %v3613 = vpack.c.b16 %v2425, %v2421
    %v3614 = vpack.c.b16 %v2426, %v2422
    %v3615 = vpack.c.b16 %v2427, %v2423
    %v3616 = vpack.c.b16 %v2432, %v2428
    %v3617 = vpack.c.b16 %v2433, %v2429
    %v3618 = vpack.c.b16 %v2434, %v2430
    %v3619 = vpack.c.b16 %v2435, %v2431
    %v3620 = vpack.c.b16 %v2440, %v2436
    %v3621 = vpack.c.b16 %v2441, %v2437
    %v3622 = vpack.c.b16 %v2442, %v2438
    %v3623 = vpack.c.b16 %v2443, %v2439
    %v3624 = vpack.c.b16 %v2448, %v2444
    %v3625 = vpack.c.b16 %v2449, %v2445
    %v3626 = vpack.c.b16 %v2450, %v2446
    %v3627 = vpack.c.b16 %v2451, %v2447
    %v3628 = vpack.c.b16 %v2456, %v2452
    %v3629 = vpack.c.b16 %v2457, %v2453
    %v3630 = vpack.c.b16 %v2458, %v2454
    %v3631 = vpack.c.b16 %v2459, %v2455
    %v3632 = vpack.c.b16 %v2464, %v2460
    %v3633 = vpack.c.b16 %v2465, %v2461
    %v3634 = vpack.c.b16 %v2466, %v2462
    %v3635 = vpack.c.b16 %v2467, %v2463
    %v3636 = vpack.c.b16 %v2472, %v2468
    %v3637 = vpack.c.b16 %v2473, %v2469
    %v3638 = vpack.c.b16 %v2474, %v2470
    %v3639 = vpack.c.b16 %v2475, %v2471
    %v3640 = vpack.c.b16 %v2480, %v2476
    %v3641 = vpack.c.b16 %v2481, %v2477
    %v3642 = vpack.c.b16 %v2482, %v2478
    %v3643 = vpack.c.b16 %v2483, %v2479
    %v3644 = vpack.c.b16 %v2488, %v2484
    %v3645 = vpack.c.b16 %v2489, %v2485
    %v3646 = vpack.c.b16 %v2490, %v2486
    %v3647 = vpack.c.b16 %v2491, %v2487
    %v3648 = vpack.c.b16 %v2496, %v2492
    %v3649 = vpack.c.b16 %v2497, %v2493
    %v3650 = vpack.c.b16 %v2498, %v2494
    %v3651 = vpack.c.b16 %v2499, %v2495
    %v3652 = vpack.c.b16 %v2504, %v2500
    %v3653 = vpack.c.b16 %v2505, %v2501
    %v3654 = vpack.c.b16 %v2506, %v2502
    %v3655 = vpack.c.b16 %v2507, %v2503
    %v3656 = vpack.c.b16 %v2512, %v2508
    %v3657 = vpack.c.b16 %v2513, %v2509
    %v3658 = vpack.c.b16 %v2514, %v2510
    %v3659 = vpack.c.b16 %v2515, %v2511
    %v3660 = vpack.c.b16 %v2520, %v2516
    %v3661 = vpack.c.b16 %v2521, %v2517
    %v3662 = vpack.c.b16 %v2522, %v2518
    %v3663 = vpack.c.b16 %v2523, %v2519
    %v3664 = vpack.c.b16 %v2528, %v2524
    %v3665 = vpack.c.b16 %v2529, %v2525
    %v3666 = vpack.c.b16 %v2530, %v2526
    %v3667 = vpack.c.b16 %v2531, %v2527
    %v3668 = vpack.c.b16 %v2536, %v2532
    %v3669 = vpack.c.b16 %v2537, %v2533
    %v3670 = vpack.c.b16 %v2538, %v2534
    %v3671 = vpack.c.b16 %v2539, %v2535
    %v3672 = vpack.c.b16 %v2544, %v2540
    %v3673 = vpack.c.b16 %v2545, %v2541
    %v3674 = vpack.c.b16 %v2546, %v2542
    %v3675 = vpack.c.b16 %v2547, %v2543
    %v3676 = vpack.c.b16 %v2552, %v2548
    %v3677 = vpack.c.b16 %v2553, %v2549
    %v3678 = vpack.c.b16 %v2554, %v2550
    %v3679 = vpack.c.b16 %v2555, %v2551
    %v3680 = vpack.c.b16 %v2560, %v2556
    %v3681 = vpack.c.b16 %v2561, %v2557
    %v3682 = vpack.c.b16 %v2562, %v2558
    %v3683 = vpack.c.b16 %v2563, %v2559
    %v3684 = vpack.c.b16 %v2568, %v2564
    %v3685 = vpack.c.b16 %v2569, %v2565
    %v3686 = vpack.c.b16 %v2570, %v2566
    %v3687 = vpack.c.b16 %v2571, %v2567
    %v3688 = vpack.c.b16 %v2576, %v2572
    %v3689 = vpack.c.b16 %v2577, %v2573
    %v3690 = vpack.c.b16 %v2578, %v2574
    %v3691 = vpack.c.b16 %v2579, %v2575
    %v3692 = vpack.c.b16 %v2584, %v2580
    %v3693 = vpack.c.b16 %v2585, %v2581
    %v3694 = vpack.c.b16 %v2586, %v2582
    %v3695 = vpack.c.b16 %v2587, %v2583
    %v3696 = vpack.c.b16 %v2592, %v2588
    %v3697 = vpack.c.b16 %v2593, %v2589
    %v3698 = vpack.c.b16 %v2594, %v2590
    %v3699 = vpack.c.b16 %v2595, %v2591
    %v3700 = vpack.c.b16 %v2600, %v2596
    %v3701 = vpack.c.b16 %v2601, %v2597
    %v3702 = vpack.c.b16 %v2602, %v2598
    %v3703 = vpack.c.b16 %v2603, %v2599
    %v3704 = vpack.c.b16 %v2608, %v2604
    %v3705 = vpack.c.b16 %v2609, %v2605
    %v3706 = vpack.c.b16 %v2610, %v2606
    %v3707 = vpack.c.b16 %v2611, %v2607
    %v3708 = vpack.c.b16 %v2616, %v2612
    %v3709 = vpack.c.b16 %v2617, %v2613
    %v3710 = vpack.c.b16 %v2618, %v2614
    %v3711 = vpack.c.b16 %v2619, %v2615
    %v3712 = vpack.c.b16 %v2624, %v2620
    %v3713 = vpack.c.b16 %v2625, %v2621
    %v3714 = vpack.c.b16 %v2626, %v2622
    %v3715 = vpack.c.b16 %v2627, %v2623
    %v3716 = vpack.c.b16 %v2632, %v2628
    %v3717 = vpack.c.b16 %v2633, %v2629
    %v3718 = vpack.c.b16 %v2634, %v2630
    %v3719 = vpack.c.b16 %v2635, %v2631
    %v3720 = vpack.c.b16 %v2640, %v2636
    %v3721 = vpack.c.b16 %v2641, %v2637
    %v3722 = vpack.c.b16 %v2642, %v2638
    %v3723 = vpack.c.b16 %v2643, %v2639
    %v3724 = vpack.c.b16 %v2648, %v2644
    %v3725 = vpack.c.b16 %v2649, %v2645
    %v3726 = vpack.c.b16 %v2650, %v2646
    %v3727 = vpack.c.b16 %v2651, %v2647
    %v3728 = vpack.c.b16 %v2656, %v2652
    %v3729 = vpack.c.b16 %v2657, %v2653
    %v3730 = vpack.c.b16 %v2658, %v2654
    %v3731 = vpack.c.b16 %v2659, %v2655
    %v3732 = vpack.c.b16 %v2664, %v2660
    %v3733 = vpack.c.b16 %v2665, %v2661
    %v3734 = vpack.c.b16 %v2666, %v2662
    %v3735 = vpack.c.b16 %v2667, %v2663
    %v3736 = vpack.c.b16 %v2672, %v2668
    %v3737 = vpack.c.b16 %v2673, %v2669
    %v3738 = vpack.c.b16 %v2674, %v2670
    %v3739 = vpack.c.b16 %v2675, %v2671
    %v3740 = vpack.c.b16 %v2680, %v2676
    %v3741 = vpack.c.b16 %v2681, %v2677
    %v3742 = vpack.c.b16 %v2682, %v2678
    %v3743 = vpack.c.b16 %v2683, %v2679
    %v3744 = vpack.c.b16 %v2688, %v2684
    %v3745 = vpack.c.b16 %v2689, %v2685
    %v3746 = vpack.c.b16 %v2690, %v2686
    %v3747 = vpack.c.b16 %v2691, %v2687
    %v3748 = vpack.c.b16 %v2696, %v2692
    %v3749 = vpack.c.b16 %v2697, %v2693
    %v3750 = vpack.c.b16 %v2698, %v2694
    %v3751 = vpack.c.b16 %v2699, %v2695
    %v3752 = vpack.c.b16 %v2704, %v2700
    %v3753 = vpack.c.b16 %v2705, %v2701
    %v3754 = vpack.c.b16 %v2706, %v2702
    %v3755 = vpack.c.b16 %v2707, %v2703
    %v3756 = vpack.c.b16 %v2712, %v2708
    %v3757 = vpack.c.b16 %v2713, %v2709
    %v3758 = vpack.c.b16 %v2714, %v2710
    %v3759 = vpack.c.b16 %v2715, %v2711
    %v3760 = vpack.c.b16 %v2720, %v2716
    %v3761 = vpack.c.b16 %v2721, %v2717
    %v3762 = vpack.c.b16 %v2722, %v2718
    %v3763 = vpack.c.b16 %v2723, %v2719
    %v3764 = vpack.c.b16 %v2728, %v2724
    %v3765 = vpack.c.b16 %v2729, %v2725
    %v3766 = vpack.c.b16 %v2730, %v2726
    %v3767 = vpack.c.b16 %v2731, %v2727
    %v3768 = vpack.c.b16 %v2736, %v2732
    %v3769 = vpack.c.b16 %v2737, %v2733
    %v3770 = vpack.c.b16 %v2738, %v2734
    %v3771 = vpack.c.b16 %v2739, %v2735
    %v3772 = vpack.c.b16 %v2744, %v2740
    %v3773 = vpack.c.b16 %v2745, %v2741
    %v3774 = vpack.c.b16 %v2746, %v2742
    %v3775 = vpack.c.b16 %v2747, %v2743
    %v3776 = vpack.c.b16 %v2752, %v2748
    %v3777 = vpack.c.b16 %v2753, %v2749
    %v3778 = vpack.c.b16 %v2754, %v2750
    %v3779 = vpack.c.b16 %v2755, %v2751
    %v3780 = vpack.c.b16 %v2760, %v2756
    %v3781 = vpack.c.b16 %v2761, %v2757
    %v3782 = vpack.c.b16 %v2762, %v2758
    %v3783 = vpack.c.b16 %v2763, %v2759
    %v3784 = vpack.c.b16 %v2768, %v2764
    %v3785 = vpack.c.b16 %v2769, %v2765
    %v3786 = vpack.c.b16 %v2770, %v2766
    %v3787 = vpack.c.b16 %v2771, %v2767
    %v3788 = vpack.c.b16 %v2776, %v2772
    %v3789 = vpack.c.b16 %v2777, %v2773
    %v3790 = vpack.c.b16 %v2778, %v2774
    %v3791 = vpack.c.b16 %v2779, %v2775
    %v3792 = vpack.c.b16 %v2784, %v2780
    %v3793 = vpack.c.b16 %v2785, %v2781
    %v3794 = vpack.c.b16 %v2786, %v2782
    %v3795 = vpack.c.b16 %v2787, %v2783
    %v3796 = vpack.c.b16 %v2792, %v2788
    %v3797 = vpack.c.b16 %v2793, %v2789
    %v3798 = vpack.c.b16 %v2794, %v2790
    %v3799 = vpack.c.b16 %v2795, %v2791
    %v3800 = vpack.c.b16 %v2800, %v2796
    %v3801 = vpack.c.b16 %v2801, %v2797
    %v3802 = vpack.c.b16 %v2802, %v2798
    %v3803 = vpack.c.b16 %v2803, %v2799
    %v3804 = vpack.c.b16 %v2808, %v2804
    %v3805 = vpack.c.b16 %v2809, %v2805
    %v3806 = vpack.c.b16 %v2810, %v2806
    %v3807 = vpack.c.b16 %v2811, %v2807
    %v3808 = vpack.c.b16 %v2816, %v2812
    %v3809 = vpack.c.b16 %v2817, %v2813
    %v3810 = vpack.c.b16 %v2818, %v2814
    %v3811 = vpack.c.b16 %v2819, %v2815
    %v3812 = vpack.c.b16 %v2824, %v2820
    %v3813 = vpack.c.b16 %v2825, %v2821
    %v3814 = vpack.c.b16 %v2826, %v2822
    %v3815 = vpack.c.b16 %v2827, %v2823
    %v3816 = vpack.c.b16 %v2832, %v2828
    %v3817 = vpack.c.b16 %v2833, %v2829
    %v3818 = vpack.c.b16 %v2834, %v2830
    %v3819 = vpack.c.b16 %v2835, %v2831
    %v3820 = vpack.c.b16 %v2840, %v2836
    %v3821 = vpack.c.b16 %v2841, %v2837
    %v3822 = vpack.c.b16 %v2842, %v2838
    %v3823 = vpack.c.b16 %v2843, %v2839
    %v3824 = vpack.c.b16 %v2848, %v2844
    %v3825 = vpack.c.b16 %v2849, %v2845
    %v3826 = vpack.c.b16 %v2850, %v2846
    %v3827 = vpack.c.b16 %v2851, %v2847
    %v3828 = vpack.c.b16 %v2856, %v2852
    %v3829 = vpack.c.b16 %v2857, %v2853
    %v3830 = vpack.c.b16 %v2858, %v2854
    %v3831 = vpack.c.b16 %v2859, %v2855
    %v3832 = vpack.c.b16 %v2864, %v2860
    %v3833 = vpack.c.b16 %v2865, %v2861
    %v3834 = vpack.c.b16 %v2866, %v2862
    %v3835 = vpack.c.b16 %v2867, %v2863
    %v3836 = vpack.c.b16 %v2872, %v2868
    %v3837 = vpack.c.b16 %v2873, %v2869
    %v3838 = vpack.c.b16 %v2874, %v2870
    %v3839 = vpack.c.b16 %v2875, %v2871
    %v3840 = vpack.c.b16 %v2880, %v2876
    %v3841 = vpack.c.b16 %v2881, %v2877
    %v3842 = vpack.c.b16 %v2882, %v2878
    %v3843 = vpack.c.b16 %v2883, %v2879
    %v3844 = vpack.c.b16 %v2888, %v2884
    %v3845 = vpack.c.b16 %v2889, %v2885
    %v3846 = vpack.c.b16 %v2890, %v2886
    %v3847 = vpack.c.b16 %v2891, %v2887
    %v3848 = vpack.c.b16 %v2896, %v2892
    %v3849 = vpack.c.b16 %v2897, %v2893
    %v3850 = vpack.c.b16 %v2898, %v2894
    %v3851 = vpack.c.b16 %v2899, %v2895
    %v3852 = vpack.c.b16 %v2904, %v2900
    %v3853 = vpack.c.b16 %v2905, %v2901
    %v3854 = vpack.c.b16 %v2906, %v2902
    %v3855 = vpack.c.b16 %v2907, %v2903
    %v3856 = vpack.c.b16 %v2912, %v2908
    %v3857 = vpack.c.b16 %v2913, %v2909
    %v3858 = vpack.c.b16 %v2914, %v2910
    %v3859 = vpack.c.b16 %v2915, %v2911
    %v3860 = vpack.c.b16 %v2920, %v2916
    %v3861 = vpack.c.b16 %v2921, %v2917
    %v3862 = vpack.c.b16 %v2922, %v2918
    %v3863 = vpack.c.b16 %v2923, %v2919
    %v3864 = vpack.c.b16 %v2928, %v2924
    %v3865 = vpack.c.b16 %v2929, %v2925
    %v3866 = vpack.c.b16 %v2930, %v2926
    %v3867 = vpack.c.b16 %v2931, %v2927
    %v3868 = vpack.c.b16 %v2936, %v2932
    %v3869 = vpack.c.b16 %v2937, %v2933
    %v3870 = vpack.c.b16 %v2938, %v2934
    %v3871 = vpack.c.b16 %v2939, %v2935
    %v3872 = vpack.c.b16 %v2944, %v2940
    %v3873 = vpack.c.b16 %v2945, %v2941
    %v3874 = vpack.c.b16 %v2946, %v2942
    %v3875 = vpack.c.b16 %v2947, %v2943
    %v3876 = vpack.c.b16 %v2952, %v2948
    %v3877 = vpack.c.b16 %v2953, %v2949
    %v3878 = vpack.c.b16 %v2954, %v2950
    %v3879 = vpack.c.b16 %v2955, %v2951
    %v3880 = vpack.c.b16 %v2960, %v2956
    %v3881 = vpack.c.b16 %v2961, %v2957
    %v3882 = vpack.c.b16 %v2962, %v2958
    %v3883 = vpack.c.b16 %v2963, %v2959
    %v3884 = vpack.c.b16 %v2968, %v2964
    %v3885 = vpack.c.b16 %v2969, %v2965
    %v3886 = vpack.c.b16 %v2970, %v2966
    %v3887 = vpack.c.b16 %v2971, %v2967
    %v3888 = vpack.c.b16 %v2976, %v2972
    %v3889 = vpack.c.b16 %v2977, %v2973
    %v3890 = vpack.c.b16 %v2978, %v2974
    %v3891 = vpack.c.b16 %v2979, %v2975
    %v3892 = vpack.c.b16 %v2984, %v2980
    %v3893 = vpack.c.b16 %v2985, %v2981
    %v3894 = vpack.c.b16 %v2986, %v2982
    %v3895 = vpack.c.b16 %v2987, %v2983
    %v3896 = vpack.c.b16 %v2992, %v2988
    %v3897 = vpack.c.b16 %v2993, %v2989
    %v3898 = vpack.c.b16 %v2994, %v2990
    %v3899 = vpack.c.b16 %v2995, %v2991
    %v3900 = vpack.c.b16 %v3000, %v2996
    %v3901 = vpack.c.b16 %v3001, %v2997
    %v3902 = vpack.c.b16 %v3002, %v2998
    %v3903 = vpack.c.b16 %v3003, %v2999
    %v3904 = vpack.c.b16 %v3008, %v3004
    %v3905 = vpack.c.b16 %v3009, %v3005
    %v3906 = vpack.c.b16 %v3010, %v3006
    %v3907 = vpack.c.b16 %v3011, %v3007
    %v3908 = vpack.c.b16 %v3016, %v3012
    %v3909 = vpack.c.b16 %v3017, %v3013
    %v3910 = vpack.c.b16 %v3018, %v3014
    %v3911 = vpack.c.b16 %v3019, %v3015
    %v3912 = vpack.c.b16 %v3024, %v3020
    %v3913 = vpack.c.b16 %v3025, %v3021
    %v3914 = vpack.c.b16 %v3026, %v3022
    %v3915 = vpack.c.b16 %v3027, %v3023
    %v3916 = vpack.c.b16 %v3032, %v3028
    %v3917 = vpack.c.b16 %v3033, %v3029
    %v3918 = vpack.c.b16 %v3034, %v3030
    %v3919 = vpack.c.b16 %v3035, %v3031
    %v3920 = vpack.c.b16 %v3040, %v3036
    %v3921 = vpack.c.b16 %v3041, %v3037
    %v3922 = vpack.c.b16 %v3042, %v3038
    %v3923 = vpack.c.b16 %v3043, %v3039
    %v3924 = vpack.c.b16 %v3048, %v3044
    %v3925 = vpack.c.b16 %v3049, %v3045
    %v3926 = vpack.c.b16 %v3050, %v3046
    %v3927 = vpack.c.b16 %v3051, %v3047
    %v3928 = vpack.c.b16 %v3056, %v3052
    %v3929 = vpack.c.b16 %v3057, %v3053
    %v3930 = vpack.c.b16 %v3058, %v3054
    %v3931 = vpack.c.b16 %v3059, %v3055
    %v3932 = vpack.c.b16 %v3064, %v3060
    %v3933 = vpack.c.b16 %v3065, %v3061
    %v3934 = vpack.c.b16 %v3066, %v3062
    %v3935 = vpack.c.b16 %v3067, %v3063
    %v3936 = vpack.c.b16 %v3072, %v3068
    %v3937 = vpack.c.b16 %v3073, %v3069
    %v3938 = vpack.c.b16 %v3074, %v3070
    %v3939 = vpack.c.b16 %v3075, %v3071
    %v3940 = vpack.c.b16 %v3080, %v3076
    %v3941 = vpack.c.b16 %v3081, %v3077
    %v3942 = vpack.c.b16 %v3082, %v3078
    %v3943 = vpack.c.b16 %v3083, %v3079
    %v3944 = vpack.c.b16 %v3088, %v3084
    %v3945 = vpack.c.b16 %v3089, %v3085
    %v3946 = vpack.c.b16 %v3090, %v3086
    %v3947 = vpack.c.b16 %v3091, %v3087
    %v3948 = vpack.c.b16 %v3096, %v3092
    %v3949 = vpack.c.b16 %v3097, %v3093
    %v3950 = vpack.c.b16 %v3098, %v3094
    %v3951 = vpack.c.b16 %v3099, %v3095
    %v3952 = vpack.c.b16 %v3104, %v3100
    %v3953 = vpack.c.b16 %v3105, %v3101
    %v3954 = vpack.c.b16 %v3106, %v3102
    %v3955 = vpack.c.b16 %v3107, %v3103
    %v3956 = vpack.c.b16 %v3112, %v3108
    %v3957 = vpack.c.b16 %v3113, %v3109
    %v3958 = vpack.c.b16 %v3114, %v3110
    %v3959 = vpack.c.b16 %v3115, %v3111
    %v3960 = vpack.c.b16 %v3120, %v3116
    %v3961 = vpack.c.b16 %v3121, %v3117
    %v3962 = vpack.c.b16 %v3122, %v3118
    %v3963 = vpack.c.b16 %v3123, %v3119
    %v3964 = vpack.c.b16 %v3128, %v3124
    %v3965 = vpack.c.b16 %v3129, %v3125
    %v3966 = vpack.c.b16 %v3130, %v3126
    %v3967 = vpack.c.b16 %v3131, %v3127
    %v3968 = vpack.c.b16 %v3136, %v3132
    %v3969 = vpack.c.b16 %v3137, %v3133
    %v3970 = vpack.c.b16 %v3138, %v3134
    %v3971 = vpack.c.b16 %v3139, %v3135
    %v3972 = vpack.c.b16 %v3144, %v3140
    %v3973 = vpack.c.b16 %v3145, %v3141
    %v3974 = vpack.c.b16 %v3146, %v3142
    %v3975 = vpack.c.b16 %v3147, %v3143
    %v3976 = vpack.c.b16 %v3152, %v3148
    %v3977 = vpack.c.b16 %v3153, %v3149
    %v3978 = vpack.c.b16 %v3154, %v3150
    %v3979 = vpack.c.b16 %v3155, %v3151
    %v3980 = vpack.c.b16 %v3160, %v3156
    %v3981 = vpack.c.b16 %v3161, %v3157
    %v3982 = vpack.c.b16 %v3162, %v3158
    %v3983 = vpack.c.b16 %v3163, %v3159
    %v3984 = vpack.c.b16 %v3168, %v3164
    %v3985 = vpack.c.b16 %v3169, %v3165
    %v3986 = vpack.c.b16 %v3170, %v3166
    %v3987 = vpack.c.b16 %v3171, %v3167
    %v3988 = vpack.c.b16 %v3176, %v3172
    %v3989 = vpack.c.b16 %v3177, %v3173
    %v3990 = vpack.c.b16 %v3178, %v3174
    %v3991 = vpack.c.b16 %v3179, %v3175
    %v3992 = vpack.c.b16 %v3184, %v3180
    %v3993 = vpack.c.b16 %v3185, %v3181
    %v3994 = vpack.c.b16 %v3186, %v3182
    %v3995 = vpack.c.b16 %v3187, %v3183
    %v3996 = vpack.c.b16 %v3192, %v3188
    %v3997 = vpack.c.b16 %v3193, %v3189
    %v3998 = vpack.c.b16 %v3194, %v3190
    %v3999 = vpack.c.b16 %v3195, %v3191
    %v4000 = vpack.c.b16 %v3200, %v3196
    %v4001 = vpack.c.b16 %v3201, %v3197
    %v4002 = vpack.c.b16 %v3202, %v3198
    %v4003 = vpack.c.b16 %v3203, %v3199
    %v4004 = vpack.c.b16 %v3208, %v3204
    %v4005 = vpack.c.b16 %v3209, %v3205
    %v4006 = vpack.c.b16 %v3210, %v3206
    %v4007 = vpack.c.b16 %v3211, %v3207
    %v4008 = vpack.c.b16 %v3216, %v3212
    %v4009 = vpack.c.b16 %v3217, %v3213
    %v4010 = vpack.c.b16 %v3218, %v3214
    %v4011 = vpack.c.b16 %v3219, %v3215
    %v4012 = vpack.c.b16 %v3224, %v3220
    %v4013 = vpack.c.b16 %v3225, %v3221
    %v4014 = vpack.c.b16 %v3226, %v3222
    %v4015 = vpack.c.b16 %v3227, %v3223
    %v4016 = vpack.c.b16 %v3232, %v3228
    %v4017 = vpack.c.b16 %v3233, %v3229
    %v4018 = vpack.c.b16 %v3234, %v3230
    %v4019 = vpack.c.b16 %v3235, %v3231
    %v4020 = vpack.c.b16 %v3240, %v3236
    %v4021 = vpack.c.b16 %v3241, %v3237
    %v4022 = vpack.c.b16 %v3242, %v3238
    %v4023 = vpack.c.b16 %v3243, %v3239
    %v4024 = vpack.c.b16 %v3248, %v3244
    %v4025 = vpack.c.b16 %v3249, %v3245
    %v4026 = vpack.c.b16 %v3250, %v3246
    %v4027 = vpack.c.b16 %v3251, %v3247
    %v4028 = vpack.c.b16 %v3256, %v3252
    %v4029 = vpack.c.b16 %v3257, %v3253
    %v4030 = vpack.c.b16 %v3258, %v3254
    %v4031 = vpack.c.b16 %v3259, %v3255
    %v4032 = vpack.c.b16 %v3264, %v3260
    %v4033 = vpack.c.b16 %v3265, %v3261
    %v4034 = vpack.c.b16 %v3266, %v3262
    %v4035 = vpack.c.b16 %v3267, %v3263
    %4804 = vmatpush.bf16.msra.mxu0 %v3296
    %4805 = vmatpush.bf16.msra.mxu0 %v3292
    %4806 = vmatpush.bf16.msra.mxu0 %v3288
    %4807 = vmatpush.bf16.msra.mxu0 %v3284
    %4808 = vmatpush.bf16.msra.mxu0 %v3280
    %4809 = vmatpush.bf16.msra.mxu0 %v3276
    %4810 = vmatpush.bf16.msra.mxu0 %v3272
    %4811 = vmatpush.bf16.msra.mxu0 %v3268
    %4812 = vmatmul.bf16.gmra.mxu0 %v162
    %v4813 = vpop.f32.mrf.mxu0
    %v4814 = vadd.f32 %v956, %v4813
    %v4815 = vpop.f32.mrf.mxu0
    %v4816 = vadd.f32 %v956, %v4815
    %4817 = vdwg.mxu0
    %4818 = vmatpush.bf16.msra.mxu0 %v3328
    %4819 = vmatpush.bf16.msra.mxu0 %v3324
    %4820 = vmatpush.bf16.msra.mxu0 %v3320
    %4821 = vmatpush.bf16.msra.mxu0 %v3316
    %4822 = vmatpush.bf16.msra.mxu0 %v3312
    %4823 = vmatpush.bf16.msra.mxu0 %v3308
    %4824 = vmatpush.bf16.msra.mxu0 %v3304
    %4825 = vmatpush.bf16.msra.mxu0 %v3300
    %4826 = vmatmul.bf16.gmra.mxu0 %v163
    %v4827 = vpop.f32.mrf.mxu0
    %v4828 = vadd.f32 %v4814, %v4827
    %v4829 = vpop.f32.mrf.mxu0
    %v4830 = vadd.f32 %v4816, %v4829
    %4831 = vdwg.mxu0
    %4832 = vmatpush.bf16.msra.mxu0 %v3360
    %4833 = vmatpush.bf16.msra.mxu0 %v3356
    %4834 = vmatpush.bf16.msra.mxu0 %v3352
    %4835 = vmatpush.bf16.msra.mxu0 %v3348
    %4836 = vmatpush.bf16.msra.mxu0 %v3344
    %4837 = vmatpush.bf16.msra.mxu0 %v3340
    %4838 = vmatpush.bf16.msra.mxu0 %v3336
    %4839 = vmatpush.bf16.msra.mxu0 %v3332
    %4840 = vmatmul.bf16.gmra.mxu0 %v164
    %v4841 = vpop.f32.mrf.mxu0
    %v4842 = vadd.f32 %v4828, %v4841
    %v4843 = vpop.f32.mrf.mxu0
    %v4844 = vadd.f32 %v4830, %v4843
    %4845 = vdwg.mxu0
    %4846 = vmatpush.bf16.msra.mxu0 %v3392
    %4847 = vmatpush.bf16.msra.mxu0 %v3388
    %4848 = vmatpush.bf16.msra.mxu0 %v3384
    %4849 = vmatpush.bf16.msra.mxu0 %v3380
    %4850 = vmatpush.bf16.msra.mxu0 %v3376
    %4851 = vmatpush.bf16.msra.mxu0 %v3372
    %4852 = vmatpush.bf16.msra.mxu0 %v3368
    %4853 = vmatpush.bf16.msra.mxu0 %v3364
    %4854 = vmatmul.bf16.gmra.mxu0 %v165
    %v4855 = vpop.f32.mrf.mxu0
    %v4856 = vadd.f32 %v4842, %v4855
    %v4857 = vpop.f32.mrf.mxu0
    %v4858 = vadd.f32 %v4844, %v4857
    %4859 = vdwg.mxu0
    %4860 = vmatpush.bf16.msra.mxu0 %v3424
    %4861 = vmatpush.bf16.msra.mxu0 %v3420
    %4862 = vmatpush.bf16.msra.mxu0 %v3416
    %4863 = vmatpush.bf16.msra.mxu0 %v3412
    %4864 = vmatpush.bf16.msra.mxu0 %v3408
    %4865 = vmatpush.bf16.msra.mxu0 %v3404
    %4866 = vmatpush.bf16.msra.mxu0 %v3400
    %4867 = vmatpush.bf16.msra.mxu0 %v3396
    %4868 = vmatmul.bf16.gmra.mxu0 %v166
    %v4869 = vpop.f32.mrf.mxu0
    %v4870 = vadd.f32 %v4856, %v4869
    %v4871 = vpop.f32.mrf.mxu0
    %v4872 = vadd.f32 %v4858, %v4871
    %4873 = vdwg.mxu0
    %4874 = vmatpush.bf16.msra.mxu0 %v3456
    %4875 = vmatpush.bf16.msra.mxu0 %v3452
    %4876 = vmatpush.bf16.msra.mxu0 %v3448
    %4877 = vmatpush.bf16.msra.mxu0 %v3444
    %4878 = vmatpush.bf16.msra.mxu0 %v3440
    %4879 = vmatpush.bf16.msra.mxu0 %v3436
    %4880 = vmatpush.bf16.msra.mxu0 %v3432
    %4881 = vmatpush.bf16.msra.mxu0 %v3428
    %4882 = vmatmul.bf16.gmra.mxu0 %v167
    %v4883 = vpop.f32.mrf.mxu0
    %v4884 = vadd.f32 %v4870, %v4883
    %v4885 = vpop.f32.mrf.mxu0
    %v4886 = vadd.f32 %v4872, %v4885
    %4887 = vdwg.mxu0
    %4888 = vmatpush.bf16.msra.mxu0 %v3488
    %4889 = vmatpush.bf16.msra.mxu0 %v3484
    %4890 = vmatpush.bf16.msra.mxu0 %v3480
    %4891 = vmatpush.bf16.msra.mxu0 %v3476
    %4892 = vmatpush.bf16.msra.mxu0 %v3472
    %4893 = vmatpush.bf16.msra.mxu0 %v3468
    %4894 = vmatpush.bf16.msra.mxu0 %v3464
    %4895 = vmatpush.bf16.msra.mxu0 %v3460
    %4896 = vmatmul.bf16.gmra.mxu0 %v168
    %v4897 = vpop.f32.mrf.mxu0
    %v4898 = vadd.f32 %v4884, %v4897
    %v4899 = vpop.f32.mrf.mxu0
    %v4900 = vadd.f32 %v4886, %v4899
    %4901 = vdwg.mxu0
    %4902 = vmatpush.bf16.msra.mxu0 %v3520
    %4903 = vmatpush.bf16.msra.mxu0 %v3516
    %4904 = vmatpush.bf16.msra.mxu0 %v3512
    %4905 = vmatpush.bf16.msra.mxu0 %v3508
    %4906 = vmatpush.bf16.msra.mxu0 %v3504
    %4907 = vmatpush.bf16.msra.mxu0 %v3500
    %4908 = vmatpush.bf16.msra.mxu0 %v3496
    %4909 = vmatpush.bf16.msra.mxu0 %v3492
    %4910 = vmatmul.bf16.gmra.mxu0 %v169
    %v4911 = vpop.f32.mrf.mxu0
    %v4912 = vadd.f32 %v4898, %v4911
    %v4913 = vpop.f32.mrf.mxu0
    %v4914 = vadd.f32 %v4900, %v4913
    %4915 = vdwg.mxu0
    %4916 = vmatpush.bf16.msra.mxu0 %v3552
    %4917 = vmatpush.bf16.msra.mxu0 %v3548
    %4918 = vmatpush.bf16.msra.mxu0 %v3544
    %4919 = vmatpush.bf16.msra.mxu0 %v3540
    %4920 = vmatpush.bf16.msra.mxu0 %v3536
    %4921 = vmatpush.bf16.msra.mxu0 %v3532
    %4922 = vmatpush.bf16.msra.mxu0 %v3528
    %4923 = vmatpush.bf16.msra.mxu0 %v3524
    %4924 = vmatmul.bf16.gmra.mxu0 %v170
    %v4925 = vpop.f32.mrf.mxu0
    %v4926 = vadd.f32 %v4912, %v4925
    %v4927 = vpop.f32.mrf.mxu0
    %v4928 = vadd.f32 %v4914, %v4927
    %4929 = vdwg.mxu0
    %4930 = vmatpush.bf16.msra.mxu0 %v3584
    %4931 = vmatpush.bf16.msra.mxu0 %v3580
    %4932 = vmatpush.bf16.msra.mxu0 %v3576
    %4933 = vmatpush.bf16.msra.mxu0 %v3572
    %4934 = vmatpush.bf16.msra.mxu0 %v3568
    %4935 = vmatpush.bf16.msra.mxu0 %v3564
    %4936 = vmatpush.bf16.msra.mxu0 %v3560
    %4937 = vmatpush.bf16.msra.mxu0 %v3556
    %4938 = vmatmul.bf16.gmra.mxu0 %v171
    %v4939 = vpop.f32.mrf.mxu0
    %v4940 = vadd.f32 %v4926, %v4939
    %v4941 = vpop.f32.mrf.mxu0
    %v4942 = vadd.f32 %v4928, %v4941
    %4943 = vdwg.mxu0
    %4944 = vmatpush.bf16.msra.mxu0 %v3616
    %4945 = vmatpush.bf16.msra.mxu0 %v3612
    %4946 = vmatpush.bf16.msra.mxu0 %v3608
    %4947 = vmatpush.bf16.msra.mxu0 %v3604
    %4948 = vmatpush.bf16.msra.mxu0 %v3600
    %4949 = vmatpush.bf16.msra.mxu0 %v3596
    %4950 = vmatpush.bf16.msra.mxu0 %v3592
    %4951 = vmatpush.bf16.msra.mxu0 %v3588
    %4952 = vmatmul.bf16.gmra.mxu0 %v172
    %v4953 = vpop.f32.mrf.mxu0
    %v4954 = vadd.f32 %v4940, %v4953
    %v4955 = vpop.f32.mrf.mxu0
    %v4956 = vadd.f32 %v4942, %v4955
    %4957 = vdwg.mxu0
    %4958 = vmatpush.bf16.msra.mxu0 %v3648
    %4959 = vmatpush.bf16.msra.mxu0 %v3644
    %4960 = vmatpush.bf16.msra.mxu0 %v3640
    %4961 = vmatpush.bf16.msra.mxu0 %v3636
    %4962 = vmatpush.bf16.msra.mxu0 %v3632
    %4963 = vmatpush.bf16.msra.mxu0 %v3628
    %4964 = vmatpush.bf16.msra.mxu0 %v3624
    %4965 = vmatpush.bf16.msra.mxu0 %v3620
    %4966 = vmatmul.bf16.gmra.mxu0 %v173
    %v4967 = vpop.f32.mrf.mxu0
    %v4968 = vadd.f32 %v4954, %v4967
    %v4969 = vpop.f32.mrf.mxu0
    %v4970 = vadd.f32 %v4956, %v4969
    %4971 = vdwg.mxu0
    %4972 = vmatpush.bf16.msra.mxu0 %v3680
    %4973 = vmatpush.bf16.msra.mxu0 %v3676
    %4974 = vmatpush.bf16.msra.mxu0 %v3672
    %4975 = vmatpush.bf16.msra.mxu0 %v3668
    %4976 = vmatpush.bf16.msra.mxu0 %v3664
    %4977 = vmatpush.bf16.msra.mxu0 %v3660
    %4978 = vmatpush.bf16.msra.mxu0 %v3656
    %4979 = vmatpush.bf16.msra.mxu0 %v3652
    %4980 = vmatmul.bf16.gmra.mxu0 %v174
    %v4981 = vpop.f32.mrf.mxu0
    %v4982 = vadd.f32 %v4968, %v4981
    %v4983 = vpop.f32.mrf.mxu0
    %v4984 = vadd.f32 %v4970, %v4983
    %4985 = vdwg.mxu0
    %4986 = vmatpush.bf16.msra.mxu0 %v3712
    %4987 = vmatpush.bf16.msra.mxu0 %v3708
    %4988 = vmatpush.bf16.msra.mxu0 %v3704
    %4989 = vmatpush.bf16.msra.mxu0 %v3700
    %4990 = vmatpush.bf16.msra.mxu0 %v3696
    %4991 = vmatpush.bf16.msra.mxu0 %v3692
    %4992 = vmatpush.bf16.msra.mxu0 %v3688
    %4993 = vmatpush.bf16.msra.mxu0 %v3684
    %4994 = vmatmul.bf16.gmra.mxu0 %v175
    %v4995 = vpop.f32.mrf.mxu0
    %v4996 = vadd.f32 %v4982, %v4995
    %v4997 = vpop.f32.mrf.mxu0
    %v4998 = vadd.f32 %v4984, %v4997
    %4999 = vdwg.mxu0
    %5000 = vmatpush.bf16.msra.mxu0 %v3744
    %5001 = vmatpush.bf16.msra.mxu0 %v3740
    %5002 = vmatpush.bf16.msra.mxu0 %v3736
    %5003 = vmatpush.bf16.msra.mxu0 %v3732
    %5004 = vmatpush.bf16.msra.mxu0 %v3728
    %5005 = vmatpush.bf16.msra.mxu0 %v3724
    %5006 = vmatpush.bf16.msra.mxu0 %v3720
    %5007 = vmatpush.bf16.msra.mxu0 %v3716
    %5008 = vmatmul.bf16.gmra.mxu0 %v176
    %v5009 = vpop.f32.mrf.mxu0
    %v5010 = vadd.f32 %v4996, %v5009
    %v5011 = vpop.f32.mrf.mxu0
    %v5012 = vadd.f32 %v4998, %v5011
    %5013 = vdwg.mxu0
    %5014 = vmatpush.bf16.msra.mxu0 %v3776
    %5015 = vmatpush.bf16.msra.mxu0 %v3772
    %5016 = vmatpush.bf16.msra.mxu0 %v3768
    %5017 = vmatpush.bf16.msra.mxu0 %v3764
    %5018 = vmatpush.bf16.msra.mxu0 %v3760
    %5019 = vmatpush.bf16.msra.mxu0 %v3756
    %5020 = vmatpush.bf16.msra.mxu0 %v3752
    %5021 = vmatpush.bf16.msra.mxu0 %v3748
    %5022 = vmatmul.bf16.gmra.mxu0 %v177
    %v5023 = vpop.f32.mrf.mxu0
    %v5024 = vadd.f32 %v5010, %v5023
    %v5025 = vpop.f32.mrf.mxu0
    %v5026 = vadd.f32 %v5012, %v5025
    %5027 = vdwg.mxu0
    %5028 = vmatpush.bf16.msra.mxu0 %v3808
    %5029 = vmatpush.bf16.msra.mxu0 %v3804
    %5030 = vmatpush.bf16.msra.mxu0 %v3800
    %5031 = vmatpush.bf16.msra.mxu0 %v3796
    %5032 = vmatpush.bf16.msra.mxu0 %v3792
    %5033 = vmatpush.bf16.msra.mxu0 %v3788
    %5034 = vmatpush.bf16.msra.mxu0 %v3784
    %5035 = vmatpush.bf16.msra.mxu0 %v3780
    %5036 = vmatmul.bf16.gmra.mxu0 %v178
    %v5037 = vpop.f32.mrf.mxu0
    %v5038 = vadd.f32 %v5024, %v5037
    %v5039 = vpop.f32.mrf.mxu0
    %v5040 = vadd.f32 %v5026, %v5039
    %5041 = vdwg.mxu0
    %5042 = vmatpush.bf16.msra.mxu0 %v3840
    %5043 = vmatpush.bf16.msra.mxu0 %v3836
    %5044 = vmatpush.bf16.msra.mxu0 %v3832
    %5045 = vmatpush.bf16.msra.mxu0 %v3828
    %5046 = vmatpush.bf16.msra.mxu0 %v3824
    %5047 = vmatpush.bf16.msra.mxu0 %v3820
    %5048 = vmatpush.bf16.msra.mxu0 %v3816
    %5049 = vmatpush.bf16.msra.mxu0 %v3812
    %5050 = vmatmul.bf16.gmra.mxu0 %v179
    %v5051 = vpop.f32.mrf.mxu0
    %v5052 = vadd.f32 %v5038, %v5051
    %v5053 = vpop.f32.mrf.mxu0
    %v5054 = vadd.f32 %v5040, %v5053
    %5055 = vdwg.mxu0
    %5056 = vmatpush.bf16.msra.mxu0 %v3872
    %5057 = vmatpush.bf16.msra.mxu0 %v3868
    %5058 = vmatpush.bf16.msra.mxu0 %v3864
    %5059 = vmatpush.bf16.msra.mxu0 %v3860
    %5060 = vmatpush.bf16.msra.mxu0 %v3856
    %5061 = vmatpush.bf16.msra.mxu0 %v3852
    %5062 = vmatpush.bf16.msra.mxu0 %v3848
    %5063 = vmatpush.bf16.msra.mxu0 %v3844
    %5064 = vmatmul.bf16.gmra.mxu0 %v180
    %v5065 = vpop.f32.mrf.mxu0
    %v5066 = vadd.f32 %v5052, %v5065
    %v5067 = vpop.f32.mrf.mxu0
    %v5068 = vadd.f32 %v5054, %v5067
    %5069 = vdwg.mxu0
    %5070 = vmatpush.bf16.msra.mxu0 %v3904
    %5071 = vmatpush.bf16.msra.mxu0 %v3900
    %5072 = vmatpush.bf16.msra.mxu0 %v3896
    %5073 = vmatpush.bf16.msra.mxu0 %v3892
    %5074 = vmatpush.bf16.msra.mxu0 %v3888
    %5075 = vmatpush.bf16.msra.mxu0 %v3884
    %5076 = vmatpush.bf16.msra.mxu0 %v3880
    %5077 = vmatpush.bf16.msra.mxu0 %v3876
    %5078 = vmatmul.bf16.gmra.mxu0 %v181
    %v5079 = vpop.f32.mrf.mxu0
    %v5080 = vadd.f32 %v5066, %v5079
    %v5081 = vpop.f32.mrf.mxu0
    %v5082 = vadd.f32 %v5068, %v5081
    %5083 = vdwg.mxu0
    %5084 = vmatpush.bf16.msra.mxu0 %v3936
    %5085 = vmatpush.bf16.msra.mxu0 %v3932
    %5086 = vmatpush.bf16.msra.mxu0 %v3928
    %5087 = vmatpush.bf16.msra.mxu0 %v3924
    %5088 = vmatpush.bf16.msra.mxu0 %v3920
    %5089 = vmatpush.bf16.msra.mxu0 %v3916
    %5090 = vmatpush.bf16.msra.mxu0 %v3912
    %5091 = vmatpush.bf16.msra.mxu0 %v3908
    %5092 = vmatmul.bf16.gmra.mxu0 %v182
    %v5093 = vpop.f32.mrf.mxu0
    %v5094 = vadd.f32 %v5080, %v5093
    %v5095 = vpop.f32.mrf.mxu0
    %v5096 = vadd.f32 %v5082, %v5095
    %5097 = vdwg.mxu0
    %5098 = vmatpush.bf16.msra.mxu0 %v3968
    %5099 = vmatpush.bf16.msra.mxu0 %v3964
    %5100 = vmatpush.bf16.msra.mxu0 %v3960
    %5101 = vmatpush.bf16.msra.mxu0 %v3956
    %5102 = vmatpush.bf16.msra.mxu0 %v3952
    %5103 = vmatpush.bf16.msra.mxu0 %v3948
    %5104 = vmatpush.bf16.msra.mxu0 %v3944
    %5105 = vmatpush.bf16.msra.mxu0 %v3940
    %5106 = vmatmul.bf16.gmra.mxu0 %v183
    %v5107 = vpop.f32.mrf.mxu0
    %v5108 = vadd.f32 %v5094, %v5107
    %v5109 = vpop.f32.mrf.mxu0
    %v5110 = vadd.f32 %v5096, %v5109
    %5111 = vdwg.mxu0
    %5112 = vmatpush.bf16.msra.mxu0 %v4000
    %5113 = vmatpush.bf16.msra.mxu0 %v3996
    %5114 = vmatpush.bf16.msra.mxu0 %v3992
    %5115 = vmatpush.bf16.msra.mxu0 %v3988
    %5116 = vmatpush.bf16.msra.mxu0 %v3984
    %5117 = vmatpush.bf16.msra.mxu0 %v3980
    %5118 = vmatpush.bf16.msra.mxu0 %v3976
    %5119 = vmatpush.bf16.msra.mxu0 %v3972
    %5120 = vmatmul.bf16.gmra.mxu0 %v184
    %v5121 = vpop.f32.mrf.mxu0
    %v5122 = vadd.f32 %v5108, %v5121
    %v5123 = vpop.f32.mrf.mxu0
    %v5124 = vadd.f32 %v5110, %v5123
    %5125 = vdwg.mxu0
    %5126 = vmatpush.bf16.msra.mxu0 %v4032
    %5127 = vmatpush.bf16.msra.mxu0 %v4028
    %5128 = vmatpush.bf16.msra.mxu0 %v4024
    %5129 = vmatpush.bf16.msra.mxu0 %v4020
    %5130 = vmatpush.bf16.msra.mxu0 %v4016
    %5131 = vmatpush.bf16.msra.mxu0 %v4012
    %5132 = vmatpush.bf16.msra.mxu0 %v4008
    %5133 = vmatpush.bf16.msra.mxu0 %v4004
    %5134 = vmatmul.bf16.gmra.mxu0 %v185
    %v5135 = vpop.f32.mrf.mxu0
    %v5136 = vadd.f32 %v5122, %v5135
    %v5137 = vpop.f32.mrf.mxu0
    %v5138 = vadd.f32 %v5124, %v5137
    %5139 = vdwg.mxu0
    %5140 = vmatpush.bf16.msra.mxu0 %v3297
    %5141 = vmatpush.bf16.msra.mxu0 %v3293
    %5142 = vmatpush.bf16.msra.mxu0 %v3289
    %5143 = vmatpush.bf16.msra.mxu0 %v3285
    %5144 = vmatpush.bf16.msra.mxu0 %v3281
    %5145 = vmatpush.bf16.msra.mxu0 %v3277
    %5146 = vmatpush.bf16.msra.mxu0 %v3273
    %5147 = vmatpush.bf16.msra.mxu0 %v3269
    %5148 = vmatmul.bf16.gmra.mxu0 %v162
    %v5149 = vpop.f32.mrf.mxu0
    %v5150 = vadd.f32 %v957, %v5149
    %v5151 = vpop.f32.mrf.mxu0
    %v5152 = vadd.f32 %v957, %v5151
    %5153 = vdwg.mxu0
    %5154 = vmatpush.bf16.msra.mxu0 %v3329
    %5155 = vmatpush.bf16.msra.mxu0 %v3325
    %5156 = vmatpush.bf16.msra.mxu0 %v3321
    %5157 = vmatpush.bf16.msra.mxu0 %v3317
    %5158 = vmatpush.bf16.msra.mxu0 %v3313
    %5159 = vmatpush.bf16.msra.mxu0 %v3309
    %5160 = vmatpush.bf16.msra.mxu0 %v3305
    %5161 = vmatpush.bf16.msra.mxu0 %v3301
    %5162 = vmatmul.bf16.gmra.mxu0 %v163
    %v5163 = vpop.f32.mrf.mxu0
    %v5164 = vadd.f32 %v5150, %v5163
    %v5165 = vpop.f32.mrf.mxu0
    %v5166 = vadd.f32 %v5152, %v5165
    %5167 = vdwg.mxu0
    %5168 = vmatpush.bf16.msra.mxu0 %v3361
    %5169 = vmatpush.bf16.msra.mxu0 %v3357
    %5170 = vmatpush.bf16.msra.mxu0 %v3353
    %5171 = vmatpush.bf16.msra.mxu0 %v3349
    %5172 = vmatpush.bf16.msra.mxu0 %v3345
    %5173 = vmatpush.bf16.msra.mxu0 %v3341
    %5174 = vmatpush.bf16.msra.mxu0 %v3337
    %5175 = vmatpush.bf16.msra.mxu0 %v3333
    %5176 = vmatmul.bf16.gmra.mxu0 %v164
    %v5177 = vpop.f32.mrf.mxu0
    %v5178 = vadd.f32 %v5164, %v5177
    %v5179 = vpop.f32.mrf.mxu0
    %v5180 = vadd.f32 %v5166, %v5179
    %5181 = vdwg.mxu0
    %5182 = vmatpush.bf16.msra.mxu0 %v3393
    %5183 = vmatpush.bf16.msra.mxu0 %v3389
    %5184 = vmatpush.bf16.msra.mxu0 %v3385
    %5185 = vmatpush.bf16.msra.mxu0 %v3381
    %5186 = vmatpush.bf16.msra.mxu0 %v3377
    %5187 = vmatpush.bf16.msra.mxu0 %v3373
    %5188 = vmatpush.bf16.msra.mxu0 %v3369
    %5189 = vmatpush.bf16.msra.mxu0 %v3365
    %5190 = vmatmul.bf16.gmra.mxu0 %v165
    %v5191 = vpop.f32.mrf.mxu0
    %v5192 = vadd.f32 %v5178, %v5191
    %v5193 = vpop.f32.mrf.mxu0
    %v5194 = vadd.f32 %v5180, %v5193
    %5195 = vdwg.mxu0
    %5196 = vmatpush.bf16.msra.mxu0 %v3425
    %5197 = vmatpush.bf16.msra.mxu0 %v3421
    %5198 = vmatpush.bf16.msra.mxu0 %v3417
    %5199 = vmatpush.bf16.msra.mxu0 %v3413
    %5200 = vmatpush.bf16.msra.mxu0 %v3409
    %5201 = vmatpush.bf16.msra.mxu0 %v3405
    %5202 = vmatpush.bf16.msra.mxu0 %v3401
    %5203 = vmatpush.bf16.msra.mxu0 %v3397
    %5204 = vmatmul.bf16.gmra.mxu0 %v166
    %v5205 = vpop.f32.mrf.mxu0
    %v5206 = vadd.f32 %v5192, %v5205
    %v5207 = vpop.f32.mrf.mxu0
    %v5208 = vadd.f32 %v5194, %v5207
    %5209 = vdwg.mxu0
    %5210 = vmatpush.bf16.msra.mxu0 %v3457
    %5211 = vmatpush.bf16.msra.mxu0 %v3453
    %5212 = vmatpush.bf16.msra.mxu0 %v3449
    %5213 = vmatpush.bf16.msra.mxu0 %v3445
    %5214 = vmatpush.bf16.msra.mxu0 %v3441
    %5215 = vmatpush.bf16.msra.mxu0 %v3437
    %5216 = vmatpush.bf16.msra.mxu0 %v3433
    %5217 = vmatpush.bf16.msra.mxu0 %v3429
    %5218 = vmatmul.bf16.gmra.mxu0 %v167
    %v5219 = vpop.f32.mrf.mxu0
    %v5220 = vadd.f32 %v5206, %v5219
    %v5221 = vpop.f32.mrf.mxu0
    %v5222 = vadd.f32 %v5208, %v5221
    %5223 = vdwg.mxu0
    %5224 = vmatpush.bf16.msra.mxu0 %v3489
    %5225 = vmatpush.bf16.msra.mxu0 %v3485
    %5226 = vmatpush.bf16.msra.mxu0 %v3481
    %5227 = vmatpush.bf16.msra.mxu0 %v3477
    %5228 = vmatpush.bf16.msra.mxu0 %v3473
    %5229 = vmatpush.bf16.msra.mxu0 %v3469
    %5230 = vmatpush.bf16.msra.mxu0 %v3465
    %5231 = vmatpush.bf16.msra.mxu0 %v3461
    %5232 = vmatmul.bf16.gmra.mxu0 %v168
    %v5233 = vpop.f32.mrf.mxu0
    %v5234 = vadd.f32 %v5220, %v5233
    %v5235 = vpop.f32.mrf.mxu0
    %v5236 = vadd.f32 %v5222, %v5235
    %5237 = vdwg.mxu0
    %5238 = vmatpush.bf16.msra.mxu0 %v3521
    %5239 = vmatpush.bf16.msra.mxu0 %v3517
    %5240 = vmatpush.bf16.msra.mxu0 %v3513
    %5241 = vmatpush.bf16.msra.mxu0 %v3509
    %5242 = vmatpush.bf16.msra.mxu0 %v3505
    %5243 = vmatpush.bf16.msra.mxu0 %v3501
    %5244 = vmatpush.bf16.msra.mxu0 %v3497
    %5245 = vmatpush.bf16.msra.mxu0 %v3493
    %5246 = vmatmul.bf16.gmra.mxu0 %v169
    %v5247 = vpop.f32.mrf.mxu0
    %v5248 = vadd.f32 %v5234, %v5247
    %v5249 = vpop.f32.mrf.mxu0
    %v5250 = vadd.f32 %v5236, %v5249
    %5251 = vdwg.mxu0
    %5252 = vmatpush.bf16.msra.mxu0 %v3553
    %5253 = vmatpush.bf16.msra.mxu0 %v3549
    %5254 = vmatpush.bf16.msra.mxu0 %v3545
    %5255 = vmatpush.bf16.msra.mxu0 %v3541
    %5256 = vmatpush.bf16.msra.mxu0 %v3537
    %5257 = vmatpush.bf16.msra.mxu0 %v3533
    %5258 = vmatpush.bf16.msra.mxu0 %v3529
    %5259 = vmatpush.bf16.msra.mxu0 %v3525
    %5260 = vmatmul.bf16.gmra.mxu0 %v170
    %v5261 = vpop.f32.mrf.mxu0
    %v5262 = vadd.f32 %v5248, %v5261
    %v5263 = vpop.f32.mrf.mxu0
    %v5264 = vadd.f32 %v5250, %v5263
    %5265 = vdwg.mxu0
    %5266 = vmatpush.bf16.msra.mxu0 %v3585
    %5267 = vmatpush.bf16.msra.mxu0 %v3581
    %5268 = vmatpush.bf16.msra.mxu0 %v3577
    %5269 = vmatpush.bf16.msra.mxu0 %v3573
    %5270 = vmatpush.bf16.msra.mxu0 %v3569
    %5271 = vmatpush.bf16.msra.mxu0 %v3565
    %5272 = vmatpush.bf16.msra.mxu0 %v3561
    %5273 = vmatpush.bf16.msra.mxu0 %v3557
    %5274 = vmatmul.bf16.gmra.mxu0 %v171
    %v5275 = vpop.f32.mrf.mxu0
    %v5276 = vadd.f32 %v5262, %v5275
    %v5277 = vpop.f32.mrf.mxu0
    %v5278 = vadd.f32 %v5264, %v5277
    %5279 = vdwg.mxu0
    %5280 = vmatpush.bf16.msra.mxu0 %v3617
    %5281 = vmatpush.bf16.msra.mxu0 %v3613
    %5282 = vmatpush.bf16.msra.mxu0 %v3609
    %5283 = vmatpush.bf16.msra.mxu0 %v3605
    %5284 = vmatpush.bf16.msra.mxu0 %v3601
    %5285 = vmatpush.bf16.msra.mxu0 %v3597
    %5286 = vmatpush.bf16.msra.mxu0 %v3593
    %5287 = vmatpush.bf16.msra.mxu0 %v3589
    %5288 = vmatmul.bf16.gmra.mxu0 %v172
    %v5289 = vpop.f32.mrf.mxu0
    %v5290 = vadd.f32 %v5276, %v5289
    %v5291 = vpop.f32.mrf.mxu0
    %v5292 = vadd.f32 %v5278, %v5291
    %5293 = vdwg.mxu0
    %5294 = vmatpush.bf16.msra.mxu0 %v3649
    %5295 = vmatpush.bf16.msra.mxu0 %v3645
    %5296 = vmatpush.bf16.msra.mxu0 %v3641
    %5297 = vmatpush.bf16.msra.mxu0 %v3637
    %5298 = vmatpush.bf16.msra.mxu0 %v3633
    %5299 = vmatpush.bf16.msra.mxu0 %v3629
    %5300 = vmatpush.bf16.msra.mxu0 %v3625
    %5301 = vmatpush.bf16.msra.mxu0 %v3621
    %5302 = vmatmul.bf16.gmra.mxu0 %v173
    %v5303 = vpop.f32.mrf.mxu0
    %v5304 = vadd.f32 %v5290, %v5303
    %v5305 = vpop.f32.mrf.mxu0
    %v5306 = vadd.f32 %v5292, %v5305
    %5307 = vdwg.mxu0
    %5308 = vmatpush.bf16.msra.mxu0 %v3681
    %5309 = vmatpush.bf16.msra.mxu0 %v3677
    %5310 = vmatpush.bf16.msra.mxu0 %v3673
    %5311 = vmatpush.bf16.msra.mxu0 %v3669
    %5312 = vmatpush.bf16.msra.mxu0 %v3665
    %5313 = vmatpush.bf16.msra.mxu0 %v3661
    %5314 = vmatpush.bf16.msra.mxu0 %v3657
    %5315 = vmatpush.bf16.msra.mxu0 %v3653
    %5316 = vmatmul.bf16.gmra.mxu0 %v174
    %v5317 = vpop.f32.mrf.mxu0
    %v5318 = vadd.f32 %v5304, %v5317
    %v5319 = vpop.f32.mrf.mxu0
    %v5320 = vadd.f32 %v5306, %v5319
    %5321 = vdwg.mxu0
    %5322 = vmatpush.bf16.msra.mxu0 %v3713
    %5323 = vmatpush.bf16.msra.mxu0 %v3709
    %5324 = vmatpush.bf16.msra.mxu0 %v3705
    %5325 = vmatpush.bf16.msra.mxu0 %v3701
    %5326 = vmatpush.bf16.msra.mxu0 %v3697
    %5327 = vmatpush.bf16.msra.mxu0 %v3693
    %5328 = vmatpush.bf16.msra.mxu0 %v3689
    %5329 = vmatpush.bf16.msra.mxu0 %v3685
    %5330 = vmatmul.bf16.gmra.mxu0 %v175
    %v5331 = vpop.f32.mrf.mxu0
    %v5332 = vadd.f32 %v5318, %v5331
    %v5333 = vpop.f32.mrf.mxu0
    %v5334 = vadd.f32 %v5320, %v5333
    %5335 = vdwg.mxu0
    %5336 = vmatpush.bf16.msra.mxu0 %v3745
    %5337 = vmatpush.bf16.msra.mxu0 %v3741
    %5338 = vmatpush.bf16.msra.mxu0 %v3737
    %5339 = vmatpush.bf16.msra.mxu0 %v3733
    %5340 = vmatpush.bf16.msra.mxu0 %v3729
    %5341 = vmatpush.bf16.msra.mxu0 %v3725
    %5342 = vmatpush.bf16.msra.mxu0 %v3721
    %5343 = vmatpush.bf16.msra.mxu0 %v3717
    %5344 = vmatmul.bf16.gmra.mxu0 %v176
    %v5345 = vpop.f32.mrf.mxu0
    %v5346 = vadd.f32 %v5332, %v5345
    %v5347 = vpop.f32.mrf.mxu0
    %v5348 = vadd.f32 %v5334, %v5347
    %5349 = vdwg.mxu0
    %5350 = vmatpush.bf16.msra.mxu0 %v3777
    %5351 = vmatpush.bf16.msra.mxu0 %v3773
    %5352 = vmatpush.bf16.msra.mxu0 %v3769
    %5353 = vmatpush.bf16.msra.mxu0 %v3765
    %5354 = vmatpush.bf16.msra.mxu0 %v3761
    %5355 = vmatpush.bf16.msra.mxu0 %v3757
    %5356 = vmatpush.bf16.msra.mxu0 %v3753
    %5357 = vmatpush.bf16.msra.mxu0 %v3749
    %5358 = vmatmul.bf16.gmra.mxu0 %v177
    %v5359 = vpop.f32.mrf.mxu0
    %v5360 = vadd.f32 %v5346, %v5359
    %v5361 = vpop.f32.mrf.mxu0
    %v5362 = vadd.f32 %v5348, %v5361
    %5363 = vdwg.mxu0
    %5364 = vmatpush.bf16.msra.mxu0 %v3809
    %5365 = vmatpush.bf16.msra.mxu0 %v3805
    %5366 = vmatpush.bf16.msra.mxu0 %v3801
    %5367 = vmatpush.bf16.msra.mxu0 %v3797
    %5368 = vmatpush.bf16.msra.mxu0 %v3793
    %5369 = vmatpush.bf16.msra.mxu0 %v3789
    %5370 = vmatpush.bf16.msra.mxu0 %v3785
    %5371 = vmatpush.bf16.msra.mxu0 %v3781
    %5372 = vmatmul.bf16.gmra.mxu0 %v178
    %v5373 = vpop.f32.mrf.mxu0
    %v5374 = vadd.f32 %v5360, %v5373
    %v5375 = vpop.f32.mrf.mxu0
    %v5376 = vadd.f32 %v5362, %v5375
    %5377 = vdwg.mxu0
    %5378 = vmatpush.bf16.msra.mxu0 %v3841
    %5379 = vmatpush.bf16.msra.mxu0 %v3837
    %5380 = vmatpush.bf16.msra.mxu0 %v3833
    %5381 = vmatpush.bf16.msra.mxu0 %v3829
    %5382 = vmatpush.bf16.msra.mxu0 %v3825
    %5383 = vmatpush.bf16.msra.mxu0 %v3821
    %5384 = vmatpush.bf16.msra.mxu0 %v3817
    %5385 = vmatpush.bf16.msra.mxu0 %v3813
    %5386 = vmatmul.bf16.gmra.mxu0 %v179
    %v5387 = vpop.f32.mrf.mxu0
    %v5388 = vadd.f32 %v5374, %v5387
    %v5389 = vpop.f32.mrf.mxu0
    %v5390 = vadd.f32 %v5376, %v5389
    %5391 = vdwg.mxu0
    %5392 = vmatpush.bf16.msra.mxu0 %v3873
    %5393 = vmatpush.bf16.msra.mxu0 %v3869
    %5394 = vmatpush.bf16.msra.mxu0 %v3865
    %5395 = vmatpush.bf16.msra.mxu0 %v3861
    %5396 = vmatpush.bf16.msra.mxu0 %v3857
    %5397 = vmatpush.bf16.msra.mxu0 %v3853
    %5398 = vmatpush.bf16.msra.mxu0 %v3849
    %5399 = vmatpush.bf16.msra.mxu0 %v3845
    %5400 = vmatmul.bf16.gmra.mxu0 %v180
    %v5401 = vpop.f32.mrf.mxu0
    %v5402 = vadd.f32 %v5388, %v5401
    %v5403 = vpop.f32.mrf.mxu0
    %v5404 = vadd.f32 %v5390, %v5403
    %5405 = vdwg.mxu0
    %5406 = vmatpush.bf16.msra.mxu0 %v3905
    %5407 = vmatpush.bf16.msra.mxu0 %v3901
    %5408 = vmatpush.bf16.msra.mxu0 %v3897
    %5409 = vmatpush.bf16.msra.mxu0 %v3893
    %5410 = vmatpush.bf16.msra.mxu0 %v3889
    %5411 = vmatpush.bf16.msra.mxu0 %v3885
    %5412 = vmatpush.bf16.msra.mxu0 %v3881
    %5413 = vmatpush.bf16.msra.mxu0 %v3877
    %5414 = vmatmul.bf16.gmra.mxu0 %v181
    %v5415 = vpop.f32.mrf.mxu0
    %v5416 = vadd.f32 %v5402, %v5415
    %v5417 = vpop.f32.mrf.mxu0
    %v5418 = vadd.f32 %v5404, %v5417
    %5419 = vdwg.mxu0
    %5420 = vmatpush.bf16.msra.mxu0 %v3937
    %5421 = vmatpush.bf16.msra.mxu0 %v3933
    %5422 = vmatpush.bf16.msra.mxu0 %v3929
    %5423 = vmatpush.bf16.msra.mxu0 %v3925
    %5424 = vmatpush.bf16.msra.mxu0 %v3921
    %5425 = vmatpush.bf16.msra.mxu0 %v3917
    %5426 = vmatpush.bf16.msra.mxu0 %v3913
    %5427 = vmatpush.bf16.msra.mxu0 %v3909
    %5428 = vmatmul.bf16.gmra.mxu0 %v182
    %v5429 = vpop.f32.mrf.mxu0
    %v5430 = vadd.f32 %v5416, %v5429
    %v5431 = vpop.f32.mrf.mxu0
    %v5432 = vadd.f32 %v5418, %v5431
    %5433 = vdwg.mxu0
    %5434 = vmatpush.bf16.msra.mxu0 %v3969
    %5435 = vmatpush.bf16.msra.mxu0 %v3965
    %5436 = vmatpush.bf16.msra.mxu0 %v3961
    %5437 = vmatpush.bf16.msra.mxu0 %v3957
    %5438 = vmatpush.bf16.msra.mxu0 %v3953
    %5439 = vmatpush.bf16.msra.mxu0 %v3949
    %5440 = vmatpush.bf16.msra.mxu0 %v3945
    %5441 = vmatpush.bf16.msra.mxu0 %v3941
    %5442 = vmatmul.bf16.gmra.mxu0 %v183
    %v5443 = vpop.f32.mrf.mxu0
    %v5444 = vadd.f32 %v5430, %v5443
    %v5445 = vpop.f32.mrf.mxu0
    %v5446 = vadd.f32 %v5432, %v5445
    %5447 = vdwg.mxu0
    %5448 = vmatpush.bf16.msra.mxu0 %v4001
    %5449 = vmatpush.bf16.msra.mxu0 %v3997
    %5450 = vmatpush.bf16.msra.mxu0 %v3993
    %5451 = vmatpush.bf16.msra.mxu0 %v3989
    %5452 = vmatpush.bf16.msra.mxu0 %v3985
    %5453 = vmatpush.bf16.msra.mxu0 %v3981
    %5454 = vmatpush.bf16.msra.mxu0 %v3977
    %5455 = vmatpush.bf16.msra.mxu0 %v3973
    %5456 = vmatmul.bf16.gmra.mxu0 %v184
    %v5457 = vpop.f32.mrf.mxu0
    %v5458 = vadd.f32 %v5444, %v5457
    %v5459 = vpop.f32.mrf.mxu0
    %v5460 = vadd.f32 %v5446, %v5459
    %5461 = vdwg.mxu0
    %5462 = vmatpush.bf16.msra.mxu0 %v4033
    %5463 = vmatpush.bf16.msra.mxu0 %v4029
    %5464 = vmatpush.bf16.msra.mxu0 %v4025
    %5465 = vmatpush.bf16.msra.mxu0 %v4021
    %5466 = vmatpush.bf16.msra.mxu0 %v4017
    %5467 = vmatpush.bf16.msra.mxu0 %v4013
    %5468 = vmatpush.bf16.msra.mxu0 %v4009
    %5469 = vmatpush.bf16.msra.mxu0 %v4005
    %5470 = vmatmul.bf16.gmra.mxu0 %v185
    %v5471 = vpop.f32.mrf.mxu0
    %v5472 = vadd.f32 %v5458, %v5471
    %v5473 = vpop.f32.mrf.mxu0
    %v5474 = vadd.f32 %v5460, %v5473
    %5475 = vdwg.mxu0
    %5476 = vmatpush.bf16.msra.mxu0 %v3298
    %5477 = vmatpush.bf16.msra.mxu0 %v3294
    %5478 = vmatpush.bf16.msra.mxu0 %v3290
    %5479 = vmatpush.bf16.msra.mxu0 %v3286
    %5480 = vmatpush.bf16.msra.mxu0 %v3282
    %5481 = vmatpush.bf16.msra.mxu0 %v3278
    %5482 = vmatpush.bf16.msra.mxu0 %v3274
    %5483 = vmatpush.bf16.msra.mxu0 %v3270
    %5484 = vmatmul.bf16.gmra.mxu0 %v162
    %v5485 = vpop.f32.mrf.mxu0
    %v5486 = vadd.f32 %v958, %v5485
    %v5487 = vpop.f32.mrf.mxu0
    %v5488 = vadd.f32 %v958, %v5487
    %5489 = vdwg.mxu0
    %5490 = vmatpush.bf16.msra.mxu0 %v3330
    %5491 = vmatpush.bf16.msra.mxu0 %v3326
    %5492 = vmatpush.bf16.msra.mxu0 %v3322
    %5493 = vmatpush.bf16.msra.mxu0 %v3318
    %5494 = vmatpush.bf16.msra.mxu0 %v3314
    %5495 = vmatpush.bf16.msra.mxu0 %v3310
    %5496 = vmatpush.bf16.msra.mxu0 %v3306
    %5497 = vmatpush.bf16.msra.mxu0 %v3302
    %5498 = vmatmul.bf16.gmra.mxu0 %v163
    %v5499 = vpop.f32.mrf.mxu0
    %v5500 = vadd.f32 %v5486, %v5499
    %v5501 = vpop.f32.mrf.mxu0
    %v5502 = vadd.f32 %v5488, %v5501
    %5503 = vdwg.mxu0
    %5504 = vmatpush.bf16.msra.mxu0 %v3362
    %5505 = vmatpush.bf16.msra.mxu0 %v3358
    %5506 = vmatpush.bf16.msra.mxu0 %v3354
    %5507 = vmatpush.bf16.msra.mxu0 %v3350
    %5508 = vmatpush.bf16.msra.mxu0 %v3346
    %5509 = vmatpush.bf16.msra.mxu0 %v3342
    %5510 = vmatpush.bf16.msra.mxu0 %v3338
    %5511 = vmatpush.bf16.msra.mxu0 %v3334
    %5512 = vmatmul.bf16.gmra.mxu0 %v164
    %v5513 = vpop.f32.mrf.mxu0
    %v5514 = vadd.f32 %v5500, %v5513
    %v5515 = vpop.f32.mrf.mxu0
    %v5516 = vadd.f32 %v5502, %v5515
    %5517 = vdwg.mxu0
    %5518 = vmatpush.bf16.msra.mxu0 %v3394
    %5519 = vmatpush.bf16.msra.mxu0 %v3390
    %5520 = vmatpush.bf16.msra.mxu0 %v3386
    %5521 = vmatpush.bf16.msra.mxu0 %v3382
    %5522 = vmatpush.bf16.msra.mxu0 %v3378
    %5523 = vmatpush.bf16.msra.mxu0 %v3374
    %5524 = vmatpush.bf16.msra.mxu0 %v3370
    %5525 = vmatpush.bf16.msra.mxu0 %v3366
    %5526 = vmatmul.bf16.gmra.mxu0 %v165
    %v5527 = vpop.f32.mrf.mxu0
    %v5528 = vadd.f32 %v5514, %v5527
    %v5529 = vpop.f32.mrf.mxu0
    %v5530 = vadd.f32 %v5516, %v5529
    %5531 = vdwg.mxu0
    %5532 = vmatpush.bf16.msra.mxu0 %v3426
    %5533 = vmatpush.bf16.msra.mxu0 %v3422
    %5534 = vmatpush.bf16.msra.mxu0 %v3418
    %5535 = vmatpush.bf16.msra.mxu0 %v3414
    %5536 = vmatpush.bf16.msra.mxu0 %v3410
    %5537 = vmatpush.bf16.msra.mxu0 %v3406
    %5538 = vmatpush.bf16.msra.mxu0 %v3402
    %5539 = vmatpush.bf16.msra.mxu0 %v3398
    %5540 = vmatmul.bf16.gmra.mxu0 %v166
    %v5541 = vpop.f32.mrf.mxu0
    %v5542 = vadd.f32 %v5528, %v5541
    %v5543 = vpop.f32.mrf.mxu0
    %v5544 = vadd.f32 %v5530, %v5543
    %5545 = vdwg.mxu0
    %5546 = vmatpush.bf16.msra.mxu0 %v3458
    %5547 = vmatpush.bf16.msra.mxu0 %v3454
    %5548 = vmatpush.bf16.msra.mxu0 %v3450
    %5549 = vmatpush.bf16.msra.mxu0 %v3446
    %5550 = vmatpush.bf16.msra.mxu0 %v3442
    %5551 = vmatpush.bf16.msra.mxu0 %v3438
    %5552 = vmatpush.bf16.msra.mxu0 %v3434
    %5553 = vmatpush.bf16.msra.mxu0 %v3430
    %5554 = vmatmul.bf16.gmra.mxu0 %v167
    %v5555 = vpop.f32.mrf.mxu0
    %v5556 = vadd.f32 %v5542, %v5555
    %v5557 = vpop.f32.mrf.mxu0
    %v5558 = vadd.f32 %v5544, %v5557
    %5559 = vdwg.mxu0
    %5560 = vmatpush.bf16.msra.mxu0 %v3490
    %5561 = vmatpush.bf16.msra.mxu0 %v3486
    %5562 = vmatpush.bf16.msra.mxu0 %v3482
    %5563 = vmatpush.bf16.msra.mxu0 %v3478
    %5564 = vmatpush.bf16.msra.mxu0 %v3474
    %5565 = vmatpush.bf16.msra.mxu0 %v3470
    %5566 = vmatpush.bf16.msra.mxu0 %v3466
    %5567 = vmatpush.bf16.msra.mxu0 %v3462
    %5568 = vmatmul.bf16.gmra.mxu0 %v168
    %v5569 = vpop.f32.mrf.mxu0
    %v5570 = vadd.f32 %v5556, %v5569
    %v5571 = vpop.f32.mrf.mxu0
    %v5572 = vadd.f32 %v5558, %v5571
    %5573 = vdwg.mxu0
    %5574 = vmatpush.bf16.msra.mxu0 %v3522
    %5575 = vmatpush.bf16.msra.mxu0 %v3518
    %5576 = vmatpush.bf16.msra.mxu0 %v3514
    %5577 = vmatpush.bf16.msra.mxu0 %v3510
    %5578 = vmatpush.bf16.msra.mxu0 %v3506
    %5579 = vmatpush.bf16.msra.mxu0 %v3502
    %5580 = vmatpush.bf16.msra.mxu0 %v3498
    %5581 = vmatpush.bf16.msra.mxu0 %v3494
    %5582 = vmatmul.bf16.gmra.mxu0 %v169
    %v5583 = vpop.f32.mrf.mxu0
    %v5584 = vadd.f32 %v5570, %v5583
    %v5585 = vpop.f32.mrf.mxu0
    %v5586 = vadd.f32 %v5572, %v5585
    %5587 = vdwg.mxu0
    %5588 = vmatpush.bf16.msra.mxu0 %v3554
    %5589 = vmatpush.bf16.msra.mxu0 %v3550
    %5590 = vmatpush.bf16.msra.mxu0 %v3546
    %5591 = vmatpush.bf16.msra.mxu0 %v3542
    %5592 = vmatpush.bf16.msra.mxu0 %v3538
    %5593 = vmatpush.bf16.msra.mxu0 %v3534
    %5594 = vmatpush.bf16.msra.mxu0 %v3530
    %5595 = vmatpush.bf16.msra.mxu0 %v3526
    %5596 = vmatmul.bf16.gmra.mxu0 %v170
    %v5597 = vpop.f32.mrf.mxu0
    %v5598 = vadd.f32 %v5584, %v5597
    %v5599 = vpop.f32.mrf.mxu0
    %v5600 = vadd.f32 %v5586, %v5599
    %5601 = vdwg.mxu0
    %5602 = vmatpush.bf16.msra.mxu0 %v3586
    %5603 = vmatpush.bf16.msra.mxu0 %v3582
    %5604 = vmatpush.bf16.msra.mxu0 %v3578
    %5605 = vmatpush.bf16.msra.mxu0 %v3574
    %5606 = vmatpush.bf16.msra.mxu0 %v3570
    %5607 = vmatpush.bf16.msra.mxu0 %v3566
    %5608 = vmatpush.bf16.msra.mxu0 %v3562
    %5609 = vmatpush.bf16.msra.mxu0 %v3558
    %5610 = vmatmul.bf16.gmra.mxu0 %v171
    %v5611 = vpop.f32.mrf.mxu0
    %v5612 = vadd.f32 %v5598, %v5611
    %v5613 = vpop.f32.mrf.mxu0
    %v5614 = vadd.f32 %v5600, %v5613
    %5615 = vdwg.mxu0
    %5616 = vmatpush.bf16.msra.mxu0 %v3618
    %5617 = vmatpush.bf16.msra.mxu0 %v3614
    %5618 = vmatpush.bf16.msra.mxu0 %v3610
    %5619 = vmatpush.bf16.msra.mxu0 %v3606
    %5620 = vmatpush.bf16.msra.mxu0 %v3602
    %5621 = vmatpush.bf16.msra.mxu0 %v3598
    %5622 = vmatpush.bf16.msra.mxu0 %v3594
    %5623 = vmatpush.bf16.msra.mxu0 %v3590
    %5624 = vmatmul.bf16.gmra.mxu0 %v172
    %v5625 = vpop.f32.mrf.mxu0
    %v5626 = vadd.f32 %v5612, %v5625
    %v5627 = vpop.f32.mrf.mxu0
    %v5628 = vadd.f32 %v5614, %v5627
    %5629 = vdwg.mxu0
    %5630 = vmatpush.bf16.msra.mxu0 %v3650
    %5631 = vmatpush.bf16.msra.mxu0 %v3646
    %5632 = vmatpush.bf16.msra.mxu0 %v3642
    %5633 = vmatpush.bf16.msra.mxu0 %v3638
    %5634 = vmatpush.bf16.msra.mxu0 %v3634
    %5635 = vmatpush.bf16.msra.mxu0 %v3630
    %5636 = vmatpush.bf16.msra.mxu0 %v3626
    %5637 = vmatpush.bf16.msra.mxu0 %v3622
    %5638 = vmatmul.bf16.gmra.mxu0 %v173
    %v5639 = vpop.f32.mrf.mxu0
    %v5640 = vadd.f32 %v5626, %v5639
    %v5641 = vpop.f32.mrf.mxu0
    %v5642 = vadd.f32 %v5628, %v5641
    %5643 = vdwg.mxu0
    %5644 = vmatpush.bf16.msra.mxu0 %v3682
    %5645 = vmatpush.bf16.msra.mxu0 %v3678
    %5646 = vmatpush.bf16.msra.mxu0 %v3674
    %5647 = vmatpush.bf16.msra.mxu0 %v3670
    %5648 = vmatpush.bf16.msra.mxu0 %v3666
    %5649 = vmatpush.bf16.msra.mxu0 %v3662
    %5650 = vmatpush.bf16.msra.mxu0 %v3658
    %5651 = vmatpush.bf16.msra.mxu0 %v3654
    %5652 = vmatmul.bf16.gmra.mxu0 %v174
    %v5653 = vpop.f32.mrf.mxu0
    %v5654 = vadd.f32 %v5640, %v5653
    %v5655 = vpop.f32.mrf.mxu0
    %v5656 = vadd.f32 %v5642, %v5655
    %5657 = vdwg.mxu0
    %5658 = vmatpush.bf16.msra.mxu0 %v3714
    %5659 = vmatpush.bf16.msra.mxu0 %v3710
    %5660 = vmatpush.bf16.msra.mxu0 %v3706
    %5661 = vmatpush.bf16.msra.mxu0 %v3702
    %5662 = vmatpush.bf16.msra.mxu0 %v3698
    %5663 = vmatpush.bf16.msra.mxu0 %v3694
    %5664 = vmatpush.bf16.msra.mxu0 %v3690
    %5665 = vmatpush.bf16.msra.mxu0 %v3686
    %5666 = vmatmul.bf16.gmra.mxu0 %v175
    %v5667 = vpop.f32.mrf.mxu0
    %v5668 = vadd.f32 %v5654, %v5667
    %v5669 = vpop.f32.mrf.mxu0
    %v5670 = vadd.f32 %v5656, %v5669
    %5671 = vdwg.mxu0
    %5672 = vmatpush.bf16.msra.mxu0 %v3746
    %5673 = vmatpush.bf16.msra.mxu0 %v3742
    %5674 = vmatpush.bf16.msra.mxu0 %v3738
    %5675 = vmatpush.bf16.msra.mxu0 %v3734
    %5676 = vmatpush.bf16.msra.mxu0 %v3730
    %5677 = vmatpush.bf16.msra.mxu0 %v3726
    %5678 = vmatpush.bf16.msra.mxu0 %v3722
    %5679 = vmatpush.bf16.msra.mxu0 %v3718
    %5680 = vmatmul.bf16.gmra.mxu0 %v176
    %v5681 = vpop.f32.mrf.mxu0
    %v5682 = vadd.f32 %v5668, %v5681
    %v5683 = vpop.f32.mrf.mxu0
    %v5684 = vadd.f32 %v5670, %v5683
    %5685 = vdwg.mxu0
    %5686 = vmatpush.bf16.msra.mxu0 %v3778
    %5687 = vmatpush.bf16.msra.mxu0 %v3774
    %5688 = vmatpush.bf16.msra.mxu0 %v3770
    %5689 = vmatpush.bf16.msra.mxu0 %v3766
    %5690 = vmatpush.bf16.msra.mxu0 %v3762
    %5691 = vmatpush.bf16.msra.mxu0 %v3758
    %5692 = vmatpush.bf16.msra.mxu0 %v3754
    %5693 = vmatpush.bf16.msra.mxu0 %v3750
    %5694 = vmatmul.bf16.gmra.mxu0 %v177
    %v5695 = vpop.f32.mrf.mxu0
    %v5696 = vadd.f32 %v5682, %v5695
    %v5697 = vpop.f32.mrf.mxu0
    %v5698 = vadd.f32 %v5684, %v5697
    %5699 = vdwg.mxu0
    %5700 = vmatpush.bf16.msra.mxu0 %v3810
    %5701 = vmatpush.bf16.msra.mxu0 %v3806
    %5702 = vmatpush.bf16.msra.mxu0 %v3802
    %5703 = vmatpush.bf16.msra.mxu0 %v3798
    %5704 = vmatpush.bf16.msra.mxu0 %v3794
    %5705 = vmatpush.bf16.msra.mxu0 %v3790
    %5706 = vmatpush.bf16.msra.mxu0 %v3786
    %5707 = vmatpush.bf16.msra.mxu0 %v3782
    %5708 = vmatmul.bf16.gmra.mxu0 %v178
    %v5709 = vpop.f32.mrf.mxu0
    %v5710 = vadd.f32 %v5696, %v5709
    %v5711 = vpop.f32.mrf.mxu0
    %v5712 = vadd.f32 %v5698, %v5711
    %5713 = vdwg.mxu0
    %5714 = vmatpush.bf16.msra.mxu0 %v3842
    %5715 = vmatpush.bf16.msra.mxu0 %v3838
    %5716 = vmatpush.bf16.msra.mxu0 %v3834
    %5717 = vmatpush.bf16.msra.mxu0 %v3830
    %5718 = vmatpush.bf16.msra.mxu0 %v3826
    %5719 = vmatpush.bf16.msra.mxu0 %v3822
    %5720 = vmatpush.bf16.msra.mxu0 %v3818
    %5721 = vmatpush.bf16.msra.mxu0 %v3814
    %5722 = vmatmul.bf16.gmra.mxu0 %v179
    %v5723 = vpop.f32.mrf.mxu0
    %v5724 = vadd.f32 %v5710, %v5723
    %v5725 = vpop.f32.mrf.mxu0
    %v5726 = vadd.f32 %v5712, %v5725
    %5727 = vdwg.mxu0
    %5728 = vmatpush.bf16.msra.mxu0 %v3874
    %5729 = vmatpush.bf16.msra.mxu0 %v3870
    %5730 = vmatpush.bf16.msra.mxu0 %v3866
    %5731 = vmatpush.bf16.msra.mxu0 %v3862
    %5732 = vmatpush.bf16.msra.mxu0 %v3858
    %5733 = vmatpush.bf16.msra.mxu0 %v3854
    %5734 = vmatpush.bf16.msra.mxu0 %v3850
    %5735 = vmatpush.bf16.msra.mxu0 %v3846
    %5736 = vmatmul.bf16.gmra.mxu0 %v180
    %v5737 = vpop.f32.mrf.mxu0
    %v5738 = vadd.f32 %v5724, %v5737
    %v5739 = vpop.f32.mrf.mxu0
    %v5740 = vadd.f32 %v5726, %v5739
    %5741 = vdwg.mxu0
    %5742 = vmatpush.bf16.msra.mxu0 %v3906
    %5743 = vmatpush.bf16.msra.mxu0 %v3902
    %5744 = vmatpush.bf16.msra.mxu0 %v3898
    %5745 = vmatpush.bf16.msra.mxu0 %v3894
    %5746 = vmatpush.bf16.msra.mxu0 %v3890
    %5747 = vmatpush.bf16.msra.mxu0 %v3886
    %5748 = vmatpush.bf16.msra.mxu0 %v3882
    %5749 = vmatpush.bf16.msra.mxu0 %v3878
    %5750 = vmatmul.bf16.gmra.mxu0 %v181
    %v5751 = vpop.f32.mrf.mxu0
    %v5752 = vadd.f32 %v5738, %v5751
    %v5753 = vpop.f32.mrf.mxu0
    %v5754 = vadd.f32 %v5740, %v5753
    %5755 = vdwg.mxu0
    %5756 = vmatpush.bf16.msra.mxu0 %v3938
    %5757 = vmatpush.bf16.msra.mxu0 %v3934
    %5758 = vmatpush.bf16.msra.mxu0 %v3930
    %5759 = vmatpush.bf16.msra.mxu0 %v3926
    %5760 = vmatpush.bf16.msra.mxu0 %v3922
    %5761 = vmatpush.bf16.msra.mxu0 %v3918
    %5762 = vmatpush.bf16.msra.mxu0 %v3914
    %5763 = vmatpush.bf16.msra.mxu0 %v3910
    %5764 = vmatmul.bf16.gmra.mxu0 %v182
    %v5765 = vpop.f32.mrf.mxu0
    %v5766 = vadd.f32 %v5752, %v5765
    %v5767 = vpop.f32.mrf.mxu0
    %v5768 = vadd.f32 %v5754, %v5767
    %5769 = vdwg.mxu0
    %5770 = vmatpush.bf16.msra.mxu0 %v3970
    %5771 = vmatpush.bf16.msra.mxu0 %v3966
    %5772 = vmatpush.bf16.msra.mxu0 %v3962
    %5773 = vmatpush.bf16.msra.mxu0 %v3958
    %5774 = vmatpush.bf16.msra.mxu0 %v3954
    %5775 = vmatpush.bf16.msra.mxu0 %v3950
    %5776 = vmatpush.bf16.msra.mxu0 %v3946
    %5777 = vmatpush.bf16.msra.mxu0 %v3942
    %5778 = vmatmul.bf16.gmra.mxu0 %v183
    %v5779 = vpop.f32.mrf.mxu0
    %v5780 = vadd.f32 %v5766, %v5779
    %v5781 = vpop.f32.mrf.mxu0
    %v5782 = vadd.f32 %v5768, %v5781
    %5783 = vdwg.mxu0
    %5784 = vmatpush.bf16.msra.mxu0 %v4002
    %5785 = vmatpush.bf16.msra.mxu0 %v3998
    %5786 = vmatpush.bf16.msra.mxu0 %v3994
    %5787 = vmatpush.bf16.msra.mxu0 %v3990
    %5788 = vmatpush.bf16.msra.mxu0 %v3986
    %5789 = vmatpush.bf16.msra.mxu0 %v3982
    %5790 = vmatpush.bf16.msra.mxu0 %v3978
    %5791 = vmatpush.bf16.msra.mxu0 %v3974
    %5792 = vmatmul.bf16.gmra.mxu0 %v184
    %v5793 = vpop.f32.mrf.mxu0
    %v5794 = vadd.f32 %v5780, %v5793
    %v5795 = vpop.f32.mrf.mxu0
    %v5796 = vadd.f32 %v5782, %v5795
    %5797 = vdwg.mxu0
    %5798 = vmatpush.bf16.msra.mxu0 %v4034
    %5799 = vmatpush.bf16.msra.mxu0 %v4030
    %5800 = vmatpush.bf16.msra.mxu0 %v4026
    %5801 = vmatpush.bf16.msra.mxu0 %v4022
    %5802 = vmatpush.bf16.msra.mxu0 %v4018
    %5803 = vmatpush.bf16.msra.mxu0 %v4014
    %5804 = vmatpush.bf16.msra.mxu0 %v4010
    %5805 = vmatpush.bf16.msra.mxu0 %v4006
    %5806 = vmatmul.bf16.gmra.mxu0 %v185
    %v5807 = vpop.f32.mrf.mxu0
    %v5808 = vadd.f32 %v5794, %v5807
    %v5809 = vpop.f32.mrf.mxu0
    %v5810 = vadd.f32 %v5796, %v5809
    %5811 = vdwg.mxu0
    %5812 = vmatpush.bf16.msra.mxu0 %v3299
    %5813 = vmatpush.bf16.msra.mxu0 %v3295
    %5814 = vmatpush.bf16.msra.mxu0 %v3291
    %5815 = vmatpush.bf16.msra.mxu0 %v3287
    %5816 = vmatpush.bf16.msra.mxu0 %v3283
    %5817 = vmatpush.bf16.msra.mxu0 %v3279
    %5818 = vmatpush.bf16.msra.mxu0 %v3275
    %5819 = vmatpush.bf16.msra.mxu0 %v3271
    %5820 = vmatmul.bf16.gmra.mxu0 %v162
    %v5821 = vpop.f32.mrf.mxu0
    %v5822 = vadd.f32 %v959, %v5821
    %v5823 = vpop.f32.mrf.mxu0
    %v5824 = vadd.f32 %v959, %v5823
    %5825 = vdwg.mxu0
    %5826 = vmatpush.bf16.msra.mxu0 %v3331
    %5827 = vmatpush.bf16.msra.mxu0 %v3327
    %5828 = vmatpush.bf16.msra.mxu0 %v3323
    %5829 = vmatpush.bf16.msra.mxu0 %v3319
    %5830 = vmatpush.bf16.msra.mxu0 %v3315
    %5831 = vmatpush.bf16.msra.mxu0 %v3311
    %5832 = vmatpush.bf16.msra.mxu0 %v3307
    %5833 = vmatpush.bf16.msra.mxu0 %v3303
    %5834 = vmatmul.bf16.gmra.mxu0 %v163
    %v5835 = vpop.f32.mrf.mxu0
    %v5836 = vadd.f32 %v5822, %v5835
    %v5837 = vpop.f32.mrf.mxu0
    %v5838 = vadd.f32 %v5824, %v5837
    %5839 = vdwg.mxu0
    %5840 = vmatpush.bf16.msra.mxu0 %v3363
    %5841 = vmatpush.bf16.msra.mxu0 %v3359
    %5842 = vmatpush.bf16.msra.mxu0 %v3355
    %5843 = vmatpush.bf16.msra.mxu0 %v3351
    %5844 = vmatpush.bf16.msra.mxu0 %v3347
    %5845 = vmatpush.bf16.msra.mxu0 %v3343
    %5846 = vmatpush.bf16.msra.mxu0 %v3339
    %5847 = vmatpush.bf16.msra.mxu0 %v3335
    %5848 = vmatmul.bf16.gmra.mxu0 %v164
    %v5849 = vpop.f32.mrf.mxu0
    %v5850 = vadd.f32 %v5836, %v5849
    %v5851 = vpop.f32.mrf.mxu0
    %v5852 = vadd.f32 %v5838, %v5851
    %5853 = vdwg.mxu0
    %5854 = vmatpush.bf16.msra.mxu0 %v3395
    %5855 = vmatpush.bf16.msra.mxu0 %v3391
    %5856 = vmatpush.bf16.msra.mxu0 %v3387
    %5857 = vmatpush.bf16.msra.mxu0 %v3383
    %5858 = vmatpush.bf16.msra.mxu0 %v3379
    %5859 = vmatpush.bf16.msra.mxu0 %v3375
    %5860 = vmatpush.bf16.msra.mxu0 %v3371
    %5861 = vmatpush.bf16.msra.mxu0 %v3367
    %5862 = vmatmul.bf16.gmra.mxu0 %v165
    %v5863 = vpop.f32.mrf.mxu0
    %v5864 = vadd.f32 %v5850, %v5863
    %v5865 = vpop.f32.mrf.mxu0
    %v5866 = vadd.f32 %v5852, %v5865
    %5867 = vdwg.mxu0
    %5868 = vmatpush.bf16.msra.mxu0 %v3427
    %5869 = vmatpush.bf16.msra.mxu0 %v3423
    %5870 = vmatpush.bf16.msra.mxu0 %v3419
    %5871 = vmatpush.bf16.msra.mxu0 %v3415
    %5872 = vmatpush.bf16.msra.mxu0 %v3411
    %5873 = vmatpush.bf16.msra.mxu0 %v3407
    %5874 = vmatpush.bf16.msra.mxu0 %v3403
    %5875 = vmatpush.bf16.msra.mxu0 %v3399
    %5876 = vmatmul.bf16.gmra.mxu0 %v166
    %v5877 = vpop.f32.mrf.mxu0
    %v5878 = vadd.f32 %v5864, %v5877
    %v5879 = vpop.f32.mrf.mxu0
    %v5880 = vadd.f32 %v5866, %v5879
    %5881 = vdwg.mxu0
    %5882 = vmatpush.bf16.msra.mxu0 %v3459
    %5883 = vmatpush.bf16.msra.mxu0 %v3455
    %5884 = vmatpush.bf16.msra.mxu0 %v3451
    %5885 = vmatpush.bf16.msra.mxu0 %v3447
    %5886 = vmatpush.bf16.msra.mxu0 %v3443
    %5887 = vmatpush.bf16.msra.mxu0 %v3439
    %5888 = vmatpush.bf16.msra.mxu0 %v3435
    %5889 = vmatpush.bf16.msra.mxu0 %v3431
    %5890 = vmatmul.bf16.gmra.mxu0 %v167
    %v5891 = vpop.f32.mrf.mxu0
    %v5892 = vadd.f32 %v5878, %v5891
    %v5893 = vpop.f32.mrf.mxu0
    %v5894 = vadd.f32 %v5880, %v5893
    %5895 = vdwg.mxu0
    %5896 = vmatpush.bf16.msra.mxu0 %v3491
    %5897 = vmatpush.bf16.msra.mxu0 %v3487
    %5898 = vmatpush.bf16.msra.mxu0 %v3483
    %5899 = vmatpush.bf16.msra.mxu0 %v3479
    %5900 = vmatpush.bf16.msra.mxu0 %v3475
    %5901 = vmatpush.bf16.msra.mxu0 %v3471
    %5902 = vmatpush.bf16.msra.mxu0 %v3467
    %5903 = vmatpush.bf16.msra.mxu0 %v3463
    %5904 = vmatmul.bf16.gmra.mxu0 %v168
    %v5905 = vpop.f32.mrf.mxu0
    %v5906 = vadd.f32 %v5892, %v5905
    %v5907 = vpop.f32.mrf.mxu0
    %v5908 = vadd.f32 %v5894, %v5907
    %5909 = vdwg.mxu0
    %5910 = vmatpush.bf16.msra.mxu0 %v3523
    %5911 = vmatpush.bf16.msra.mxu0 %v3519
    %5912 = vmatpush.bf16.msra.mxu0 %v3515
    %5913 = vmatpush.bf16.msra.mxu0 %v3511
    %5914 = vmatpush.bf16.msra.mxu0 %v3507
    %5915 = vmatpush.bf16.msra.mxu0 %v3503
    %5916 = vmatpush.bf16.msra.mxu0 %v3499
    %5917 = vmatpush.bf16.msra.mxu0 %v3495
    %5918 = vmatmul.bf16.gmra.mxu0 %v169
    %v5919 = vpop.f32.mrf.mxu0
    %v5920 = vadd.f32 %v5906, %v5919
    %v5921 = vpop.f32.mrf.mxu0
    %v5922 = vadd.f32 %v5908, %v5921
    %5923 = vdwg.mxu0
    %5924 = vmatpush.bf16.msra.mxu0 %v3555
    %5925 = vmatpush.bf16.msra.mxu0 %v3551
    %5926 = vmatpush.bf16.msra.mxu0 %v3547
    %5927 = vmatpush.bf16.msra.mxu0 %v3543
    %5928 = vmatpush.bf16.msra.mxu0 %v3539
    %5929 = vmatpush.bf16.msra.mxu0 %v3535
    %5930 = vmatpush.bf16.msra.mxu0 %v3531
    %5931 = vmatpush.bf16.msra.mxu0 %v3527
    %5932 = vmatmul.bf16.gmra.mxu0 %v170
    %v5933 = vpop.f32.mrf.mxu0
    %v5934 = vadd.f32 %v5920, %v5933
    %v5935 = vpop.f32.mrf.mxu0
    %v5936 = vadd.f32 %v5922, %v5935
    %5937 = vdwg.mxu0
    %5938 = vmatpush.bf16.msra.mxu0 %v3587
    %5939 = vmatpush.bf16.msra.mxu0 %v3583
    %5940 = vmatpush.bf16.msra.mxu0 %v3579
    %5941 = vmatpush.bf16.msra.mxu0 %v3575
    %5942 = vmatpush.bf16.msra.mxu0 %v3571
    %5943 = vmatpush.bf16.msra.mxu0 %v3567
    %5944 = vmatpush.bf16.msra.mxu0 %v3563
    %5945 = vmatpush.bf16.msra.mxu0 %v3559
    %5946 = vmatmul.bf16.gmra.mxu0 %v171
    %v5947 = vpop.f32.mrf.mxu0
    %v5948 = vadd.f32 %v5934, %v5947
    %v5949 = vpop.f32.mrf.mxu0
    %v5950 = vadd.f32 %v5936, %v5949
    %5951 = vdwg.mxu0
    %5952 = vmatpush.bf16.msra.mxu0 %v3619
    %5953 = vmatpush.bf16.msra.mxu0 %v3615
    %5954 = vmatpush.bf16.msra.mxu0 %v3611
    %5955 = vmatpush.bf16.msra.mxu0 %v3607
    %5956 = vmatpush.bf16.msra.mxu0 %v3603
    %5957 = vmatpush.bf16.msra.mxu0 %v3599
    %5958 = vmatpush.bf16.msra.mxu0 %v3595
    %5959 = vmatpush.bf16.msra.mxu0 %v3591
    %5960 = vmatmul.bf16.gmra.mxu0 %v172
    %v5961 = vpop.f32.mrf.mxu0
    %v5962 = vadd.f32 %v5948, %v5961
    %v5963 = vpop.f32.mrf.mxu0
    %v5964 = vadd.f32 %v5950, %v5963
    %5965 = vdwg.mxu0
    %5966 = vmatpush.bf16.msra.mxu0 %v3651
    %5967 = vmatpush.bf16.msra.mxu0 %v3647
    %5968 = vmatpush.bf16.msra.mxu0 %v3643
    %5969 = vmatpush.bf16.msra.mxu0 %v3639
    %5970 = vmatpush.bf16.msra.mxu0 %v3635
    %5971 = vmatpush.bf16.msra.mxu0 %v3631
    %5972 = vmatpush.bf16.msra.mxu0 %v3627
    %5973 = vmatpush.bf16.msra.mxu0 %v3623
    %5974 = vmatmul.bf16.gmra.mxu0 %v173
    %v5975 = vpop.f32.mrf.mxu0
    %v5976 = vadd.f32 %v5962, %v5975
    %v5977 = vpop.f32.mrf.mxu0
    %v5978 = vadd.f32 %v5964, %v5977
    %5979 = vdwg.mxu0
    %5980 = vmatpush.bf16.msra.mxu0 %v3683
    %5981 = vmatpush.bf16.msra.mxu0 %v3679
    %5982 = vmatpush.bf16.msra.mxu0 %v3675
    %5983 = vmatpush.bf16.msra.mxu0 %v3671
    %5984 = vmatpush.bf16.msra.mxu0 %v3667
    %5985 = vmatpush.bf16.msra.mxu0 %v3663
    %5986 = vmatpush.bf16.msra.mxu0 %v3659
    %5987 = vmatpush.bf16.msra.mxu0 %v3655
    %5988 = vmatmul.bf16.gmra.mxu0 %v174
    %v5989 = vpop.f32.mrf.mxu0
    %v5990 = vadd.f32 %v5976, %v5989
    %v5991 = vpop.f32.mrf.mxu0
    %v5992 = vadd.f32 %v5978, %v5991
    %5993 = vdwg.mxu0
    %5994 = vmatpush.bf16.msra.mxu0 %v3715
    %5995 = vmatpush.bf16.msra.mxu0 %v3711
    %5996 = vmatpush.bf16.msra.mxu0 %v3707
    %5997 = vmatpush.bf16.msra.mxu0 %v3703
    %5998 = vmatpush.bf16.msra.mxu0 %v3699
    %5999 = vmatpush.bf16.msra.mxu0 %v3695
    %6000 = vmatpush.bf16.msra.mxu0 %v3691
    %6001 = vmatpush.bf16.msra.mxu0 %v3687
    %6002 = vmatmul.bf16.gmra.mxu0 %v175
    %v6003 = vpop.f32.mrf.mxu0
    %v6004 = vadd.f32 %v5990, %v6003
    %v6005 = vpop.f32.mrf.mxu0
    %v6006 = vadd.f32 %v5992, %v6005
    %6007 = vdwg.mxu0
    %6008 = vmatpush.bf16.msra.mxu0 %v3747
    %6009 = vmatpush.bf16.msra.mxu0 %v3743
    %6010 = vmatpush.bf16.msra.mxu0 %v3739
    %6011 = vmatpush.bf16.msra.mxu0 %v3735
    %6012 = vmatpush.bf16.msra.mxu0 %v3731
    %6013 = vmatpush.bf16.msra.mxu0 %v3727
    %6014 = vmatpush.bf16.msra.mxu0 %v3723
    %6015 = vmatpush.bf16.msra.mxu0 %v3719
    %6016 = vmatmul.bf16.gmra.mxu0 %v176
    %v6017 = vpop.f32.mrf.mxu0
    %v6018 = vadd.f32 %v6004, %v6017
    %v6019 = vpop.f32.mrf.mxu0
    %v6020 = vadd.f32 %v6006, %v6019
    %6021 = vdwg.mxu0
    %6022 = vmatpush.bf16.msra.mxu0 %v3779
    %6023 = vmatpush.bf16.msra.mxu0 %v3775
    %6024 = vmatpush.bf16.msra.mxu0 %v3771
    %6025 = vmatpush.bf16.msra.mxu0 %v3767
    %6026 = vmatpush.bf16.msra.mxu0 %v3763
    %6027 = vmatpush.bf16.msra.mxu0 %v3759
    %6028 = vmatpush.bf16.msra.mxu0 %v3755
    %6029 = vmatpush.bf16.msra.mxu0 %v3751
    %6030 = vmatmul.bf16.gmra.mxu0 %v177
    %v6031 = vpop.f32.mrf.mxu0
    %v6032 = vadd.f32 %v6018, %v6031
    %v6033 = vpop.f32.mrf.mxu0
    %v6034 = vadd.f32 %v6020, %v6033
    %6035 = vdwg.mxu0
    %6036 = vmatpush.bf16.msra.mxu0 %v3811
    %6037 = vmatpush.bf16.msra.mxu0 %v3807
    %6038 = vmatpush.bf16.msra.mxu0 %v3803
    %6039 = vmatpush.bf16.msra.mxu0 %v3799
    %6040 = vmatpush.bf16.msra.mxu0 %v3795
    %6041 = vmatpush.bf16.msra.mxu0 %v3791
    %6042 = vmatpush.bf16.msra.mxu0 %v3787
    %6043 = vmatpush.bf16.msra.mxu0 %v3783
    %6044 = vmatmul.bf16.gmra.mxu0 %v178
    %v6045 = vpop.f32.mrf.mxu0
    %v6046 = vadd.f32 %v6032, %v6045
    %v6047 = vpop.f32.mrf.mxu0
    %v6048 = vadd.f32 %v6034, %v6047
    %6049 = vdwg.mxu0
    %6050 = vmatpush.bf16.msra.mxu0 %v3843
    %6051 = vmatpush.bf16.msra.mxu0 %v3839
    %6052 = vmatpush.bf16.msra.mxu0 %v3835
    %6053 = vmatpush.bf16.msra.mxu0 %v3831
    %6054 = vmatpush.bf16.msra.mxu0 %v3827
    %6055 = vmatpush.bf16.msra.mxu0 %v3823
    %6056 = vmatpush.bf16.msra.mxu0 %v3819
    %6057 = vmatpush.bf16.msra.mxu0 %v3815
    %6058 = vmatmul.bf16.gmra.mxu0 %v179
    %v6059 = vpop.f32.mrf.mxu0
    %v6060 = vadd.f32 %v6046, %v6059
    %v6061 = vpop.f32.mrf.mxu0
    %v6062 = vadd.f32 %v6048, %v6061
    %6063 = vdwg.mxu0
    %6064 = vmatpush.bf16.msra.mxu0 %v3875
    %6065 = vmatpush.bf16.msra.mxu0 %v3871
    %6066 = vmatpush.bf16.msra.mxu0 %v3867
    %6067 = vmatpush.bf16.msra.mxu0 %v3863
    %6068 = vmatpush.bf16.msra.mxu0 %v3859
    %6069 = vmatpush.bf16.msra.mxu0 %v3855
    %6070 = vmatpush.bf16.msra.mxu0 %v3851
    %6071 = vmatpush.bf16.msra.mxu0 %v3847
    %6072 = vmatmul.bf16.gmra.mxu0 %v180
    %v6073 = vpop.f32.mrf.mxu0
    %v6074 = vadd.f32 %v6060, %v6073
    %v6075 = vpop.f32.mrf.mxu0
    %v6076 = vadd.f32 %v6062, %v6075
    %6077 = vdwg.mxu0
    %6078 = vmatpush.bf16.msra.mxu0 %v3907
    %6079 = vmatpush.bf16.msra.mxu0 %v3903
    %6080 = vmatpush.bf16.msra.mxu0 %v3899
    %6081 = vmatpush.bf16.msra.mxu0 %v3895
    %6082 = vmatpush.bf16.msra.mxu0 %v3891
    %6083 = vmatpush.bf16.msra.mxu0 %v3887
    %6084 = vmatpush.bf16.msra.mxu0 %v3883
    %6085 = vmatpush.bf16.msra.mxu0 %v3879
    %6086 = vmatmul.bf16.gmra.mxu0 %v181
    %v6087 = vpop.f32.mrf.mxu0
    %v6088 = vadd.f32 %v6074, %v6087
    %v6089 = vpop.f32.mrf.mxu0
    %v6090 = vadd.f32 %v6076, %v6089
    %6091 = vdwg.mxu0
    %6092 = vmatpush.bf16.msra.mxu0 %v3939
    %6093 = vmatpush.bf16.msra.mxu0 %v3935
    %6094 = vmatpush.bf16.msra.mxu0 %v3931
    %6095 = vmatpush.bf16.msra.mxu0 %v3927
    %6096 = vmatpush.bf16.msra.mxu0 %v3923
    %6097 = vmatpush.bf16.msra.mxu0 %v3919
    %6098 = vmatpush.bf16.msra.mxu0 %v3915
    %6099 = vmatpush.bf16.msra.mxu0 %v3911
    %6100 = vmatmul.bf16.gmra.mxu0 %v182
    %v6101 = vpop.f32.mrf.mxu0
    %v6102 = vadd.f32 %v6088, %v6101
    %v6103 = vpop.f32.mrf.mxu0
    %v6104 = vadd.f32 %v6090, %v6103
    %6105 = vdwg.mxu0
    %6106 = vmatpush.bf16.msra.mxu0 %v3971
    %6107 = vmatpush.bf16.msra.mxu0 %v3967
    %6108 = vmatpush.bf16.msra.mxu0 %v3963
    %6109 = vmatpush.bf16.msra.mxu0 %v3959
    %6110 = vmatpush.bf16.msra.mxu0 %v3955
    %6111 = vmatpush.bf16.msra.mxu0 %v3951
    %6112 = vmatpush.bf16.msra.mxu0 %v3947
    %6113 = vmatpush.bf16.msra.mxu0 %v3943
    %6114 = vmatmul.bf16.gmra.mxu0 %v183
    %v6115 = vpop.f32.mrf.mxu0
    %v6116 = vadd.f32 %v6102, %v6115
    %v6117 = vpop.f32.mrf.mxu0
    %v6118 = vadd.f32 %v6104, %v6117
    %6119 = vdwg.mxu0
    %6120 = vmatpush.bf16.msra.mxu0 %v4003
    %6121 = vmatpush.bf16.msra.mxu0 %v3999
    %6122 = vmatpush.bf16.msra.mxu0 %v3995
    %6123 = vmatpush.bf16.msra.mxu0 %v3991
    %6124 = vmatpush.bf16.msra.mxu0 %v3987
    %6125 = vmatpush.bf16.msra.mxu0 %v3983
    %6126 = vmatpush.bf16.msra.mxu0 %v3979
    %6127 = vmatpush.bf16.msra.mxu0 %v3975
    %6128 = vmatmul.bf16.gmra.mxu0 %v184
    %v6129 = vpop.f32.mrf.mxu0
    %v6130 = vadd.f32 %v6116, %v6129
    %v6131 = vpop.f32.mrf.mxu0
    %v6132 = vadd.f32 %v6118, %v6131
    %6133 = vdwg.mxu0
    %6134 = vmatpush.bf16.msra.mxu0 %v4035
    %6135 = vmatpush.bf16.msra.mxu0 %v4031
    %6136 = vmatpush.bf16.msra.mxu0 %v4027
    %6137 = vmatpush.bf16.msra.mxu0 %v4023
    %6138 = vmatpush.bf16.msra.mxu0 %v4019
    %6139 = vmatpush.bf16.msra.mxu0 %v4015
    %6140 = vmatpush.bf16.msra.mxu0 %v4011
    %6141 = vmatpush.bf16.msra.mxu0 %v4007
    %6142 = vmatmul.bf16.gmra.mxu0 %v185
    %v6143 = vpop.f32.mrf.mxu0
    %v6144 = vadd.f32 %v6130, %v6143
    %v6145 = vpop.f32.mrf.mxu0
    %v6146 = vadd.f32 %v6132, %v6145
    %6147 = vdwg.mxu0
    %v6148 = vmax.f32 %v5136, 0.0
    %v6149 = vmax.f32 %v5472, 0.0
    %v6150 = vmax.f32 %v5808, 0.0
    %v6151 = vmax.f32 %v6144, 0.0
    %v6152 = vmax.f32 %v5138, 0.0
    %v6153 = vmax.f32 %v5474, 0.0
    %v6154 = vmax.f32 %v5810, 0.0
    %v6155 = vmax.f32 %v6146, 0.0
    %v6156 = vpack.c.bf16 %v6152, %v6148
    %v6157 = vpack.c.bf16 %v6153, %v6149
    %v6158 = vpack.c.bf16 %v6154, %v6150
    %v6159 = vpack.c.bf16 %v6155, %v6151
    %v6160 = vld [vmem:[#allocation6] sm:$0xff]
    %v6161 = vld [vmem:[#allocation6 + $0x8] sm:$0xff]
    %v6162 = vld [vmem:[#allocation6 + $0x10] sm:$0xff]
    %v6163 = vld [vmem:[#allocation6 + $0x18] sm:$0xff]
    %v6164 = vld [vmem:[#allocation6 + $0x20] sm:$0xff]
    %v6165 = vld [vmem:[#allocation6 + $0x28] sm:$0xff]
    %v6166 = vld [vmem:[#allocation6 + $0x30] sm:$0xff]
    %v6167 = vld [vmem:[#allocation6 + $0x38] sm:$0xff]
    %v6168 = vld [vmem:[#allocation6 + $0x40] sm:$0xff]
    %v6169 = vld [vmem:[#allocation6 + $0x48] sm:$0xff]
    %v6170 = vld [vmem:[#allocation6 + $0x50] sm:$0xff]
    %v6171 = vld [vmem:[#allocation6 + $0x58] sm:$0xff]
    %v6172 = vld [vmem:[#allocation6 + $0x60] sm:$0xff]
    %v6173 = vld [vmem:[#allocation6 + $0x68] sm:$0xff]
    %v6174 = vld [vmem:[#allocation6 + $0x70] sm:$0xff]
    %v6175 = vld [vmem:[#allocation6 + $0x78] sm:$0xff]
    %v6176 = vld [vmem:[#allocation6 + $0x80] sm:$0xff]
    %v6177 = vld [vmem:[#allocation6 + $0x88] sm:$0xff]
    %v6178 = vld [vmem:[#allocation6 + $0x90] sm:$0xff]
    %v6179 = vld [vmem:[#allocation6 + $0x98] sm:$0xff]
    %v6180 = vld [vmem:[#allocation6 + $0xa0] sm:$0xff]
    %v6181 = vld [vmem:[#allocation6 + $0xa8] sm:$0xff]
    %v6182 = vld [vmem:[#allocation6 + $0xb0] sm:$0xff]
    %v6183 = vld [vmem:[#allocation6 + $0xb8] sm:$0xff]
    %v6184 = vld [vmem:[#allocation6 + $0xc0] sm:$0xff]
    %v6185 = vld [vmem:[#allocation6 + $0xc8] sm:$0xff]
    %v6186 = vld [vmem:[#allocation6 + $0xd0] sm:$0xff]
    %v6187 = vld [vmem:[#allocation6 + $0xd8] sm:$0xff]
    %v6188 = vld [vmem:[#allocation6 + $0xe0] sm:$0xff]
    %v6189 = vld [vmem:[#allocation6 + $0xe8] sm:$0xff]
    %v6190 = vld [vmem:[#allocation6 + $0xf0] sm:$0xff]
    %v6191 = vld [vmem:[#allocation6 + $0xf8] sm:$0xff]
    %v6192 = vld [vmem:[#allocation6 + $0x100] sm:$0xff]
    %v6193 = vld [vmem:[#allocation6 + $0x108] sm:$0xff]
    %v6194 = vld [vmem:[#allocation6 + $0x110] sm:$0xff]
    %v6195 = vld [vmem:[#allocation6 + $0x118] sm:$0xff]
    %v6196 = vld [vmem:[#allocation6 + $0x120] sm:$0xff]
    %v6197 = vld [vmem:[#allocation6 + $0x128] sm:$0xff]
    %v6198 = vld [vmem:[#allocation6 + $0x130] sm:$0xff]
    %v6199 = vld [vmem:[#allocation6 + $0x138] sm:$0xff]
    %v6200 = vld [vmem:[#allocation6 + $0x140] sm:$0xff]
    %v6201 = vld [vmem:[#allocation6 + $0x148] sm:$0xff]
    %v6202 = vld [vmem:[#allocation6 + $0x150] sm:$0xff]
    %v6203 = vld [vmem:[#allocation6 + $0x158] sm:$0xff]
    %v6204 = vld [vmem:[#allocation6 + $0x160] sm:$0xff]
    %v6205 = vld [vmem:[#allocation6 + $0x168] sm:$0xff]
    %v6206 = vld [vmem:[#allocation6 + $0x170] sm:$0xff]
    %v6207 = vld [vmem:[#allocation6 + $0x178] sm:$0xff]
    %v6208 = vld [vmem:[#allocation6 + $0x180] sm:$0xff]
    %v6209 = vld [vmem:[#allocation6 + $0x188] sm:$0xff]
    %v6210 = vld [vmem:[#allocation6 + $0x190] sm:$0xff]
    %v6211 = vld [vmem:[#allocation6 + $0x198] sm:$0xff]
    %v6212 = vld [vmem:[#allocation6 + $0x1a0] sm:$0xff]
    %v6213 = vld [vmem:[#allocation6 + $0x1a8] sm:$0xff]
    %v6214 = vld [vmem:[#allocation6 + $0x1b0] sm:$0xff]
    %v6215 = vld [vmem:[#allocation6 + $0x1b8] sm:$0xff]
    %v6216 = vld [vmem:[#allocation6 + $0x1c0] sm:$0xff]
    %v6217 = vld [vmem:[#allocation6 + $0x1c8] sm:$0xff]
    %v6218 = vld [vmem:[#allocation6 + $0x1d0] sm:$0xff]
    %v6219 = vld [vmem:[#allocation6 + $0x1d8] sm:$0xff]
    %v6220 = vld [vmem:[#allocation6 + $0x1e0] sm:$0xff]
    %v6221 = vld [vmem:[#allocation6 + $0x1e8] sm:$0xff]
    %v6222 = vld [vmem:[#allocation6 + $0x1f0] sm:$0xff]
    %v6223 = vld [vmem:[#allocation6 + $0x1f8] sm:$0xff]
    %v6224 = vld [vmem:[#allocation7] sm:$0x3]
    %v6226 = vperm.slane %v6224, 0
    %v6227 = vperm.slane %v6224, 1
    %v6294 = vunpack.c.l.b16 %v6160
    %v6295 = vunpack.c.h.b16 %v6160
    %v6296 = vunpack.c.l.b16 %v6161
    %v6297 = vunpack.c.h.b16 %v6161
    %v6298 = vunpack.c.l.b16 %v6162
    %v6299 = vunpack.c.h.b16 %v6162
    %v6300 = vunpack.c.l.b16 %v6163
    %v6301 = vunpack.c.h.b16 %v6163
    %v6302 = vunpack.c.l.b16 %v6164
    %v6303 = vunpack.c.h.b16 %v6164
    %v6304 = vunpack.c.l.b16 %v6165
    %v6305 = vunpack.c.h.b16 %v6165
    %v6306 = vunpack.c.l.b16 %v6166
    %v6307 = vunpack.c.h.b16 %v6166
    %v6308 = vunpack.c.l.b16 %v6167
    %v6309 = vunpack.c.h.b16 %v6167
    %v6310 = vunpack.c.l.b16 %v6168
    %v6311 = vunpack.c.h.b16 %v6168
    %v6312 = vunpack.c.l.b16 %v6169
    %v6313 = vunpack.c.h.b16 %v6169
    %v6314 = vunpack.c.l.b16 %v6170
    %v6315 = vunpack.c.h.b16 %v6170
    %v6316 = vunpack.c.l.b16 %v6171
    %v6317 = vunpack.c.h.b16 %v6171
    %v6318 = vunpack.c.l.b16 %v6172
    %v6319 = vunpack.c.h.b16 %v6172
    %v6320 = vunpack.c.l.b16 %v6173
    %v6321 = vunpack.c.h.b16 %v6173
    %v6322 = vunpack.c.l.b16 %v6174
    %v6323 = vunpack.c.h.b16 %v6174
    %v6324 = vunpack.c.l.b16 %v6175
    %v6325 = vunpack.c.h.b16 %v6175
    %v6326 = vunpack.c.l.b16 %v6176
    %v6327 = vunpack.c.h.b16 %v6176
    %v6328 = vunpack.c.l.b16 %v6177
    %v6329 = vunpack.c.h.b16 %v6177
    %v6330 = vunpack.c.l.b16 %v6178
    %v6331 = vunpack.c.h.b16 %v6178
    %v6332 = vunpack.c.l.b16 %v6179
    %v6333 = vunpack.c.h.b16 %v6179
    %v6334 = vunpack.c.l.b16 %v6180
    %v6335 = vunpack.c.h.b16 %v6180
    %v6336 = vunpack.c.l.b16 %v6181
    %v6337 = vunpack.c.h.b16 %v6181
    %v6338 = vunpack.c.l.b16 %v6182
    %v6339 = vunpack.c.h.b16 %v6182
    %v6340 = vunpack.c.l.b16 %v6183
    %v6341 = vunpack.c.h.b16 %v6183
    %v6342 = vunpack.c.l.b16 %v6184
    %v6343 = vunpack.c.h.b16 %v6184
    %v6344 = vunpack.c.l.b16 %v6185
    %v6345 = vunpack.c.h.b16 %v6185
    %v6346 = vunpack.c.l.b16 %v6186
    %v6347 = vunpack.c.h.b16 %v6186
    %v6348 = vunpack.c.l.b16 %v6187
    %v6349 = vunpack.c.h.b16 %v6187
    %v6350 = vunpack.c.l.b16 %v6188
    %v6351 = vunpack.c.h.b16 %v6188
    %v6352 = vunpack.c.l.b16 %v6189
    %v6353 = vunpack.c.h.b16 %v6189
    %v6354 = vunpack.c.l.b16 %v6190
    %v6355 = vunpack.c.h.b16 %v6190
    %v6356 = vunpack.c.l.b16 %v6191
    %v6357 = vunpack.c.h.b16 %v6191
    %v6358 = vunpack.c.l.b16 %v6192
    %v6359 = vunpack.c.h.b16 %v6192
    %v6360 = vunpack.c.l.b16 %v6193
    %v6361 = vunpack.c.h.b16 %v6193
    %v6362 = vunpack.c.l.b16 %v6194
    %v6363 = vunpack.c.h.b16 %v6194
    %v6364 = vunpack.c.l.b16 %v6195
    %v6365 = vunpack.c.h.b16 %v6195
    %v6366 = vunpack.c.l.b16 %v6196
    %v6367 = vunpack.c.h.b16 %v6196
    %v6368 = vunpack.c.l.b16 %v6197
    %v6369 = vunpack.c.h.b16 %v6197
    %v6370 = vunpack.c.l.b16 %v6198
    %v6371 = vunpack.c.h.b16 %v6198
    %v6372 = vunpack.c.l.b16 %v6199
    %v6373 = vunpack.c.h.b16 %v6199
    %v6374 = vunpack.c.l.b16 %v6200
    %v6375 = vunpack.c.h.b16 %v6200
    %v6376 = vunpack.c.l.b16 %v6201
    %v6377 = vunpack.c.h.b16 %v6201
    %v6378 = vunpack.c.l.b16 %v6202
    %v6379 = vunpack.c.h.b16 %v6202
    %v6380 = vunpack.c.l.b16 %v6203
    %v6381 = vunpack.c.h.b16 %v6203
    %v6382 = vunpack.c.l.b16 %v6204
    %v6383 = vunpack.c.h.b16 %v6204
    %v6384 = vunpack.c.l.b16 %v6205
    %v6385 = vunpack.c.h.b16 %v6205
    %v6386 = vunpack.c.l.b16 %v6206
    %v6387 = vunpack.c.h.b16 %v6206
    %v6388 = vunpack.c.l.b16 %v6207
    %v6389 = vunpack.c.h.b16 %v6207
    %v6390 = vunpack.c.l.b16 %v6208
    %v6391 = vunpack.c.h.b16 %v6208
    %v6392 = vunpack.c.l.b16 %v6209
    %v6393 = vunpack.c.h.b16 %v6209
    %v6394 = vunpack.c.l.b16 %v6210
    %v6395 = vunpack.c.h.b16 %v6210
    %v6396 = vunpack.c.l.b16 %v6211
    %v6397 = vunpack.c.h.b16 %v6211
    %v6398 = vunpack.c.l.b16 %v6212
    %v6399 = vunpack.c.h.b16 %v6212
    %v6400 = vunpack.c.l.b16 %v6213
    %v6401 = vunpack.c.h.b16 %v6213
    %v6402 = vunpack.c.l.b16 %v6214
    %v6403 = vunpack.c.h.b16 %v6214
    %v6404 = vunpack.c.l.b16 %v6215
    %v6405 = vunpack.c.h.b16 %v6215
    %v6406 = vunpack.c.l.b16 %v6216
    %v6407 = vunpack.c.h.b16 %v6216
    %v6408 = vunpack.c.l.b16 %v6217
    %v6409 = vunpack.c.h.b16 %v6217
    %v6410 = vunpack.c.l.b16 %v6218
    %v6411 = vunpack.c.h.b16 %v6218
    %v6412 = vunpack.c.l.b16 %v6219
    %v6413 = vunpack.c.h.b16 %v6219
    %v6414 = vunpack.c.l.b16 %v6220
    %v6415 = vunpack.c.h.b16 %v6220
    %v6416 = vunpack.c.l.b16 %v6221
    %v6417 = vunpack.c.h.b16 %v6221
    %v6418 = vunpack.c.l.b16 %v6222
    %v6419 = vunpack.c.h.b16 %v6222
    %v6420 = vunpack.c.l.b16 %v6223
    %v6421 = vunpack.c.h.b16 %v6223
    %v6422 = vpack.c.b16 %v6296, %v6294
    %v6423 = vpack.c.b16 %v6297, %v6295
    %v6424 = vpack.c.b16 %v6300, %v6298
    %v6425 = vpack.c.b16 %v6301, %v6299
    %v6426 = vpack.c.b16 %v6304, %v6302
    %v6427 = vpack.c.b16 %v6305, %v6303
    %v6428 = vpack.c.b16 %v6308, %v6306
    %v6429 = vpack.c.b16 %v6309, %v6307
    %v6430 = vpack.c.b16 %v6312, %v6310
    %v6431 = vpack.c.b16 %v6313, %v6311
    %v6432 = vpack.c.b16 %v6316, %v6314
    %v6433 = vpack.c.b16 %v6317, %v6315
    %v6434 = vpack.c.b16 %v6320, %v6318
    %v6435 = vpack.c.b16 %v6321, %v6319
    %v6436 = vpack.c.b16 %v6324, %v6322
    %v6437 = vpack.c.b16 %v6325, %v6323
    %v6438 = vpack.c.b16 %v6328, %v6326
    %v6439 = vpack.c.b16 %v6329, %v6327
    %v6440 = vpack.c.b16 %v6332, %v6330
    %v6441 = vpack.c.b16 %v6333, %v6331
    %v6442 = vpack.c.b16 %v6336, %v6334
    %v6443 = vpack.c.b16 %v6337, %v6335
    %v6444 = vpack.c.b16 %v6340, %v6338
    %v6445 = vpack.c.b16 %v6341, %v6339
    %v6446 = vpack.c.b16 %v6344, %v6342
    %v6447 = vpack.c.b16 %v6345, %v6343
    %v6448 = vpack.c.b16 %v6348, %v6346
    %v6449 = vpack.c.b16 %v6349, %v6347
    %v6450 = vpack.c.b16 %v6352, %v6350
    %v6451 = vpack.c.b16 %v6353, %v6351
    %v6452 = vpack.c.b16 %v6356, %v6354
    %v6453 = vpack.c.b16 %v6357, %v6355
    %v6454 = vpack.c.b16 %v6360, %v6358
    %v6455 = vpack.c.b16 %v6361, %v6359
    %v6456 = vpack.c.b16 %v6364, %v6362
    %v6457 = vpack.c.b16 %v6365, %v6363
    %v6458 = vpack.c.b16 %v6368, %v6366
    %v6459 = vpack.c.b16 %v6369, %v6367
    %v6460 = vpack.c.b16 %v6372, %v6370
    %v6461 = vpack.c.b16 %v6373, %v6371
    %v6462 = vpack.c.b16 %v6376, %v6374
    %v6463 = vpack.c.b16 %v6377, %v6375
    %v6464 = vpack.c.b16 %v6380, %v6378
    %v6465 = vpack.c.b16 %v6381, %v6379
    %v6466 = vpack.c.b16 %v6384, %v6382
    %v6467 = vpack.c.b16 %v6385, %v6383
    %v6468 = vpack.c.b16 %v6388, %v6386
    %v6469 = vpack.c.b16 %v6389, %v6387
    %v6470 = vpack.c.b16 %v6392, %v6390
    %v6471 = vpack.c.b16 %v6393, %v6391
    %v6472 = vpack.c.b16 %v6396, %v6394
    %v6473 = vpack.c.b16 %v6397, %v6395
    %v6474 = vpack.c.b16 %v6400, %v6398
    %v6475 = vpack.c.b16 %v6401, %v6399
    %v6476 = vpack.c.b16 %v6404, %v6402
    %v6477 = vpack.c.b16 %v6405, %v6403
    %v6478 = vpack.c.b16 %v6408, %v6406
    %v6479 = vpack.c.b16 %v6409, %v6407
    %v6480 = vpack.c.b16 %v6412, %v6410
    %v6481 = vpack.c.b16 %v6413, %v6411
    %v6482 = vpack.c.b16 %v6416, %v6414
    %v6483 = vpack.c.b16 %v6417, %v6415
    %v6484 = vpack.c.b16 %v6420, %v6418
    %v6485 = vpack.c.b16 %v6421, %v6419
    %6550 = vmatpush.bf16.msra.mxu0 %v6436
    %6551 = vmatpush.bf16.msra.mxu0 %v6434
    %6552 = vmatpush.bf16.msra.mxu0 %v6432
    %6553 = vmatpush.bf16.msra.mxu0 %v6430
    %6554 = vmatpush.bf16.msra.mxu0 %v6428
    %6555 = vmatpush.bf16.msra.mxu0 %v6426
    %6556 = vmatpush.bf16.msra.mxu0 %v6424
    %6557 = vmatpush.bf16.msra.mxu0 %v6422
    %6558 = vmatmul.bf16.gmra.mxu0 %v6156
    %v6559 = vpop.f32.mrf.mxu0
    %v6560 = vadd.f32 %v6226, %v6559
    %v6561 = vpop.f32.mrf.mxu0
    %v6562 = vadd.f32 %v6226, %v6561
    %6563 = vdwg.mxu0
    %6564 = vmatpush.bf16.msra.mxu0 %v6452
    %6565 = vmatpush.bf16.msra.mxu0 %v6450
    %6566 = vmatpush.bf16.msra.mxu0 %v6448
    %6567 = vmatpush.bf16.msra.mxu0 %v6446
    %6568 = vmatpush.bf16.msra.mxu0 %v6444
    %6569 = vmatpush.bf16.msra.mxu0 %v6442
    %6570 = vmatpush.bf16.msra.mxu0 %v6440
    %6571 = vmatpush.bf16.msra.mxu0 %v6438
    %6572 = vmatmul.bf16.gmra.mxu0 %v6157
    %v6573 = vpop.f32.mrf.mxu0
    %v6574 = vadd.f32 %v6560, %v6573
    %v6575 = vpop.f32.mrf.mxu0
    %v6576 = vadd.f32 %v6562, %v6575
    %6577 = vdwg.mxu0
    %6578 = vmatpush.bf16.msra.mxu0 %v6468
    %6579 = vmatpush.bf16.msra.mxu0 %v6466
    %6580 = vmatpush.bf16.msra.mxu0 %v6464
    %6581 = vmatpush.bf16.msra.mxu0 %v6462
    %6582 = vmatpush.bf16.msra.mxu0 %v6460
    %6583 = vmatpush.bf16.msra.mxu0 %v6458
    %6584 = vmatpush.bf16.msra.mxu0 %v6456
    %6585 = vmatpush.bf16.msra.mxu0 %v6454
    %6586 = vmatmul.bf16.gmra.mxu0 %v6158
    %v6587 = vpop.f32.mrf.mxu0
    %v6588 = vadd.f32 %v6574, %v6587
    %v6589 = vpop.f32.mrf.mxu0
    %v6590 = vadd.f32 %v6576, %v6589
    %6591 = vdwg.mxu0
    %6592 = vmatpush.bf16.msra.mxu0 %v6484
    %6593 = vmatpush.bf16.msra.mxu0 %v6482
    %6594 = vmatpush.bf16.msra.mxu0 %v6480
    %6595 = vmatpush.bf16.msra.mxu0 %v6478
    %6596 = vmatpush.bf16.msra.mxu0 %v6476
    %6597 = vmatpush.bf16.msra.mxu0 %v6474
    %6598 = vmatpush.bf16.msra.mxu0 %v6472
    %6599 = vmatpush.bf16.msra.mxu0 %v6470
    %6600 = vmatmul.bf16.gmra.mxu0 %v6159
    %v6601 = vpop.f32.mrf.mxu0
    %v6602 = vadd.f32 %v6588, %v6601
    %v6603 = vpop.f32.mrf.mxu0
    %v6604 = vadd.f32 %v6590, %v6603
    %6605 = vdwg.mxu0
    %6606 = vmatpush.bf16.msra.mxu0 %v6437
    %6607 = vmatpush.bf16.msra.mxu0 %v6435
    %6608 = vmatpush.bf16.msra.mxu0 %v6433
    %6609 = vmatpush.bf16.msra.mxu0 %v6431
    %6610 = vmatpush.bf16.msra.mxu0 %v6429
    %6611 = vmatpush.bf16.msra.mxu0 %v6427
    %6612 = vmatpush.bf16.msra.mxu0 %v6425
    %6613 = vmatpush.bf16.msra.mxu0 %v6423
    %6614 = vmatmul.bf16.gmra.mxu0 %v6156
    %v6615 = vpop.f32.mrf.mxu0
    %v6616 = vadd.f32 %v6227, %v6615
    %v6617 = vpop.f32.mrf.mxu0
    %v6618 = vadd.f32 %v6227, %v6617
    %6619 = vdwg.mxu0
    %6620 = vmatpush.bf16.msra.mxu0 %v6453
    %6621 = vmatpush.bf16.msra.mxu0 %v6451
    %6622 = vmatpush.bf16.msra.mxu0 %v6449
    %6623 = vmatpush.bf16.msra.mxu0 %v6447
    %6624 = vmatpush.bf16.msra.mxu0 %v6445
    %6625 = vmatpush.bf16.msra.mxu0 %v6443
    %6626 = vmatpush.bf16.msra.mxu0 %v6441
    %6627 = vmatpush.bf16.msra.mxu0 %v6439
    %6628 = vmatmul.bf16.gmra.mxu0 %v6157
    %v6629 = vpop.f32.mrf.mxu0
    %v6630 = vadd.f32 %v6616, %v6629
    %v6631 = vpop.f32.mrf.mxu0
    %v6632 = vadd.f32 %v6618, %v6631
    %6633 = vdwg.mxu0
    %6634 = vmatpush.bf16.msra.mxu0 %v6469
    %6635 = vmatpush.bf16.msra.mxu0 %v6467
    %6636 = vmatpush.bf16.msra.mxu0 %v6465
    %6637 = vmatpush.bf16.msra.mxu0 %v6463
    %6638 = vmatpush.bf16.msra.mxu0 %v6461
    %6639 = vmatpush.bf16.msra.mxu0 %v6459
    %6640 = vmatpush.bf16.msra.mxu0 %v6457
    %6641 = vmatpush.bf16.msra.mxu0 %v6455
    %6642 = vmatmul.bf16.gmra.mxu0 %v6158
    %v6643 = vpop.f32.mrf.mxu0
    %v6644 = vadd.f32 %v6630, %v6643
    %v6645 = vpop.f32.mrf.mxu0
    %v6646 = vadd.f32 %v6632, %v6645
    %6647 = vdwg.mxu0
    %6648 = vmatpush.bf16.msra.mxu0 %v6485
    %6649 = vmatpush.bf16.msra.mxu0 %v6483
    %6650 = vmatpush.bf16.msra.mxu0 %v6481
    %6651 = vmatpush.bf16.msra.mxu0 %v6479
    %6652 = vmatpush.bf16.msra.mxu0 %v6477
    %6653 = vmatpush.bf16.msra.mxu0 %v6475
    %6654 = vmatpush.bf16.msra.mxu0 %v6473
    %6655 = vmatpush.bf16.msra.mxu0 %v6471
    %6656 = vmatmul.bf16.gmra.mxu0 %v6159
    %v6657 = vpop.f32.mrf.mxu0
    %v6658 = vadd.f32 %v6644, %v6657
    %v6659 = vpop.f32.mrf.mxu0
    %v6660 = vadd.f32 %v6646, %v6659
    %6661 = vdwg.mxu0
    %v6662 = vmax.f32 %v6602, 0.0
    %v6663 = vmax.f32 %v6658, 0.0
    %v6664 = vmax.f32 %v6604, 0.0
    %v6665 = vmax.f32 %v6660, 0.0
    %v6666 = vpack.c.bf16 %v6664, %v6662
    %v6667 = vpack.c.bf16 %v6665, %v6663
    %v6668 = vld [vmem:[#allocation9] sm:$0xf]
    %v6669 = vld [vmem:[#allocation9 + $0x4] sm:$0xf]
    %v6670 = vld [vmem:[#allocation9 + $0x8] sm:$0xf]
    %v6671 = vld [vmem:[#allocation9 + $0xc] sm:$0xf]
    %v6672 = vld [vmem:[#allocation9 + $0x10] sm:$0xf]
    %v6673 = vld [vmem:[#allocation9 + $0x14] sm:$0xf]
    %v6674 = vld [vmem:[#allocation9 + $0x18] sm:$0xf]
    %v6675 = vld [vmem:[#allocation9 + $0x1c] sm:$0xf]
    %v6676 = vld [vmem:[#allocation9 + $0x20] sm:$0xf]
    %v6677 = vld [vmem:[#allocation9 + $0x24] sm:$0xf]
    %v6678 = vld [vmem:[#allocation9 + $0x28] sm:$0xf]
    %v6679 = vld [vmem:[#allocation9 + $0x2c] sm:$0xf]
    %v6680 = vld [vmem:[#allocation9 + $0x30] sm:$0xf]
    %v6681 = vld [vmem:[#allocation9 + $0x34] sm:$0xf]
    %v6682 = vld [vmem:[#allocation9 + $0x38] sm:$0xf]
    %v6683 = vld [vmem:[#allocation9 + $0x3c] sm:$0xf]
    %v6684 = vld [vmem:[#allocation9 + $0x40] sm:$0xf]
    %v6685 = vld [vmem:[#allocation9 + $0x44] sm:$0xf]
    %v6686 = vld [vmem:[#allocation9 + $0x48] sm:$0xf]
    %v6687 = vld [vmem:[#allocation9 + $0x4c] sm:$0xf]
    %v6688 = vld [vmem:[#allocation9 + $0x50] sm:$0xf]
    %v6689 = vld [vmem:[#allocation9 + $0x54] sm:$0xf]
    %v6690 = vld [vmem:[#allocation9 + $0x58] sm:$0xf]
    %v6691 = vld [vmem:[#allocation9 + $0x5c] sm:$0xf]
    %v6692 = vld [vmem:[#allocation9 + $0x60] sm:$0xf]
    %v6693 = vld [vmem:[#allocation9 + $0x64] sm:$0xf]
    %v6694 = vld [vmem:[#allocation9 + $0x68] sm:$0xf]
    %v6695 = vld [vmem:[#allocation9 + $0x6c] sm:$0xf]
    %v6696 = vld [vmem:[#allocation9 + $0x70] sm:$0xf]
    %v6697 = vld [vmem:[#allocation9 + $0x74] sm:$0xf]
    %v6698 = vld [vmem:[#allocation9 + $0x78] sm:$0xf]
    %v6699 = vld [vmem:[#allocation9 + $0x7c] sm:$0xf]
    %v6700 = vld [vmem:[#allocation10] sm:$0x1]
    %v6702 = vperm.slane %v6700, 0
    %v6736 = vunpack.c.l.b16 %v6668
    %v6737 = vunpack.c.l.b16 %v6669
    %v6738 = vunpack.c.l.b16 %v6670
    %v6739 = vunpack.c.l.b16 %v6671
    %v6740 = vunpack.c.l.b16 %v6672
    %v6741 = vunpack.c.l.b16 %v6673
    %v6742 = vunpack.c.l.b16 %v6674
    %v6743 = vunpack.c.l.b16 %v6675
    %v6744 = vunpack.c.l.b16 %v6676
    %v6745 = vunpack.c.l.b16 %v6677
    %v6746 = vunpack.c.l.b16 %v6678
    %v6747 = vunpack.c.l.b16 %v6679
    %v6748 = vunpack.c.l.b16 %v6680
    %v6749 = vunpack.c.l.b16 %v6681
    %v6750 = vunpack.c.l.b16 %v6682
    %v6751 = vunpack.c.l.b16 %v6683
    %v6752 = vunpack.c.l.b16 %v6684
    %v6753 = vunpack.c.l.b16 %v6685
    %v6754 = vunpack.c.l.b16 %v6686
    %v6755 = vunpack.c.l.b16 %v6687
    %v6756 = vunpack.c.l.b16 %v6688
    %v6757 = vunpack.c.l.b16 %v6689
    %v6758 = vunpack.c.l.b16 %v6690
    %v6759 = vunpack.c.l.b16 %v6691
    %v6760 = vunpack.c.l.b16 %v6692
    %v6761 = vunpack.c.l.b16 %v6693
    %v6762 = vunpack.c.l.b16 %v6694
    %v6763 = vunpack.c.l.b16 %v6695
    %v6764 = vunpack.c.l.b16 %v6696
    %v6765 = vunpack.c.l.b16 %v6697
    %v6766 = vunpack.c.l.b16 %v6698
    %v6767 = vunpack.c.l.b16 %v6699
    %v6768 = vpack.c.b16 %v6737, %v6736
    %v6769 = vpack.c.b16 %v6739, %v6738
    %v6770 = vpack.c.b16 %v6741, %v6740
    %v6771 = vpack.c.b16 %v6743, %v6742
    %v6772 = vpack.c.b16 %v6745, %v6744
    %v6773 = vpack.c.b16 %v6747, %v6746
    %v6774 = vpack.c.b16 %v6749, %v6748
    %v6775 = vpack.c.b16 %v6751, %v6750
    %v6776 = vpack.c.b16 %v6753, %v6752
    %v6777 = vpack.c.b16 %v6755, %v6754
    %v6778 = vpack.c.b16 %v6757, %v6756
    %v6779 = vpack.c.b16 %v6759, %v6758
    %v6780 = vpack.c.b16 %v6761, %v6760
    %v6781 = vpack.c.b16 %v6763, %v6762
    %v6782 = vpack.c.b16 %v6765, %v6764
    %v6783 = vpack.c.b16 %v6767, %v6766
    %6800 = vmatpush.bf16.msra.mxu0 %v6775
    %6801 = vmatpush.bf16.msra.mxu0 %v6774
    %6802 = vmatpush.bf16.msra.mxu0 %v6773
    %6803 = vmatpush.bf16.msra.mxu0 %v6772
    %6804 = vmatpush.bf16.msra.mxu0 %v6771
    %6805 = vmatpush.bf16.msra.mxu0 %v6770
    %6806 = vmatpush.bf16.msra.mxu0 %v6769
    %6807 = vmatpush.bf16.msra.mxu0 %v6768
    %6808 = vmatmul.bf16.gmra.mxu0 %v6666
    %v6809 = vpop.f32.mrf.mxu0
    %v6810 = vadd.f32 %v6702, %v6809
    %v6811 = vpop.f32.mrf.mxu0
    %v6812 = vadd.f32 %v6702, %v6811
    %6813 = vdwg.mxu0
    %6814 = vmatpush.bf16.msra.mxu0 %v6783
    %6815 = vmatpush.bf16.msra.mxu0 %v6782
    %6816 = vmatpush.bf16.msra.mxu0 %v6781
    %6817 = vmatpush.bf16.msra.mxu0 %v6780
    %6818 = vmatpush.bf16.msra.mxu0 %v6779
    %6819 = vmatpush.bf16.msra.mxu0 %v6778
    %6820 = vmatpush.bf16.msra.mxu0 %v6777
    %6821 = vmatpush.bf16.msra.mxu0 %v6776
    %6822 = vmatmul.bf16.gmra.mxu0 %v6667
    %v6823 = vpop.f32.mrf.mxu0
    %v6824 = vadd.f32 %v6810, %v6823
    %v6825 = vpop.f32.mrf.mxu0
    %v6826 = vadd.f32 %v6812, %v6825
    %6827 = vdwg.mxu0
    %6828 = vst [vmem:[%s7] sm:$0xff] %v6824
    %6829 = vst [vmem:[%s7 + $0x8] sm:$0xff] %v6826
    // Predicated region
    $region54: #{fcnn_forward.1} parent=1 // pred_check
      _
    $region55: #{fcnn_forward.1} parent=1 // pred_check_branch
      %6831 = sbr.rel (0) target = $region57
    $region56: #{fcnn_forward.1} parent=1 // pred_region
      _
    $region57: #{fcnn_forward.1} parent=1 // pred_fallthru
      _
    // Predicated region
    $region58: #{fcnn_forward.1} parent=1 // pred_check
      _
    $region59: #{fcnn_forward.1} parent=1 // pred_check_branch
      %6833 = sbr.rel (0) target = $region61
    $region60: #{fcnn_forward.1} parent=1 // pred_region
      _
    $region61: #{fcnn_forward.1} parent=1 // pred_fallthru
      _
    %6834 = vsyncpa [#allocation3], 1
    %6835 = vsyncpa [#allocation5], 1
    %6836 = vsyncpa [#allocation8], 1
    %6837 = vsyncpa [#allocation11], 1

</llo_original>
